<compile_context>
chip_gen: v5e
topology: v5e:2x2
jax: 0.10.0
libtpu: 0.0.40
codegen_flags: <defaults>
</compile_context>

<pallas_src>
import functools

import numpy as np
import jax
import jax.numpy as jnp
from jax.experimental import pallas as pl
from jax.experimental.pallas import tpu as pltpu

# Tap order: t = (dh + 1) * 3 + (dw + 1)  (must match weight / mask packing).
_TAPS = tuple((dh, dw) for dh in (-1, 0, 1) for dw in (-1, 0, 1))
_CENTER_TAP = 4


def _resblock_kernel(x_ref, w_ref, b_ref, m_ref, out_ref, *, C, B2, H, W):
    """Full Resblock for B2 folded batch elements, lane-dense (rows, HW) layout.

    x_ref  : (1, rows, HW)       rows = B2*C, row index = i*B2 + b
    w_ref  : (4, 9*C, rows, HW)  replicated weights,
                                 w_ref[conv, t*C+i, o*B2+b, :] = w[conv][o, i, kh, kw]
    b_ref  : (4, rows, HW)       replicated biases
    m_ref  : (9, rows, HW)       border masks (1 inside; 0 where the tap would
                                 read the zero padding)
    out_ref: (1, rows, HW)
    """
    HW = H * W
    n_acc = min(C, 4)           # cap independent accumulator chains
    x = x_ref[0].astype(jnp.float32)                     # (rows, HW)

    def conv3x3(src, idx):
        # src: (rows, HW) f32 -> (rows, HW) f32 (bias included).
        parts = [None] * n_acc
        for t, (dh, dw) in enumerate(_TAPS):
            shift = (-(dh * W + dw)) % HW
            rolled = pltpu.roll(src, shift, axis=1) if shift else src
            if t == _CENTER_TAP:
                slab = rolled                            # mask is all-ones
            else:
                # where() instead of mul: no NaN leak from 0*Inf at borders.
                slab = jnp.where(m_ref[t] != 0.0, rolled, 0.0)
            for i in range(C):
                chan = slab[i * B2:(i + 1) * B2, :]      # (B2, HW), contiguous rows
                if B2 > 1:
                    # tile input-channel i across all C output groups:
                    # result row o*B2 + b = chan[b]
                    chan = jnp.concatenate([chan] * C, axis=0)
                contrib = w_ref[idx, t * C + i] * chan   # pure VPU FMA, no broadcasts
                a = i % n_acc
                parts[a] = contrib if parts[a] is None else parts[a] + contrib
        acc = b_ref[idx]
        for p in parts:
            acc = acc + p
        return acc

    # block1: conv -> relu -> conv, + residual
    h = jnp.maximum(conv3x3(x, 0), 0.0)
    out1 = conv3x3(h, 1) + x
    # block2: conv -> relu -> conv, + residual
    h = jnp.maximum(conv3x3(out1, 2), 0.0)
    out2 = conv3x3(h, 3) + out1

    out_ref[0] = out2.astype(out_ref.dtype)


def _border_masks(H, W):
    """(9, H*W) f32 masks: 1 where tap (dh, dw) stays inside the image."""
    HW = H * W
    r = np.arange(HW) // W
    c = np.arange(HW) % W
    rows = []
    for dh, dw in _TAPS:
        ok = (r + dh >= 0) & (r + dh < H) & (c + dw >= 0) & (c + dw < W)
        rows.append(ok.astype(np.float32))
    return jnp.asarray(np.stack(rows, axis=0))


def _pack_params(params, B2, HW):
    """PyTorch-style OIHW weights / (C,) biases -> lane-dense replicated layout."""
    names = ("1a", "1b", "2a", "2b")
    C = params["w1a"].shape[0]
    rows = B2 * C
    # (O, I, kh, kw) -> (kh, kw, I, O) -> (9C, C) with row index t*C + i, col o.
    w_cols = jnp.stack(
        [jnp.transpose(params[f"w{n}"], (2, 3, 1, 0)).reshape(9 * C, C)
         for n in names], axis=0)                               # (4, 9C, C)
    # Replicate over the B2 fold and the HW lanes so the kernel only loads.
    w_rep = jnp.broadcast_to(
        w_cols[:, :, :, None, None],
        (4, 9 * C, C, B2, HW)).reshape(4, 9 * C, rows, HW)
    b_cols = jnp.stack([params[f"b{n}"] for n in names], axis=0)  # (4, C)
    b_rep = jnp.broadcast_to(
        b_cols[:, :, None, None], (4, C, B2, HW)).reshape(4, rows, HW)
    return w_rep, b_rep


def resblock_forward(x_nchw, params):
    """Matches Resblock.forward (two conv-relu-conv blocks with residual adds)."""
    N, C, H, W = x_nchw.shape
    HW = H * W
    # Fold 2 batch elements per block only if the parallel grid axis stays >= 2
    # (v7x has 2 TensorCores); at N=2 keep one element per step.
    B2 = 2 if (N % 2 == 0 and N >= 4) else 1
    G = N // B2
    rows = B2 * C

    w_rep, b_rep = _pack_params(params, B2, HW)
    masks = jnp.broadcast_to(_border_masks(H, W)[:, None, :], (9, rows, HW))

    # (N, C, H, W) -> (G, rows, HW), channel-major within the folded pair:
    # row index inside a block = i*B2 + b.
    x_pack = (x_nchw.reshape(G, B2, C, HW)
              .transpose(0, 2, 1, 3)
              .reshape(G, rows, HW))

    kernel = functools.partial(_resblock_kernel, C=C, B2=B2, H=H, W=W)
    out = pl.pallas_call(
        kernel,
        out_shape=jax.ShapeDtypeStruct((G, rows, HW), x_nchw.dtype),
        grid=(G,),
        in_specs=[
            pl.BlockSpec((1, rows, HW), lambda g: (g, 0, 0)),
            # Constant-index operands: block index never changes, so the
            # pipeline keeps them resident across grid steps (no re-DMA).
            pl.BlockSpec((4, 9 * C, rows, HW), lambda g: (0, 0, 0, 0)),
            pl.BlockSpec((4, rows, HW), lambda g: (0, 0, 0)),
            pl.BlockSpec((9, rows, HW), lambda g: (0, 0, 0)),
        ],
        out_specs=pl.BlockSpec((1, rows, HW), lambda g: (g, 0, 0)),
        compiler_params=pltpu.CompilerParams(
            dimension_semantics=("parallel",)),
    )(x_pack, w_rep, b_rep, masks)

    return (out.reshape(G, C, B2, HW)
            .transpose(0, 2, 1, 3)
            .reshape(N, C, H, W))


def init_params(key, C):
    """Deterministic init mimicking PyTorch Conv2d defaults (uniform +-1/sqrt(fan_in))."""
    keys = jax.random.split(key, 8)
    bound = 1.0 / float(np.sqrt(C * 3 * 3))
    p = {}
    for n, (kw, kb) in zip(("1a", "1b", "2a", "2b"),
                           [(keys[0], keys[1]), (keys[2], keys[3]),
                            (keys[4], keys[5]), (keys[6], keys[7])]):
        p[f"w{n}"] = jax.random.uniform(kw, (C, C, 3, 3), jnp.float32,
                                        -bound, bound)
        p[f"b{n}"] = jax.random.uniform(kb, (C,), jnp.float32, -bound, bound)
    return p


# ---------------- pure-JAX reference ----------------
def _conv_ref(x_nchw, w_oihw, b):
    y = jax.lax.conv_general_dilated(
        x_nchw, w_oihw, window_strides=(1, 1), padding="SAME",
        dimension_numbers=("NCHW", "OIHW", "NCHW"))
    return y + b.reshape(1, -1, 1, 1)


def resblock_ref(x, p):
    r1 = _conv_ref(jax.nn.relu(_conv_ref(x, p["w1a"], p["b1a"])),
                   p["w1b"], p["b1b"])
    out = r1 + x
    r2 = _conv_ref(jax.nn.relu(_conv_ref(out, p["w2a"], p["b2a"])),
                   p["w2b"], p["b2b"])
    return r2 + out


if __name__ == "__main__":
    key = jax.random.PRNGKey(0)
    kx, kp = jax.random.split(key)

    N, C, H, W = 2, 4, 16, 16          # HBW = 4
    x = jax.random.normal(kx, (N, C, H, W), jnp.float32)
    params = init_params(kp, C)

    # Primary check (N=2 -> one element per grid step, parallel axis length 2).
    out = jax.block_until_ready(resblock_forward(x, params))
    ref = jax.block_until_ready(resblock_ref(x, params))
    assert out.shape == (N, C, H, W)
    err = float(jnp.max(jnp.abs(out - ref)))
    assert err < 1e-4, f"max abs diff {err}"

    # Also exercise the sublane-filled path (N=4 -> 2 batch elements / block).
    x4 = jax.random.normal(jax.random.PRNGKey(1), (4, C, H, W), jnp.float32)
    out4 = jax.block_until_ready(resblock_forward(x4, params))
    ref4 = jax.block_until_ready(resblock_ref(x4, params))
    err4 = float(jnp.max(jnp.abs(out4 - ref4)))
    assert err4 < 1e-4, f"max abs diff (folded path) {err4}"

    print("KERNEL_OK")
</pallas_src>

<mosaic_0001>
module attributes {stable_mosaic.version = 11 : i64} {
  func.func @_resblock_kernel(%arg0: i32, %arg1: memref<1x4x256xf32, #tpu.memory_space<vmem>>, %arg2: memref<4x36x4x256xf32, #tpu.memory_space<vmem>>, %arg3: memref<4x4x256xf32, #tpu.memory_space<vmem>>, %arg4: memref<9x4x256xf32, #tpu.memory_space<vmem>>, %arg5: memref<1x4x256xf32, #tpu.memory_space<vmem>>) attributes {dimension_semantics = [#tpu.dimension_semantics<parallel>], iteration_bounds = array<i64: 2>, scalar_prefetch = 0 : i64, scratch_operands = 0 : i64, tpu.core_type = #tpu.core_type<tc>, window_params = [{transform_indices = @transform_0, window_bounds = array<i64: 1, 4, 256>}, {pipeline_mode = #tpu.pipeline_mode<synchronous>, transform_indices = @transform_1, window_bounds = array<i64: 4, 36, 4, 256>}, {pipeline_mode = #tpu.pipeline_mode<synchronous>, transform_indices = @transform_2, window_bounds = array<i64: 4, 4, 256>}, {pipeline_mode = #tpu.pipeline_mode<synchronous>, transform_indices = @transform_3, window_bounds = array<i64: 9, 4, 256>}, {transform_indices = @transform_4, window_bounds = array<i64: 1, 4, 256>}]} {
    %c0 = arith.constant 0 : index
    %c0_0 = arith.constant 0 : index
    %c0_1 = arith.constant 0 : index
    %0 = vector.load %arg1[%c0, %c0_0, %c0_1] : memref<1x4x256xf32, #tpu.memory_space<vmem>>, vector<1x4x256xf32>
    %1 = vector.shape_cast %0 : vector<1x4x256xf32> to vector<4x256xf32>
    %c17_i32 = arith.constant 17 : i32
    %2 = tpu.dynamic_rotate %1 by %c17_i32 dim 1 : vector<4x256xf32>, i32 -> vector<4x256xf32>
    %c0_2 = arith.constant 0 : index
    %c0_3 = arith.constant 0 : index
    %c0_4 = arith.constant 0 : index
    %3 = vector.load %arg4[%c0_2, %c0_3, %c0_4] : memref<9x4x256xf32, #tpu.memory_space<vmem>>, vector<1x4x256xf32>
    %4 = vector.shape_cast %3 : vector<1x4x256xf32> to vector<4x256xf32>
    %cst = arith.constant 0.000000e+00 : f32
    %5 = vector.broadcast %cst : f32 to vector<4x256xf32>
    %6 = arith.cmpf one, %4, %5 : vector<4x256xf32>
    %cst_5 = arith.constant 0.000000e+00 : f32
    %7 = vector.broadcast %cst_5 : f32 to vector<4x256xf32>
    %8 = arith.select %6, %2, %7 : vector<4x256xi1>, vector<4x256xf32>
    %9 = vector.extract_strided_slice %8 {offsets = [0, 0], sizes = [1, 256], strides = [1, 1]} : vector<4x256xf32> to vector<1x256xf32>
    %c0_6 = arith.constant 0 : index
    %c0_7 = arith.constant 0 : index
    %c0_8 = arith.constant 0 : index
    %c0_9 = arith.constant 0 : index
    %10 = vector.load %arg2[%c0_6, %c0_7, %c0_8, %c0_9] : memref<4x36x4x256xf32, #tpu.memory_space<vmem>>, vector<1x1x4x256xf32>
    %11 = vector.shape_cast %10 : vector<1x1x4x256xf32> to vector<4x256xf32>
    %12 = vector.broadcast %9 : vector<1x256xf32> to vector<4x256xf32>
    %13 = arith.mulf %11, %12 : vector<4x256xf32>
    %14 = vector.extract_strided_slice %8 {offsets = [1, 0], sizes = [1, 256], strides = [1, 1]} : vector<4x256xf32> to vector<1x256xf32>
    %c0_10 = arith.constant 0 : index
    %c1 = arith.constant 1 : index
    %c0_11 = arith.constant 0 : index
    %c0_12 = arith.constant 0 : index
    %15 = vector.load %arg2[%c0_10, %c1, %c0_11, %c0_12] : memref<4x36x4x256xf32, #tpu.memory_space<vmem>>, vector<1x1x4x256xf32>
    %16 = vector.shape_cast %15 : vector<1x1x4x256xf32> to vector<4x256xf32>
    %17 = vector.broadcast %14 : vector<1x256xf32> to vector<4x256xf32>
    %18 = arith.mulf %16, %17 : vector<4x256xf32>
    %19 = vector.extract_strided_slice %8 {offsets = [2, 0], sizes = [1, 256], strides = [1, 1]} : vector<4x256xf32> to vector<1x256xf32>
    %c0_13 = arith.constant 0 : index
    %c2 = arith.constant 2 : index
    %c0_14 = arith.constant 0 : index
    %c0_15 = arith.constant 0 : index
    %20 = vector.load %arg2[%c0_13, %c2, %c0_14, %c0_15] : memref<4x36x4x256xf32, #tpu.memory_space<vmem>>, vector<1x1x4x256xf32>
    %21 = vector.shape_cast %20 : vector<1x1x4x256xf32> to vector<4x256xf32>
    %22 = vector.broadcast %19 : vector<1x256xf32> to vector<4x256xf32>
    %23 = arith.mulf %21, %22 : vector<4x256xf32>
    %24 = vector.extract_strided_slice %8 {offsets = [3, 0], sizes = [1, 256], strides = [1, 1]} : vector<4x256xf32> to vector<1x256xf32>
    %c0_16 = arith.constant 0 : index
    %c3 = arith.constant 3 : index
    %c0_17 = arith.constant 0 : index
    %c0_18 = arith.constant 0 : index
    %25 = vector.load %arg2[%c0_16, %c3, %c0_17, %c0_18] : memref<4x36x4x256xf32, #tpu.memory_space<vmem>>, vector<1x1x4x256xf32>
    %26 = vector.shape_cast %25 : vector<1x1x4x256xf32> to vector<4x256xf32>
    %27 = vector.broadcast %24 : vector<1x256xf32> to vector<4x256xf32>
    %28 = arith.mulf %26, %27 : vector<4x256xf32>
    %c16_i32 = arith.constant 16 : i32
    %29 = tpu.dynamic_rotate %1 by %c16_i32 dim 1 : vector<4x256xf32>, i32 -> vector<4x256xf32>
    %c1_19 = arith.constant 1 : index
    %c0_20 = arith.constant 0 : index
    %c0_21 = arith.constant 0 : index
    %30 = vector.load %arg4[%c1_19, %c0_20, %c0_21] : memref<9x4x256xf32, #tpu.memory_space<vmem>>, vector<1x4x256xf32>
    %31 = vector.shape_cast %30 : vector<1x4x256xf32> to vector<4x256xf32>
    %cst_22 = arith.constant 0.000000e+00 : f32
    %32 = vector.broadcast %cst_22 : f32 to vector<4x256xf32>
    %33 = arith.cmpf one, %31, %32 : vector<4x256xf32>
    %cst_23 = arith.constant 0.000000e+00 : f32
    %34 = vector.broadcast %cst_23 : f32 to vector<4x256xf32>
    %35 = arith.select %33, %29, %34 : vector<4x256xi1>, vector<4x256xf32>
    %36 = vector.extract_strided_slice %35 {offsets = [0, 0], sizes = [1, 256], strides = [1, 1]} : vector<4x256xf32> to vector<1x256xf32>
    %c0_24 = arith.constant 0 : index
    %c4 = arith.constant 4 : index
    %c0_25 = arith.constant 0 : index
    %c0_26 = arith.constant 0 : index
    %37 = vector.load %arg2[%c0_24, %c4, %c0_25, %c0_26] : memref<4x36x4x256xf32, #tpu.memory_space<vmem>>, vector<1x1x4x256xf32>
    %38 = vector.shape_cast %37 : vector<1x1x4x256xf32> to vector<4x256xf32>
    %39 = vector.broadcast %36 : vector<1x256xf32> to vector<4x256xf32>
    %40 = arith.mulf %38, %39 : vector<4x256xf32>
    %41 = arith.addf %13, %40 : vector<4x256xf32>
    %42 = vector.extract_strided_slice %35 {offsets = [1, 0], sizes = [1, 256], strides = [1, 1]} : vector<4x256xf32> to vector<1x256xf32>
    %c0_27 = arith.constant 0 : index
    %c5 = arith.constant 5 : index
    %c0_28 = arith.constant 0 : index
    %c0_29 = arith.constant 0 : index
    %43 = vector.load %arg2[%c0_27, %c5, %c0_28, %c0_29] : memref<4x36x4x256xf32, #tpu.memory_space<vmem>>, vector<1x1x4x256xf32>
    %44 = vector.shape_cast %43 : vector<1x1x4x256xf32> to vector<4x256xf32>
    %45 = vector.broadcast %42 : vector<1x256xf32> to vector<4x256xf32>
    %46 = arith.mulf %44, %45 : vector<4x256xf32>
    %47 = arith.addf %18, %46 : vector<4x256xf32>
    %48 = vector.extract_strided_slice %35 {offsets = [2, 0], sizes = [1, 256], strides = [1, 1]} : vector<4x256xf32> to vector<1x256xf32>
    %c0_30 = arith.constant 0 : index
    %c6 = arith.constant 6 : index
    %c0_31 = arith.constant 0 : index
    %c0_32 = arith.constant 0 : index
    %49 = vector.load %arg2[%c0_30, %c6, %c0_31, %c0_32] : memref<4x36x4x256xf32, #tpu.memory_space<vmem>>, vector<1x1x4x256xf32>
    %50 = vector.shape_cast %49 : vector<1x1x4x256xf32> to vector<4x256xf32>
    %51 = vector.broadcast %48 : vector<1x256xf32> to vector<4x256xf32>
    %52 = arith.mulf %50, %51 : vector<4x256xf32>
    %53 = arith.addf %23, %52 : vector<4x256xf32>
    %54 = vector.extract_strided_slice %35 {offsets = [3, 0], sizes = [1, 256], strides = [1, 1]} : vector<4x256xf32> to vector<1x256xf32>
    %c0_33 = arith.constant 0 : index
    %c7 = arith.constant 7 : index
    %c0_34 = arith.constant 0 : index
    %c0_35 = arith.constant 0 : index
    %55 = vector.load %arg2[%c0_33, %c7, %c0_34, %c0_35] : memref<4x36x4x256xf32, #tpu.memory_space<vmem>>, vector<1x1x4x256xf32>
    %56 = vector.shape_cast %55 : vector<1x1x4x256xf32> to vector<4x256xf32>
    %57 = vector.broadcast %54 : vector<1x256xf32> to vector<4x256xf32>
    %58 = arith.mulf %56, %57 : vector<4x256xf32>
    %59 = arith.addf %28, %58 : vector<4x256xf32>
    %c15_i32 = arith.constant 15 : i32
    %60 = tpu.dynamic_rotate %1 by %c15_i32 dim 1 : vector<4x256xf32>, i32 -> vector<4x256xf32>
    %c2_36 = arith.constant 2 : index
    %c0_37 = arith.constant 0 : index
    %c0_38 = arith.constant 0 : index
    %61 = vector.load %arg4[%c2_36, %c0_37, %c0_38] : memref<9x4x256xf32, #tpu.memory_space<vmem>>, vector<1x4x256xf32>
    %62 = vector.shape_cast %61 : vector<1x4x256xf32> to vector<4x256xf32>
    %cst_39 = arith.constant 0.000000e+00 : f32
    %63 = vector.broadcast %cst_39 : f32 to vector<4x256xf32>
    %64 = arith.cmpf one, %62, %63 : vector<4x256xf32>
    %cst_40 = arith.constant 0.000000e+00 : f32
    %65 = vector.broadcast %cst_40 : f32 to vector<4x256xf32>
    %66 = arith.select %64, %60, %65 : vector<4x256xi1>, vector<4x256xf32>
    %67 = vector.extract_strided_slice %66 {offsets = [0, 0], sizes = [1, 256], strides = [1, 1]} : vector<4x256xf32> to vector<1x256xf32>
    %c0_41 = arith.constant 0 : index
    %c8 = arith.constant 8 : index
    %c0_42 = arith.constant 0 : index
    %c0_43 = arith.constant 0 : index
    %68 = vector.load %arg2[%c0_41, %c8, %c0_42, %c0_43] : memref<4x36x4x256xf32, #tpu.memory_space<vmem>>, vector<1x1x4x256xf32>
    %69 = vector.shape_cast %68 : vector<1x1x4x256xf32> to vector<4x256xf32>
    %70 = vector.broadcast %67 : vector<1x256xf32> to vector<4x256xf32>
    %71 = arith.mulf %69, %70 : vector<4x256xf32>
    %72 = arith.addf %41, %71 : vector<4x256xf32>
    %73 = vector.extract_strided_slice %66 {offsets = [1, 0], sizes = [1, 256], strides = [1, 1]} : vector<4x256xf32> to vector<1x256xf32>
    %c0_44 = arith.constant 0 : index
    %c9 = arith.constant 9 : index
    %c0_45 = arith.constant 0 : index
    %c0_46 = arith.constant 0 : index
    %74 = vector.load %arg2[%c0_44, %c9, %c0_45, %c0_46] : memref<4x36x4x256xf32, #tpu.memory_space<vmem>>, vector<1x1x4x256xf32>
    %75 = vector.shape_cast %74 : vector<1x1x4x256xf32> to vector<4x256xf32>
    %76 = vector.broadcast %73 : vector<1x256xf32> to vector<4x256xf32>
    %77 = arith.mulf %75, %76 : vector<4x256xf32>
    %78 = arith.addf %47, %77 : vector<4x256xf32>
    %79 = vector.extract_strided_slice %66 {offsets = [2, 0], sizes = [1, 256], strides = [1, 1]} : vector<4x256xf32> to vector<1x256xf32>
    %c0_47 = arith.constant 0 : index
    %c10 = arith.constant 10 : index
    %c0_48 = arith.constant 0 : index
    %c0_49 = arith.constant 0 : index
    %80 = vector.load %arg2[%c0_47, %c10, %c0_48, %c0_49] : memref<4x36x4x256xf32, #tpu.memory_space<vmem>>, vector<1x1x4x256xf32>
    %81 = vector.shape_cast %80 : vector<1x1x4x256xf32> to vector<4x256xf32>
    %82 = vector.broadcast %79 : vector<1x256xf32> to vector<4x256xf32>
    %83 = arith.mulf %81, %82 : vector<4x256xf32>
    %84 = arith.addf %53, %83 : vector<4x256xf32>
    %85 = vector.extract_strided_slice %66 {offsets = [3, 0], sizes = [1, 256], strides = [1, 1]} : vector<4x256xf32> to vector<1x256xf32>
    %c0_50 = arith.constant 0 : index
    %c11 = arith.constant 11 : index
    %c0_51 = arith.constant 0 : index
    %c0_52 = arith.constant 0 : index
    %86 = vector.load %arg2[%c0_50, %c11, %c0_51, %c0_52] : memref<4x36x4x256xf32, #tpu.memory_space<vmem>>, vector<1x1x4x256xf32>
    %87 = vector.shape_cast %86 : vector<1x1x4x256xf32> to vector<4x256xf32>
    %88 = vector.broadcast %85 : vector<1x256xf32> to vector<4x256xf32>
    %89 = arith.mulf %87, %88 : vector<4x256xf32>
    %90 = arith.addf %59, %89 : vector<4x256xf32>
    %c1_i32 = arith.constant 1 : i32
    %91 = tpu.dynamic_rotate %1 by %c1_i32 dim 1 : vector<4x256xf32>, i32 -> vector<4x256xf32>
    %c3_53 = arith.constant 3 : index
    %c0_54 = arith.constant 0 : index
    %c0_55 = arith.constant 0 : index
    %92 = vector.load %arg4[%c3_53, %c0_54, %c0_55] : memref<9x4x256xf32, #tpu.memory_space<vmem>>, vector<1x4x256xf32>
    %93 = vector.shape_cast %92 : vector<1x4x256xf32> to vector<4x256xf32>
    %cst_56 = arith.constant 0.000000e+00 : f32
    %94 = vector.broadcast %cst_56 : f32 to vector<4x256xf32>
    %95 = arith.cmpf one, %93, %94 : vector<4x256xf32>
    %cst_57 = arith.constant 0.000000e+00 : f32
    %96 = vector.broadcast %cst_57 : f32 to vector<4x256xf32>
    %97 = arith.select %95, %91, %96 : vector<4x256xi1>, vector<4x256xf32>
    %98 = vector.extract_strided_slice %97 {offsets = [0, 0], sizes = [1, 256], strides = [1, 1]} : vector<4x256xf32> to vector<1x256xf32>
    %c0_58 = arith.constant 0 : index
    %c12 = arith.constant 12 : index
    %c0_59 = arith.constant 0 : index
    %c0_60 = arith.constant 0 : index
    %99 = vector.load %arg2[%c0_58, %c12, %c0_59, %c0_60] : memref<4x36x4x256xf32, #tpu.memory_space<vmem>>, vector<1x1x4x256xf32>
    %100 = vector.shape_cast %99 : vector<1x1x4x256xf32> to vector<4x256xf32>
    %101 = vector.broadcast %98 : vector<1x256xf32> to vector<4x256xf32>
    %102 = arith.mulf %100, %101 : vector<4x256xf32>
    %103 = arith.addf %72, %102 : vector<4x256xf32>
    %104 = vector.extract_strided_slice %97 {offsets = [1, 0], sizes = [1, 256], strides = [1, 1]} : vector<4x256xf32> to vector<1x256xf32>
    %c0_61 = arith.constant 0 : index
    %c13 = arith.constant 13 : index
    %c0_62 = arith.constant 0 : index
    %c0_63 = arith.constant 0 : index
    %105 = vector.load %arg2[%c0_61, %c13, %c0_62, %c0_63] : memref<4x36x4x256xf32, #tpu.memory_space<vmem>>, vector<1x1x4x256xf32>
    %106 = vector.shape_cast %105 : vector<1x1x4x256xf32> to vector<4x256xf32>
    %107 = vector.broadcast %104 : vector<1x256xf32> to vector<4x256xf32>
    %108 = arith.mulf %106, %107 : vector<4x256xf32>
    %109 = arith.addf %78, %108 : vector<4x256xf32>
    %110 = vector.extract_strided_slice %97 {offsets = [2, 0], sizes = [1, 256], strides = [1, 1]} : vector<4x256xf32> to vector<1x256xf32>
    %c0_64 = arith.constant 0 : index
    %c14 = arith.constant 14 : index
    %c0_65 = arith.constant 0 : index
    %c0_66 = arith.constant 0 : index
    %111 = vector.load %arg2[%c0_64, %c14, %c0_65, %c0_66] : memref<4x36x4x256xf32, #tpu.memory_space<vmem>>, vector<1x1x4x256xf32>
    %112 = vector.shape_cast %111 : vector<1x1x4x256xf32> to vector<4x256xf32>
    %113 = vector.broadcast %110 : vector<1x256xf32> to vector<4x256xf32>
    %114 = arith.mulf %112, %113 : vector<4x256xf32>
    %115 = arith.addf %84, %114 : vector<4x256xf32>
    %116 = vector.extract_strided_slice %97 {offsets = [3, 0], sizes = [1, 256], strides = [1, 1]} : vector<4x256xf32> to vector<1x256xf32>
    %c0_67 = arith.constant 0 : index
    %c15 = arith.constant 15 : index
    %c0_68 = arith.constant 0 : index
    %c0_69 = arith.constant 0 : index
    %117 = vector.load %arg2[%c0_67, %c15, %c0_68, %c0_69] : memref<4x36x4x256xf32, #tpu.memory_space<vmem>>, vector<1x1x4x256xf32>
    %118 = vector.shape_cast %117 : vector<1x1x4x256xf32> to vector<4x256xf32>
    %119 = vector.broadcast %116 : vector<1x256xf32> to vector<4x256xf32>
    %120 = arith.mulf %118, %119 : vector<4x256xf32>
    %121 = arith.addf %90, %120 : vector<4x256xf32>
    %122 = vector.extract_strided_slice %1 {offsets = [0, 0], sizes = [1, 256], strides = [1, 1]} : vector<4x256xf32> to vector<1x256xf32>
    %c0_70 = arith.constant 0 : index
    %c16 = arith.constant 16 : index
    %c0_71 = arith.constant 0 : index
    %c0_72 = arith.constant 0 : index
    %123 = vector.load %arg2[%c0_70, %c16, %c0_71, %c0_72] : memref<4x36x4x256xf32, #tpu.memory_space<vmem>>, vector<1x1x4x256xf32>
    %124 = vector.shape_cast %123 : vector<1x1x4x256xf32> to vector<4x256xf32>
    %125 = vector.broadcast %122 : vector<1x256xf32> to vector<4x256xf32>
    %126 = arith.mulf %124, %125 : vector<4x256xf32>
    %127 = arith.addf %103, %126 : vector<4x256xf32>
    %128 = vector.extract_strided_slice %1 {offsets = [1, 0], sizes = [1, 256], strides = [1, 1]} : vector<4x256xf32> to vector<1x256xf32>
    %c0_73 = arith.constant 0 : index
    %c17 = arith.constant 17 : index
    %c0_74 = arith.constant 0 : index
    %c0_75 = arith.constant 0 : index
    %129 = vector.load %arg2[%c0_73, %c17, %c0_74, %c0_75] : memref<4x36x4x256xf32, #tpu.memory_space<vmem>>, vector<1x1x4x256xf32>
    %130 = vector.shape_cast %129 : vector<1x1x4x256xf32> to vector<4x256xf32>
    %131 = vector.broadcast %128 : vector<1x256xf32> to vector<4x256xf32>
    %132 = arith.mulf %130, %131 : vector<4x256xf32>
    %133 = arith.addf %109, %132 : vector<4x256xf32>
    %134 = vector.extract_strided_slice %1 {offsets = [2, 0], sizes = [1, 256], strides = [1, 1]} : vector<4x256xf32> to vector<1x256xf32>
    %c0_76 = arith.constant 0 : index
    %c18 = arith.constant 18 : index
    %c0_77 = arith.constant 0 : index
    %c0_78 = arith.constant 0 : index
    %135 = vector.load %arg2[%c0_76, %c18, %c0_77, %c0_78] : memref<4x36x4x256xf32, #tpu.memory_space<vmem>>, vector<1x1x4x256xf32>
    %136 = vector.shape_cast %135 : vector<1x1x4x256xf32> to vector<4x256xf32>
    %137 = vector.broadcast %134 : vector<1x256xf32> to vector<4x256xf32>
    %138 = arith.mulf %136, %137 : vector<4x256xf32>
    %139 = arith.addf %115, %138 : vector<4x256xf32>
    %140 = vector.extract_strided_slice %1 {offsets = [3, 0], sizes = [1, 256], strides = [1, 1]} : vector<4x256xf32> to vector<1x256xf32>
    %c0_79 = arith.constant 0 : index
    %c19 = arith.constant 19 : index
    %c0_80 = arith.constant 0 : index
    %c0_81 = arith.constant 0 : index
    %141 = vector.load %arg2[%c0_79, %c19, %c0_80, %c0_81] : memref<4x36x4x256xf32, #tpu.memory_space<vmem>>, vector<1x1x4x256xf32>
    %142 = vector.shape_cast %141 : vector<1x1x4x256xf32> to vector<4x256xf32>
    %143 = vector.broadcast %140 : vector<1x256xf32> to vector<4x256xf32>
    %144 = arith.mulf %142, %143 : vector<4x256xf32>
    %145 = arith.addf %121, %144 : vector<4x256xf32>
    %c255_i32 = arith.constant 255 : i32
    %146 = tpu.dynamic_rotate %1 by %c255_i32 dim 1 : vector<4x256xf32>, i32 -> vector<4x256xf32>
    %c5_82 = arith.constant 5 : index
    %c0_83 = arith.constant 0 : index
    %c0_84 = arith.constant 0 : index
    %147 = vector.load %arg4[%c5_82, %c0_83, %c0_84] : memref<9x4x256xf32, #tpu.memory_space<vmem>>, vector<1x4x256xf32>
    %148 = vector.shape_cast %147 : vector<1x4x256xf32> to vector<4x256xf32>
    %cst_85 = arith.constant 0.000000e+00 : f32
    %149 = vector.broadcast %cst_85 : f32 to vector<4x256xf32>
    %150 = arith.cmpf one, %148, %149 : vector<4x256xf32>
    %cst_86 = arith.constant 0.000000e+00 : f32
    %151 = vector.broadcast %cst_86 : f32 to vector<4x256xf32>
    %152 = arith.select %150, %146, %151 : vector<4x256xi1>, vector<4x256xf32>
    %153 = vector.extract_strided_slice %152 {offsets = [0, 0], sizes = [1, 256], strides = [1, 1]} : vector<4x256xf32> to vector<1x256xf32>
    %c0_87 = arith.constant 0 : index
    %c20 = arith.constant 20 : index
    %c0_88 = arith.constant 0 : index
    %c0_89 = arith.constant 0 : index
    %154 = vector.load %arg2[%c0_87, %c20, %c0_88, %c0_89] : memref<4x36x4x256xf32, #tpu.memory_space<vmem>>, vector<1x1x4x256xf32>
    %155 = vector.shape_cast %154 : vector<1x1x4x256xf32> to vector<4x256xf32>
    %156 = vector.broadcast %153 : vector<1x256xf32> to vector<4x256xf32>
    %157 = arith.mulf %155, %156 : vector<4x256xf32>
    %158 = arith.addf %127, %157 : vector<4x256xf32>
    %159 = vector.extract_strided_slice %152 {offsets = [1, 0], sizes = [1, 256], strides = [1, 1]} : vector<4x256xf32> to vector<1x256xf32>
    %c0_90 = arith.constant 0 : index
    %c21 = arith.constant 21 : index
    %c0_91 = arith.constant 0 : index
    %c0_92 = arith.constant 0 : index
    %160 = vector.load %arg2[%c0_90, %c21, %c0_91, %c0_92] : memref<4x36x4x256xf32, #tpu.memory_space<vmem>>, vector<1x1x4x256xf32>
    %161 = vector.shape_cast %160 : vector<1x1x4x256xf32> to vector<4x256xf32>
    %162 = vector.broadcast %159 : vector<1x256xf32> to vector<4x256xf32>
    %163 = arith.mulf %161, %162 : vector<4x256xf32>
    %164 = arith.addf %133, %163 : vector<4x256xf32>
    %165 = vector.extract_strided_slice %152 {offsets = [2, 0], sizes = [1, 256], strides = [1, 1]} : vector<4x256xf32> to vector<1x256xf32>
    %c0_93 = arith.constant 0 : index
    %c22 = arith.constant 22 : index
    %c0_94 = arith.constant 0 : index
    %c0_95 = arith.constant 0 : index
    %166 = vector.load %arg2[%c0_93, %c22, %c0_94, %c0_95] : memref<4x36x4x256xf32, #tpu.memory_space<vmem>>, vector<1x1x4x256xf32>
    %167 = vector.shape_cast %166 : vector<1x1x4x256xf32> to vector<4x256xf32>
    %168 = vector.broadcast %165 : vector<1x256xf32> to vector<4x256xf32>
    %169 = arith.mulf %167, %168 : vector<4x256xf32>
    %170 = arith.addf %139, %169 : vector<4x256xf32>
    %171 = vector.extract_strided_slice %152 {offsets = [3, 0], sizes = [1, 256], strides = [1, 1]} : vector<4x256xf32> to vector<1x256xf32>
    %c0_96 = arith.constant 0 : index
    %c23 = arith.constant 23 : index
    %c0_97 = arith.constant 0 : index
    %c0_98 = arith.constant 0 : index
    %172 = vector.load %arg2[%c0_96, %c23, %c0_97, %c0_98] : memref<4x36x4x256xf32, #tpu.memory_space<vmem>>, vector<1x1x4x256xf32>
    %173 = vector.shape_cast %172 : vector<1x1x4x256xf32> to vector<4x256xf32>
    %174 = vector.broadcast %171 : vector<1x256xf32> to vector<4x256xf32>
    %175 = arith.mulf %173, %174 : vector<4x256xf32>
    %176 = arith.addf %145, %175 : vector<4x256xf32>
    %c241_i32 = arith.constant 241 : i32
    %177 = tpu.dynamic_rotate %1 by %c241_i32 dim 1 : vector<4x256xf32>, i32 -> vector<4x256xf32>
    %c6_99 = arith.constant 6 : index
    %c0_100 = arith.constant 0 : index
    %c0_101 = arith.constant 0 : index
    %178 = vector.load %arg4[%c6_99, %c0_100, %c0_101] : memref<9x4x256xf32, #tpu.memory_space<vmem>>, vector<1x4x256xf32>
    %179 = vector.shape_cast %178 : vector<1x4x256xf32> to vector<4x256xf32>
    %cst_102 = arith.constant 0.000000e+00 : f32
    %180 = vector.broadcast %cst_102 : f32 to vector<4x256xf32>
    %181 = arith.cmpf one, %179, %180 : vector<4x256xf32>
    %cst_103 = arith.constant 0.000000e+00 : f32
    %182 = vector.broadcast %cst_103 : f32 to vector<4x256xf32>
    %183 = arith.select %181, %177, %182 : vector<4x256xi1>, vector<4x256xf32>
    %184 = vector.extract_strided_slice %183 {offsets = [0, 0], sizes = [1, 256], strides = [1, 1]} : vector<4x256xf32> to vector<1x256xf32>
    %c0_104 = arith.constant 0 : index
    %c24 = arith.constant 24 : index
    %c0_105 = arith.constant 0 : index
    %c0_106 = arith.constant 0 : index
    %185 = vector.load %arg2[%c0_104, %c24, %c0_105, %c0_106] : memref<4x36x4x256xf32, #tpu.memory_space<vmem>>, vector<1x1x4x256xf32>
    %186 = vector.shape_cast %185 : vector<1x1x4x256xf32> to vector<4x256xf32>
    %187 = vector.broadcast %184 : vector<1x256xf32> to vector<4x256xf32>
    %188 = arith.mulf %186, %187 : vector<4x256xf32>
    %189 = arith.addf %158, %188 : vector<4x256xf32>
    %190 = vector.extract_strided_slice %183 {offsets = [1, 0], sizes = [1, 256], strides = [1, 1]} : vector<4x256xf32> to vector<1x256xf32>
    %c0_107 = arith.constant 0 : index
    %c25 = arith.constant 25 : index
    %c0_108 = arith.constant 0 : index
    %c0_109 = arith.constant 0 : index
    %191 = vector.load %arg2[%c0_107, %c25, %c0_108, %c0_109] : memref<4x36x4x256xf32, #tpu.memory_space<vmem>>, vector<1x1x4x256xf32>
    %192 = vector.shape_cast %191 : vector<1x1x4x256xf32> to vector<4x256xf32>
    %193 = vector.broadcast %190 : vector<1x256xf32> to vector<4x256xf32>
    %194 = arith.mulf %192, %193 : vector<4x256xf32>
    %195 = arith.addf %164, %194 : vector<4x256xf32>
    %196 = vector.extract_strided_slice %183 {offsets = [2, 0], sizes = [1, 256], strides = [1, 1]} : vector<4x256xf32> to vector<1x256xf32>
    %c0_110 = arith.constant 0 : index
    %c26 = arith.constant 26 : index
    %c0_111 = arith.constant 0 : index
    %c0_112 = arith.constant 0 : index
    %197 = vector.load %arg2[%c0_110, %c26, %c0_111, %c0_112] : memref<4x36x4x256xf32, #tpu.memory_space<vmem>>, vector<1x1x4x256xf32>
    %198 = vector.shape_cast %197 : vector<1x1x4x256xf32> to vector<4x256xf32>
    %199 = vector.broadcast %196 : vector<1x256xf32> to vector<4x256xf32>
    %200 = arith.mulf %198, %199 : vector<4x256xf32>
    %201 = arith.addf %170, %200 : vector<4x256xf32>
    %202 = vector.extract_strided_slice %183 {offsets = [3, 0], sizes = [1, 256], strides = [1, 1]} : vector<4x256xf32> to vector<1x256xf32>
    %c0_113 = arith.constant 0 : index
    %c27 = arith.constant 27 : index
    %c0_114 = arith.constant 0 : index
    %c0_115 = arith.constant 0 : index
    %203 = vector.load %arg2[%c0_113, %c27, %c0_114, %c0_115] : memref<4x36x4x256xf32, #tpu.memory_space<vmem>>, vector<1x1x4x256xf32>
    %204 = vector.shape_cast %203 : vector<1x1x4x256xf32> to vector<4x256xf32>
    %205 = vector.broadcast %202 : vector<1x256xf32> to vector<4x256xf32>
    %206 = arith.mulf %204, %205 : vector<4x256xf32>
    %207 = arith.addf %176, %206 : vector<4x256xf32>
    %c240_i32 = arith.constant 240 : i32
    %208 = tpu.dynamic_rotate %1 by %c240_i32 dim 1 : vector<4x256xf32>, i32 -> vector<4x256xf32>
    %c7_116 = arith.constant 7 : index
    %c0_117 = arith.constant 0 : index
    %c0_118 = arith.constant 0 : index
    %209 = vector.load %arg4[%c7_116, %c0_117, %c0_118] : memref<9x4x256xf32, #tpu.memory_space<vmem>>, vector<1x4x256xf32>
    %210 = vector.shape_cast %209 : vector<1x4x256xf32> to vector<4x256xf32>
    %cst_119 = arith.constant 0.000000e+00 : f32
    %211 = vector.broadcast %cst_119 : f32 to vector<4x256xf32>
    %212 = arith.cmpf one, %210, %211 : vector<4x256xf32>
    %cst_120 = arith.constant 0.000000e+00 : f32
    %213 = vector.broadcast %cst_120 : f32 to vector<4x256xf32>
    %214 = arith.select %212, %208, %213 : vector<4x256xi1>, vector<4x256xf32>
    %215 = vector.extract_strided_slice %214 {offsets = [0, 0], sizes = [1, 256], strides = [1, 1]} : vector<4x256xf32> to vector<1x256xf32>
    %c0_121 = arith.constant 0 : index
    %c28 = arith.constant 28 : index
    %c0_122 = arith.constant 0 : index
    %c0_123 = arith.constant 0 : index
    %216 = vector.load %arg2[%c0_121, %c28, %c0_122, %c0_123] : memref<4x36x4x256xf32, #tpu.memory_space<vmem>>, vector<1x1x4x256xf32>
    %217 = vector.shape_cast %216 : vector<1x1x4x256xf32> to vector<4x256xf32>
    %218 = vector.broadcast %215 : vector<1x256xf32> to vector<4x256xf32>
    %219 = arith.mulf %217, %218 : vector<4x256xf32>
    %220 = arith.addf %189, %219 : vector<4x256xf32>
    %221 = vector.extract_strided_slice %214 {offsets = [1, 0], sizes = [1, 256], strides = [1, 1]} : vector<4x256xf32> to vector<1x256xf32>
    %c0_124 = arith.constant 0 : index
    %c29 = arith.constant 29 : index
    %c0_125 = arith.constant 0 : index
    %c0_126 = arith.constant 0 : index
    %222 = vector.load %arg2[%c0_124, %c29, %c0_125, %c0_126] : memref<4x36x4x256xf32, #tpu.memory_space<vmem>>, vector<1x1x4x256xf32>
    %223 = vector.shape_cast %222 : vector<1x1x4x256xf32> to vector<4x256xf32>
    %224 = vector.broadcast %221 : vector<1x256xf32> to vector<4x256xf32>
    %225 = arith.mulf %223, %224 : vector<4x256xf32>
    %226 = arith.addf %195, %225 : vector<4x256xf32>
    %227 = vector.extract_strided_slice %214 {offsets = [2, 0], sizes = [1, 256], strides = [1, 1]} : vector<4x256xf32> to vector<1x256xf32>
    %c0_127 = arith.constant 0 : index
    %c30 = arith.constant 30 : index
    %c0_128 = arith.constant 0 : index
    %c0_129 = arith.constant 0 : index
    %228 = vector.load %arg2[%c0_127, %c30, %c0_128, %c0_129] : memref<4x36x4x256xf32, #tpu.memory_space<vmem>>, vector<1x1x4x256xf32>
    %229 = vector.shape_cast %228 : vector<1x1x4x256xf32> to vector<4x256xf32>
    %230 = vector.broadcast %227 : vector<1x256xf32> to vector<4x256xf32>
    %231 = arith.mulf %229, %230 : vector<4x256xf32>
    %232 = arith.addf %201, %231 : vector<4x256xf32>
    %233 = vector.extract_strided_slice %214 {offsets = [3, 0], sizes = [1, 256], strides = [1, 1]} : vector<4x256xf32> to vector<1x256xf32>
    %c0_130 = arith.constant 0 : index
    %c31 = arith.constant 31 : index
    %c0_131 = arith.constant 0 : index
    %c0_132 = arith.constant 0 : index
    %234 = vector.load %arg2[%c0_130, %c31, %c0_131, %c0_132] : memref<4x36x4x256xf32, #tpu.memory_space<vmem>>, vector<1x1x4x256xf32>
    %235 = vector.shape_cast %234 : vector<1x1x4x256xf32> to vector<4x256xf32>
    %236 = vector.broadcast %233 : vector<1x256xf32> to vector<4x256xf32>
    %237 = arith.mulf %235, %236 : vector<4x256xf32>
    %238 = arith.addf %207, %237 : vector<4x256xf32>
    %c239_i32 = arith.constant 239 : i32
    %239 = tpu.dynamic_rotate %1 by %c239_i32 dim 1 : vector<4x256xf32>, i32 -> vector<4x256xf32>
    %c8_133 = arith.constant 8 : index
    %c0_134 = arith.constant 0 : index
    %c0_135 = arith.constant 0 : index
    %240 = vector.load %arg4[%c8_133, %c0_134, %c0_135] : memref<9x4x256xf32, #tpu.memory_space<vmem>>, vector<1x4x256xf32>
    %241 = vector.shape_cast %240 : vector<1x4x256xf32> to vector<4x256xf32>
    %cst_136 = arith.constant 0.000000e+00 : f32
    %242 = vector.broadcast %cst_136 : f32 to vector<4x256xf32>
    %243 = arith.cmpf one, %241, %242 : vector<4x256xf32>
    %cst_137 = arith.constant 0.000000e+00 : f32
    %244 = vector.broadcast %cst_137 : f32 to vector<4x256xf32>
    %245 = arith.select %243, %239, %244 : vector<4x256xi1>, vector<4x256xf32>
    %246 = vector.extract_strided_slice %245 {offsets = [0, 0], sizes = [1, 256], strides = [1, 1]} : vector<4x256xf32> to vector<1x256xf32>
    %c0_138 = arith.constant 0 : index
    %c32 = arith.constant 32 : index
    %c0_139 = arith.constant 0 : index
    %c0_140 = arith.constant 0 : index
    %247 = vector.load %arg2[%c0_138, %c32, %c0_139, %c0_140] : memref<4x36x4x256xf32, #tpu.memory_space<vmem>>, vector<1x1x4x256xf32>
    %248 = vector.shape_cast %247 : vector<1x1x4x256xf32> to vector<4x256xf32>
    %249 = vector.broadcast %246 : vector<1x256xf32> to vector<4x256xf32>
    %250 = arith.mulf %248, %249 : vector<4x256xf32>
    %251 = arith.addf %220, %250 : vector<4x256xf32>
    %252 = vector.extract_strided_slice %245 {offsets = [1, 0], sizes = [1, 256], strides = [1, 1]} : vector<4x256xf32> to vector<1x256xf32>
    %c0_141 = arith.constant 0 : index
    %c33 = arith.constant 33 : index
    %c0_142 = arith.constant 0 : index
    %c0_143 = arith.constant 0 : index
    %253 = vector.load %arg2[%c0_141, %c33, %c0_142, %c0_143] : memref<4x36x4x256xf32, #tpu.memory_space<vmem>>, vector<1x1x4x256xf32>
    %254 = vector.shape_cast %253 : vector<1x1x4x256xf32> to vector<4x256xf32>
    %255 = vector.broadcast %252 : vector<1x256xf32> to vector<4x256xf32>
    %256 = arith.mulf %254, %255 : vector<4x256xf32>
    %257 = arith.addf %226, %256 : vector<4x256xf32>
    %258 = vector.extract_strided_slice %245 {offsets = [2, 0], sizes = [1, 256], strides = [1, 1]} : vector<4x256xf32> to vector<1x256xf32>
    %c0_144 = arith.constant 0 : index
    %c34 = arith.constant 34 : index
    %c0_145 = arith.constant 0 : index
    %c0_146 = arith.constant 0 : index
    %259 = vector.load %arg2[%c0_144, %c34, %c0_145, %c0_146] : memref<4x36x4x256xf32, #tpu.memory_space<vmem>>, vector<1x1x4x256xf32>
    %260 = vector.shape_cast %259 : vector<1x1x4x256xf32> to vector<4x256xf32>
    %261 = vector.broadcast %258 : vector<1x256xf32> to vector<4x256xf32>
    %262 = arith.mulf %260, %261 : vector<4x256xf32>
    %263 = arith.addf %232, %262 : vector<4x256xf32>
    %264 = vector.extract_strided_slice %245 {offsets = [3, 0], sizes = [1, 256], strides = [1, 1]} : vector<4x256xf32> to vector<1x256xf32>
    %c0_147 = arith.constant 0 : index
    %c35 = arith.constant 35 : index
    %c0_148 = arith.constant 0 : index
    %c0_149 = arith.constant 0 : index
    %265 = vector.load %arg2[%c0_147, %c35, %c0_148, %c0_149] : memref<4x36x4x256xf32, #tpu.memory_space<vmem>>, vector<1x1x4x256xf32>
    %266 = vector.shape_cast %265 : vector<1x1x4x256xf32> to vector<4x256xf32>
    %267 = vector.broadcast %264 : vector<1x256xf32> to vector<4x256xf32>
    %268 = arith.mulf %266, %267 : vector<4x256xf32>
    %269 = arith.addf %238, %268 : vector<4x256xf32>
    %c0_150 = arith.constant 0 : index
    %c0_151 = arith.constant 0 : index
    %c0_152 = arith.constant 0 : index
    %270 = vector.load %arg3[%c0_150, %c0_151, %c0_152] : memref<4x4x256xf32, #tpu.memory_space<vmem>>, vector<1x4x256xf32>
    %271 = vector.shape_cast %270 : vector<1x4x256xf32> to vector<4x256xf32>
    %272 = arith.addf %271, %251 : vector<4x256xf32>
    %273 = arith.addf %272, %257 : vector<4x256xf32>
    %274 = arith.addf %273, %263 : vector<4x256xf32>
    %275 = arith.addf %274, %269 : vector<4x256xf32>
    %cst_153 = arith.constant 0.000000e+00 : f32
    %276 = vector.broadcast %cst_153 : f32 to vector<4x256xf32>
    %277 = arith.maximumf %275, %276 : vector<4x256xf32>
    %c17_i32_154 = arith.constant 17 : i32
    %278 = tpu.dynamic_rotate %277 by %c17_i32_154 dim 1 : vector<4x256xf32>, i32 -> vector<4x256xf32>
    %c0_155 = arith.constant 0 : index
    %c0_156 = arith.constant 0 : index
    %c0_157 = arith.constant 0 : index
    %279 = vector.load %arg4[%c0_155, %c0_156, %c0_157] : memref<9x4x256xf32, #tpu.memory_space<vmem>>, vector<1x4x256xf32>
    %280 = vector.shape_cast %279 : vector<1x4x256xf32> to vector<4x256xf32>
    %cst_158 = arith.constant 0.000000e+00 : f32
    %281 = vector.broadcast %cst_158 : f32 to vector<4x256xf32>
    %282 = arith.cmpf one, %280, %281 : vector<4x256xf32>
    %cst_159 = arith.constant 0.000000e+00 : f32
    %283 = vector.broadcast %cst_159 : f32 to vector<4x256xf32>
    %284 = arith.select %282, %278, %283 : vector<4x256xi1>, vector<4x256xf32>
    %285 = vector.extract_strided_slice %284 {offsets = [0, 0], sizes = [1, 256], strides = [1, 1]} : vector<4x256xf32> to vector<1x256xf32>
    %c1_160 = arith.constant 1 : index
    %c0_161 = arith.constant 0 : index
    %c0_162 = arith.constant 0 : index
    %c0_163 = arith.constant 0 : index
    %286 = vector.load %arg2[%c1_160, %c0_161, %c0_162, %c0_163] : memref<4x36x4x256xf32, #tpu.memory_space<vmem>>, vector<1x1x4x256xf32>
    %287 = vector.shape_cast %286 : vector<1x1x4x256xf32> to vector<4x256xf32>
    %288 = vector.broadcast %285 : vector<1x256xf32> to vector<4x256xf32>
    %289 = arith.mulf %287, %288 : vector<4x256xf32>
    %290 = vector.extract_strided_slice %284 {offsets = [1, 0], sizes = [1, 256], strides = [1, 1]} : vector<4x256xf32> to vector<1x256xf32>
    %c1_164 = arith.constant 1 : index
    %c1_165 = arith.constant 1 : index
    %c0_166 = arith.constant 0 : index
    %c0_167 = arith.constant 0 : index
    %291 = vector.load %arg2[%c1_164, %c1_165, %c0_166, %c0_167] : memref<4x36x4x256xf32, #tpu.memory_space<vmem>>, vector<1x1x4x256xf32>
    %292 = vector.shape_cast %291 : vector<1x1x4x256xf32> to vector<4x256xf32>
    %293 = vector.broadcast %290 : vector<1x256xf32> to vector<4x256xf32>
    %294 = arith.mulf %292, %293 : vector<4x256xf32>
    %295 = vector.extract_strided_slice %284 {offsets = [2, 0], sizes = [1, 256], strides = [1, 1]} : vector<4x256xf32> to vector<1x256xf32>
    %c1_168 = arith.constant 1 : index
    %c2_169 = arith.constant 2 : index
    %c0_170 = arith.constant 0 : index
    %c0_171 = arith.constant 0 : index
    %296 = vector.load %arg2[%c1_168, %c2_169, %c0_170, %c0_171] : memref<4x36x4x256xf32, #tpu.memory_space<vmem>>, vector<1x1x4x256xf32>
    %297 = vector.shape_cast %296 : vector<1x1x4x256xf32> to vector<4x256xf32>
    %298 = vector.broadcast %295 : vector<1x256xf32> to vector<4x256xf32>
    %299 = arith.mulf %297, %298 : vector<4x256xf32>
    %300 = vector.extract_strided_slice %284 {offsets = [3, 0], sizes = [1, 256], strides = [1, 1]} : vector<4x256xf32> to vector<1x256xf32>
    %c1_172 = arith.constant 1 : index
    %c3_173 = arith.constant 3 : index
    %c0_174 = arith.constant 0 : index
    %c0_175 = arith.constant 0 : index
    %301 = vector.load %arg2[%c1_172, %c3_173, %c0_174, %c0_175] : memref<4x36x4x256xf32, #tpu.memory_space<vmem>>, vector<1x1x4x256xf32>
    %302 = vector.shape_cast %301 : vector<1x1x4x256xf32> to vector<4x256xf32>
    %303 = vector.broadcast %300 : vector<1x256xf32> to vector<4x256xf32>
    %304 = arith.mulf %302, %303 : vector<4x256xf32>
    %c16_i32_176 = arith.constant 16 : i32
    %305 = tpu.dynamic_rotate %277 by %c16_i32_176 dim 1 : vector<4x256xf32>, i32 -> vector<4x256xf32>
    %c1_177 = arith.constant 1 : index
    %c0_178 = arith.constant 0 : index
    %c0_179 = arith.constant 0 : index
    %306 = vector.load %arg4[%c1_177, %c0_178, %c0_179] : memref<9x4x256xf32, #tpu.memory_space<vmem>>, vector<1x4x256xf32>
    %307 = vector.shape_cast %306 : vector<1x4x256xf32> to vector<4x256xf32>
    %cst_180 = arith.constant 0.000000e+00 : f32
    %308 = vector.broadcast %cst_180 : f32 to vector<4x256xf32>
    %309 = arith.cmpf one, %307, %308 : vector<4x256xf32>
    %cst_181 = arith.constant 0.000000e+00 : f32
    %310 = vector.broadcast %cst_181 : f32 to vector<4x256xf32>
    %311 = arith.select %309, %305, %310 : vector<4x256xi1>, vector<4x256xf32>
    %312 = vector.extract_strided_slice %311 {offsets = [0, 0], sizes = [1, 256], strides = [1, 1]} : vector<4x256xf32> to vector<1x256xf32>
    %c1_182 = arith.constant 1 : index
    %c4_183 = arith.constant 4 : index
    %c0_184 = arith.constant 0 : index
    %c0_185 = arith.constant 0 : index
    %313 = vector.load %arg2[%c1_182, %c4_183, %c0_184, %c0_185] : memref<4x36x4x256xf32, #tpu.memory_space<vmem>>, vector<1x1x4x256xf32>
    %314 = vector.shape_cast %313 : vector<1x1x4x256xf32> to vector<4x256xf32>
    %315 = vector.broadcast %312 : vector<1x256xf32> to vector<4x256xf32>
    %316 = arith.mulf %314, %315 : vector<4x256xf32>
    %317 = arith.addf %289, %316 : vector<4x256xf32>
    %318 = vector.extract_strided_slice %311 {offsets = [1, 0], sizes = [1, 256], strides = [1, 1]} : vector<4x256xf32> to vector<1x256xf32>
    %c1_186 = arith.constant 1 : index
    %c5_187 = arith.constant 5 : index
    %c0_188 = arith.constant 0 : index
    %c0_189 = arith.constant 0 : index
    %319 = vector.load %arg2[%c1_186, %c5_187, %c0_188, %c0_189] : memref<4x36x4x256xf32, #tpu.memory_space<vmem>>, vector<1x1x4x256xf32>
    %320 = vector.shape_cast %319 : vector<1x1x4x256xf32> to vector<4x256xf32>
    %321 = vector.broadcast %318 : vector<1x256xf32> to vector<4x256xf32>
    %322 = arith.mulf %320, %321 : vector<4x256xf32>
    %323 = arith.addf %294, %322 : vector<4x256xf32>
    %324 = vector.extract_strided_slice %311 {offsets = [2, 0], sizes = [1, 256], strides = [1, 1]} : vector<4x256xf32> to vector<1x256xf32>
    %c1_190 = arith.constant 1 : index
    %c6_191 = arith.constant 6 : index
    %c0_192 = arith.constant 0 : index
    %c0_193 = arith.constant 0 : index
    %325 = vector.load %arg2[%c1_190, %c6_191, %c0_192, %c0_193] : memref<4x36x4x256xf32, #tpu.memory_space<vmem>>, vector<1x1x4x256xf32>
    %326 = vector.shape_cast %325 : vector<1x1x4x256xf32> to vector<4x256xf32>
    %327 = vector.broadcast %324 : vector<1x256xf32> to vector<4x256xf32>
    %328 = arith.mulf %326, %327 : vector<4x256xf32>
    %329 = arith.addf %299, %328 : vector<4x256xf32>
    %330 = vector.extract_strided_slice %311 {offsets = [3, 0], sizes = [1, 256], strides = [1, 1]} : vector<4x256xf32> to vector<1x256xf32>
    %c1_194 = arith.constant 1 : index
    %c7_195 = arith.constant 7 : index
    %c0_196 = arith.constant 0 : index
    %c0_197 = arith.constant 0 : index
    %331 = vector.load %arg2[%c1_194, %c7_195, %c0_196, %c0_197] : memref<4x36x4x256xf32, #tpu.memory_space<vmem>>, vector<1x1x4x256xf32>
    %332 = vector.shape_cast %331 : vector<1x1x4x256xf32> to vector<4x256xf32>
    %333 = vector.broadcast %330 : vector<1x256xf32> to vector<4x256xf32>
    %334 = arith.mulf %332, %333 : vector<4x256xf32>
    %335 = arith.addf %304, %334 : vector<4x256xf32>
    %c15_i32_198 = arith.constant 15 : i32
    %336 = tpu.dynamic_rotate %277 by %c15_i32_198 dim 1 : vector<4x256xf32>, i32 -> vector<4x256xf32>
    %c2_199 = arith.constant 2 : index
    %c0_200 = arith.constant 0 : index
    %c0_201 = arith.constant 0 : index
    %337 = vector.load %arg4[%c2_199, %c0_200, %c0_201] : memref<9x4x256xf32, #tpu.memory_space<vmem>>, vector<1x4x256xf32>
    %338 = vector.shape_cast %337 : vector<1x4x256xf32> to vector<4x256xf32>
    %cst_202 = arith.constant 0.000000e+00 : f32
    %339 = vector.broadcast %cst_202 : f32 to vector<4x256xf32>
    %340 = arith.cmpf one, %338, %339 : vector<4x256xf32>
    %cst_203 = arith.constant 0.000000e+00 : f32
    %341 = vector.broadcast %cst_203 : f32 to vector<4x256xf32>
    %342 = arith.select %340, %336, %341 : vector<4x256xi1>, vector<4x256xf32>
    %343 = vector.extract_strided_slice %342 {offsets = [0, 0], sizes = [1, 256], strides = [1, 1]} : vector<4x256xf32> to vector<1x256xf32>
    %c1_204 = arith.constant 1 : index
    %c8_205 = arith.constant 8 : index
    %c0_206 = arith.constant 0 : index
    %c0_207 = arith.constant 0 : index
    %344 = vector.load %arg2[%c1_204, %c8_205, %c0_206, %c0_207] : memref<4x36x4x256xf32, #tpu.memory_space<vmem>>, vector<1x1x4x256xf32>
    %345 = vector.shape_cast %344 : vector<1x1x4x256xf32> to vector<4x256xf32>
    %346 = vector.broadcast %343 : vector<1x256xf32> to vector<4x256xf32>
    %347 = arith.mulf %345, %346 : vector<4x256xf32>
    %348 = arith.addf %317, %347 : vector<4x256xf32>
    %349 = vector.extract_strided_slice %342 {offsets = [1, 0], sizes = [1, 256], strides = [1, 1]} : vector<4x256xf32> to vector<1x256xf32>
    %c1_208 = arith.constant 1 : index
    %c9_209 = arith.constant 9 : index
    %c0_210 = arith.constant 0 : index
    %c0_211 = arith.constant 0 : index
    %350 = vector.load %arg2[%c1_208, %c9_209, %c0_210, %c0_211] : memref<4x36x4x256xf32, #tpu.memory_space<vmem>>, vector<1x1x4x256xf32>
    %351 = vector.shape_cast %350 : vector<1x1x4x256xf32> to vector<4x256xf32>
    %352 = vector.broadcast %349 : vector<1x256xf32> to vector<4x256xf32>
    %353 = arith.mulf %351, %352 : vector<4x256xf32>
    %354 = arith.addf %323, %353 : vector<4x256xf32>
    %355 = vector.extract_strided_slice %342 {offsets = [2, 0], sizes = [1, 256], strides = [1, 1]} : vector<4x256xf32> to vector<1x256xf32>
    %c1_212 = arith.constant 1 : index
    %c10_213 = arith.constant 10 : index
    %c0_214 = arith.constant 0 : index
    %c0_215 = arith.constant 0 : index
    %356 = vector.load %arg2[%c1_212, %c10_213, %c0_214, %c0_215] : memref<4x36x4x256xf32, #tpu.memory_space<vmem>>, vector<1x1x4x256xf32>
    %357 = vector.shape_cast %356 : vector<1x1x4x256xf32> to vector<4x256xf32>
    %358 = vector.broadcast %355 : vector<1x256xf32> to vector<4x256xf32>
    %359 = arith.mulf %357, %358 : vector<4x256xf32>
    %360 = arith.addf %329, %359 : vector<4x256xf32>
    %361 = vector.extract_strided_slice %342 {offsets = [3, 0], sizes = [1, 256], strides = [1, 1]} : vector<4x256xf32> to vector<1x256xf32>
    %c1_216 = arith.constant 1 : index
    %c11_217 = arith.constant 11 : index
    %c0_218 = arith.constant 0 : index
    %c0_219 = arith.constant 0 : index
    %362 = vector.load %arg2[%c1_216, %c11_217, %c0_218, %c0_219] : memref<4x36x4x256xf32, #tpu.memory_space<vmem>>, vector<1x1x4x256xf32>
    %363 = vector.shape_cast %362 : vector<1x1x4x256xf32> to vector<4x256xf32>
    %364 = vector.broadcast %361 : vector<1x256xf32> to vector<4x256xf32>
    %365 = arith.mulf %363, %364 : vector<4x256xf32>
    %366 = arith.addf %335, %365 : vector<4x256xf32>
    %c1_i32_220 = arith.constant 1 : i32
    %367 = tpu.dynamic_rotate %277 by %c1_i32_220 dim 1 : vector<4x256xf32>, i32 -> vector<4x256xf32>
    %c3_221 = arith.constant 3 : index
    %c0_222 = arith.constant 0 : index
    %c0_223 = arith.constant 0 : index
    %368 = vector.load %arg4[%c3_221, %c0_222, %c0_223] : memref<9x4x256xf32, #tpu.memory_space<vmem>>, vector<1x4x256xf32>
    %369 = vector.shape_cast %368 : vector<1x4x256xf32> to vector<4x256xf32>
    %cst_224 = arith.constant 0.000000e+00 : f32
    %370 = vector.broadcast %cst_224 : f32 to vector<4x256xf32>
    %371 = arith.cmpf one, %369, %370 : vector<4x256xf32>
    %cst_225 = arith.constant 0.000000e+00 : f32
    %372 = vector.broadcast %cst_225 : f32 to vector<4x256xf32>
    %373 = arith.select %371, %367, %372 : vector<4x256xi1>, vector<4x256xf32>
    %374 = vector.extract_strided_slice %373 {offsets = [0, 0], sizes = [1, 256], strides = [1, 1]} : vector<4x256xf32> to vector<1x256xf32>
    %c1_226 = arith.constant 1 : index
    %c12_227 = arith.constant 12 : index
    %c0_228 = arith.constant 0 : index
    %c0_229 = arith.constant 0 : index
    %375 = vector.load %arg2[%c1_226, %c12_227, %c0_228, %c0_229] : memref<4x36x4x256xf32, #tpu.memory_space<vmem>>, vector<1x1x4x256xf32>
    %376 = vector.shape_cast %375 : vector<1x1x4x256xf32> to vector<4x256xf32>
    %377 = vector.broadcast %374 : vector<1x256xf32> to vector<4x256xf32>
    %378 = arith.mulf %376, %377 : vector<4x256xf32>
    %379 = arith.addf %348, %378 : vector<4x256xf32>
    %380 = vector.extract_strided_slice %373 {offsets = [1, 0], sizes = [1, 256], strides = [1, 1]} : vector<4x256xf32> to vector<1x256xf32>
    %c1_230 = arith.constant 1 : index
    %c13_231 = arith.constant 13 : index
    %c0_232 = arith.constant 0 : index
    %c0_233 = arith.constant 0 : index
    %381 = vector.load %arg2[%c1_230, %c13_231, %c0_232, %c0_233] : memref<4x36x4x256xf32, #tpu.memory_space<vmem>>, vector<1x1x4x256xf32>
    %382 = vector.shape_cast %381 : vector<1x1x4x256xf32> to vector<4x256xf32>
    %383 = vector.broadcast %380 : vector<1x256xf32> to vector<4x256xf32>
    %384 = arith.mulf %382, %383 : vector<4x256xf32>
    %385 = arith.addf %354, %384 : vector<4x256xf32>
    %386 = vector.extract_strided_slice %373 {offsets = [2, 0], sizes = [1, 256], strides = [1, 1]} : vector<4x256xf32> to vector<1x256xf32>
    %c1_234 = arith.constant 1 : index
    %c14_235 = arith.constant 14 : index
    %c0_236 = arith.constant 0 : index
    %c0_237 = arith.constant 0 : index
    %387 = vector.load %arg2[%c1_234, %c14_235, %c0_236, %c0_237] : memref<4x36x4x256xf32, #tpu.memory_space<vmem>>, vector<1x1x4x256xf32>
    %388 = vector.shape_cast %387 : vector<1x1x4x256xf32> to vector<4x256xf32>
    %389 = vector.broadcast %386 : vector<1x256xf32> to vector<4x256xf32>
    %390 = arith.mulf %388, %389 : vector<4x256xf32>
    %391 = arith.addf %360, %390 : vector<4x256xf32>
    %392 = vector.extract_strided_slice %373 {offsets = [3, 0], sizes = [1, 256], strides = [1, 1]} : vector<4x256xf32> to vector<1x256xf32>
    %c1_238 = arith.constant 1 : index
    %c15_239 = arith.constant 15 : index
    %c0_240 = arith.constant 0 : index
    %c0_241 = arith.constant 0 : index
    %393 = vector.load %arg2[%c1_238, %c15_239, %c0_240, %c0_241] : memref<4x36x4x256xf32, #tpu.memory_space<vmem>>, vector<1x1x4x256xf32>
    %394 = vector.shape_cast %393 : vector<1x1x4x256xf32> to vector<4x256xf32>
    %395 = vector.broadcast %392 : vector<1x256xf32> to vector<4x256xf32>
    %396 = arith.mulf %394, %395 : vector<4x256xf32>
    %397 = arith.addf %366, %396 : vector<4x256xf32>
    %398 = vector.extract_strided_slice %277 {offsets = [0, 0], sizes = [1, 256], strides = [1, 1]} : vector<4x256xf32> to vector<1x256xf32>
    %c1_242 = arith.constant 1 : index
    %c16_243 = arith.constant 16 : index
    %c0_244 = arith.constant 0 : index
    %c0_245 = arith.constant 0 : index
    %399 = vector.load %arg2[%c1_242, %c16_243, %c0_244, %c0_245] : memref<4x36x4x256xf32, #tpu.memory_space<vmem>>, vector<1x1x4x256xf32>
    %400 = vector.shape_cast %399 : vector<1x1x4x256xf32> to vector<4x256xf32>
    %401 = vector.broadcast %398 : vector<1x256xf32> to vector<4x256xf32>
    %402 = arith.mulf %400, %401 : vector<4x256xf32>
    %403 = arith.addf %379, %402 : vector<4x256xf32>
    %404 = vector.extract_strided_slice %277 {offsets = [1, 0], sizes = [1, 256], strides = [1, 1]} : vector<4x256xf32> to vector<1x256xf32>
    %c1_246 = arith.constant 1 : index
    %c17_247 = arith.constant 17 : index
    %c0_248 = arith.constant 0 : index
    %c0_249 = arith.constant 0 : index
    %405 = vector.load %arg2[%c1_246, %c17_247, %c0_248, %c0_249] : memref<4x36x4x256xf32, #tpu.memory_space<vmem>>, vector<1x1x4x256xf32>
    %406 = vector.shape_cast %405 : vector<1x1x4x256xf32> to vector<4x256xf32>
    %407 = vector.broadcast %404 : vector<1x256xf32> to vector<4x256xf32>
    %408 = arith.mulf %406, %407 : vector<4x256xf32>
    %409 = arith.addf %385, %408 : vector<4x256xf32>
    %410 = vector.extract_strided_slice %277 {offsets = [2, 0], sizes = [1, 256], strides = [1, 1]} : vector<4x256xf32> to vector<1x256xf32>
    %c1_250 = arith.constant 1 : index
    %c18_251 = arith.constant 18 : index
    %c0_252 = arith.constant 0 : index
    %c0_253 = arith.constant 0 : index
    %411 = vector.load %arg2[%c1_250, %c18_251, %c0_252, %c0_253] : memref<4x36x4x256xf32, #tpu.memory_space<vmem>>, vector<1x1x4x256xf32>
    %412 = vector.shape_cast %411 : vector<1x1x4x256xf32> to vector<4x256xf32>
    %413 = vector.broadcast %410 : vector<1x256xf32> to vector<4x256xf32>
    %414 = arith.mulf %412, %413 : vector<4x256xf32>
    %415 = arith.addf %391, %414 : vector<4x256xf32>
    %416 = vector.extract_strided_slice %277 {offsets = [3, 0], sizes = [1, 256], strides = [1, 1]} : vector<4x256xf32> to vector<1x256xf32>
    %c1_254 = arith.constant 1 : index
    %c19_255 = arith.constant 19 : index
    %c0_256 = arith.constant 0 : index
    %c0_257 = arith.constant 0 : index
    %417 = vector.load %arg2[%c1_254, %c19_255, %c0_256, %c0_257] : memref<4x36x4x256xf32, #tpu.memory_space<vmem>>, vector<1x1x4x256xf32>
    %418 = vector.shape_cast %417 : vector<1x1x4x256xf32> to vector<4x256xf32>
    %419 = vector.broadcast %416 : vector<1x256xf32> to vector<4x256xf32>
    %420 = arith.mulf %418, %419 : vector<4x256xf32>
    %421 = arith.addf %397, %420 : vector<4x256xf32>
    %c255_i32_258 = arith.constant 255 : i32
    %422 = tpu.dynamic_rotate %277 by %c255_i32_258 dim 1 : vector<4x256xf32>, i32 -> vector<4x256xf32>
    %c5_259 = arith.constant 5 : index
    %c0_260 = arith.constant 0 : index
    %c0_261 = arith.constant 0 : index
    %423 = vector.load %arg4[%c5_259, %c0_260, %c0_261] : memref<9x4x256xf32, #tpu.memory_space<vmem>>, vector<1x4x256xf32>
    %424 = vector.shape_cast %423 : vector<1x4x256xf32> to vector<4x256xf32>
    %cst_262 = arith.constant 0.000000e+00 : f32
    %425 = vector.broadcast %cst_262 : f32 to vector<4x256xf32>
    %426 = arith.cmpf one, %424, %425 : vector<4x256xf32>
    %cst_263 = arith.constant 0.000000e+00 : f32
    %427 = vector.broadcast %cst_263 : f32 to vector<4x256xf32>
    %428 = arith.select %426, %422, %427 : vector<4x256xi1>, vector<4x256xf32>
    %429 = vector.extract_strided_slice %428 {offsets = [0, 0], sizes = [1, 256], strides = [1, 1]} : vector<4x256xf32> to vector<1x256xf32>
    %c1_264 = arith.constant 1 : index
    %c20_265 = arith.constant 20 : index
    %c0_266 = arith.constant 0 : index
    %c0_267 = arith.constant 0 : index
    %430 = vector.load %arg2[%c1_264, %c20_265, %c0_266, %c0_267] : memref<4x36x4x256xf32, #tpu.memory_space<vmem>>, vector<1x1x4x256xf32>
    %431 = vector.shape_cast %430 : vector<1x1x4x256xf32> to vector<4x256xf32>
    %432 = vector.broadcast %429 : vector<1x256xf32> to vector<4x256xf32>
    %433 = arith.mulf %431, %432 : vector<4x256xf32>
    %434 = arith.addf %403, %433 : vector<4x256xf32>
    %435 = vector.extract_strided_slice %428 {offsets = [1, 0], sizes = [1, 256], strides = [1, 1]} : vector<4x256xf32> to vector<1x256xf32>
    %c1_268 = arith.constant 1 : index
    %c21_269 = arith.constant 21 : index
    %c0_270 = arith.constant 0 : index
    %c0_271 = arith.constant 0 : index
    %436 = vector.load %arg2[%c1_268, %c21_269, %c0_270, %c0_271] : memref<4x36x4x256xf32, #tpu.memory_space<vmem>>, vector<1x1x4x256xf32>
    %437 = vector.shape_cast %436 : vector<1x1x4x256xf32> to vector<4x256xf32>
    %438 = vector.broadcast %435 : vector<1x256xf32> to vector<4x256xf32>
    %439 = arith.mulf %437, %438 : vector<4x256xf32>
    %440 = arith.addf %409, %439 : vector<4x256xf32>
    %441 = vector.extract_strided_slice %428 {offsets = [2, 0], sizes = [1, 256], strides = [1, 1]} : vector<4x256xf32> to vector<1x256xf32>
    %c1_272 = arith.constant 1 : index
    %c22_273 = arith.constant 22 : index
    %c0_274 = arith.constant 0 : index
    %c0_275 = arith.constant 0 : index
    %442 = vector.load %arg2[%c1_272, %c22_273, %c0_274, %c0_275] : memref<4x36x4x256xf32, #tpu.memory_space<vmem>>, vector<1x1x4x256xf32>
    %443 = vector.shape_cast %442 : vector<1x1x4x256xf32> to vector<4x256xf32>
    %444 = vector.broadcast %441 : vector<1x256xf32> to vector<4x256xf32>
    %445 = arith.mulf %443, %444 : vector<4x256xf32>
    %446 = arith.addf %415, %445 : vector<4x256xf32>
    %447 = vector.extract_strided_slice %428 {offsets = [3, 0], sizes = [1, 256], strides = [1, 1]} : vector<4x256xf32> to vector<1x256xf32>
    %c1_276 = arith.constant 1 : index
    %c23_277 = arith.constant 23 : index
    %c0_278 = arith.constant 0 : index
    %c0_279 = arith.constant 0 : index
    %448 = vector.load %arg2[%c1_276, %c23_277, %c0_278, %c0_279] : memref<4x36x4x256xf32, #tpu.memory_space<vmem>>, vector<1x1x4x256xf32>
    %449 = vector.shape_cast %448 : vector<1x1x4x256xf32> to vector<4x256xf32>
    %450 = vector.broadcast %447 : vector<1x256xf32> to vector<4x256xf32>
    %451 = arith.mulf %449, %450 : vector<4x256xf32>
    %452 = arith.addf %421, %451 : vector<4x256xf32>
    %c241_i32_280 = arith.constant 241 : i32
    %453 = tpu.dynamic_rotate %277 by %c241_i32_280 dim 1 : vector<4x256xf32>, i32 -> vector<4x256xf32>
    %c6_281 = arith.constant 6 : index
    %c0_282 = arith.constant 0 : index
    %c0_283 = arith.constant 0 : index
    %454 = vector.load %arg4[%c6_281, %c0_282, %c0_283] : memref<9x4x256xf32, #tpu.memory_space<vmem>>, vector<1x4x256xf32>
    %455 = vector.shape_cast %454 : vector<1x4x256xf32> to vector<4x256xf32>
    %cst_284 = arith.constant 0.000000e+00 : f32
    %456 = vector.broadcast %cst_284 : f32 to vector<4x256xf32>
    %457 = arith.cmpf one, %455, %456 : vector<4x256xf32>
    %cst_285 = arith.constant 0.000000e+00 : f32
    %458 = vector.broadcast %cst_285 : f32 to vector<4x256xf32>
    %459 = arith.select %457, %453, %458 : vector<4x256xi1>, vector<4x256xf32>
    %460 = vector.extract_strided_slice %459 {offsets = [0, 0], sizes = [1, 256], strides = [1, 1]} : vector<4x256xf32> to vector<1x256xf32>
    %c1_286 = arith.constant 1 : index
    %c24_287 = arith.constant 24 : index
    %c0_288 = arith.constant 0 : index
    %c0_289 = arith.constant 0 : index
    %461 = vector.load %arg2[%c1_286, %c24_287, %c0_288, %c0_289] : memref<4x36x4x256xf32, #tpu.memory_space<vmem>>, vector<1x1x4x256xf32>
    %462 = vector.shape_cast %461 : vector<1x1x4x256xf32> to vector<4x256xf32>
    %463 = vector.broadcast %460 : vector<1x256xf32> to vector<4x256xf32>
    %464 = arith.mulf %462, %463 : vector<4x256xf32>
    %465 = arith.addf %434, %464 : vector<4x256xf32>
    %466 = vector.extract_strided_slice %459 {offsets = [1, 0], sizes = [1, 256], strides = [1, 1]} : vector<4x256xf32> to vector<1x256xf32>
    %c1_290 = arith.constant 1 : index
    %c25_291 = arith.constant 25 : index
    %c0_292 = arith.constant 0 : index
    %c0_293 = arith.constant 0 : index
    %467 = vector.load %arg2[%c1_290, %c25_291, %c0_292, %c0_293] : memref<4x36x4x256xf32, #tpu.memory_space<vmem>>, vector<1x1x4x256xf32>
    %468 = vector.shape_cast %467 : vector<1x1x4x256xf32> to vector<4x256xf32>
    %469 = vector.broadcast %466 : vector<1x256xf32> to vector<4x256xf32>
    %470 = arith.mulf %468, %469 : vector<4x256xf32>
    %471 = arith.addf %440, %470 : vector<4x256xf32>
    %472 = vector.extract_strided_slice %459 {offsets = [2, 0], sizes = [1, 256], strides = [1, 1]} : vector<4x256xf32> to vector<1x256xf32>
    %c1_294 = arith.constant 1 : index
    %c26_295 = arith.constant 26 : index
    %c0_296 = arith.constant 0 : index
    %c0_297 = arith.constant 0 : index
    %473 = vector.load %arg2[%c1_294, %c26_295, %c0_296, %c0_297] : memref<4x36x4x256xf32, #tpu.memory_space<vmem>>, vector<1x1x4x256xf32>
    %474 = vector.shape_cast %473 : vector<1x1x4x256xf32> to vector<4x256xf32>
    %475 = vector.broadcast %472 : vector<1x256xf32> to vector<4x256xf32>
    %476 = arith.mulf %474, %475 : vector<4x256xf32>
    %477 = arith.addf %446, %476 : vector<4x256xf32>
    %478 = vector.extract_strided_slice %459 {offsets = [3, 0], sizes = [1, 256], strides = [1, 1]} : vector<4x256xf32> to vector<1x256xf32>
    %c1_298 = arith.constant 1 : index
    %c27_299 = arith.constant 27 : index
    %c0_300 = arith.constant 0 : index
    %c0_301 = arith.constant 0 : index
    %479 = vector.load %arg2[%c1_298, %c27_299, %c0_300, %c0_301] : memref<4x36x4x256xf32, #tpu.memory_space<vmem>>, vector<1x1x4x256xf32>
    %480 = vector.shape_cast %479 : vector<1x1x4x256xf32> to vector<4x256xf32>
    %481 = vector.broadcast %478 : vector<1x256xf32> to vector<4x256xf32>
    %482 = arith.mulf %480, %481 : vector<4x256xf32>
    %483 = arith.addf %452, %482 : vector<4x256xf32>
    %c240_i32_302 = arith.constant 240 : i32
    %484 = tpu.dynamic_rotate %277 by %c240_i32_302 dim 1 : vector<4x256xf32>, i32 -> vector<4x256xf32>
    %c7_303 = arith.constant 7 : index
    %c0_304 = arith.constant 0 : index
    %c0_305 = arith.constant 0 : index
    %485 = vector.load %arg4[%c7_303, %c0_304, %c0_305] : memref<9x4x256xf32, #tpu.memory_space<vmem>>, vector<1x4x256xf32>
    %486 = vector.shape_cast %485 : vector<1x4x256xf32> to vector<4x256xf32>
    %cst_306 = arith.constant 0.000000e+00 : f32
    %487 = vector.broadcast %cst_306 : f32 to vector<4x256xf32>
    %488 = arith.cmpf one, %486, %487 : vector<4x256xf32>
    %cst_307 = arith.constant 0.000000e+00 : f32
    %489 = vector.broadcast %cst_307 : f32 to vector<4x256xf32>
    %490 = arith.select %488, %484, %489 : vector<4x256xi1>, vector<4x256xf32>
    %491 = vector.extract_strided_slice %490 {offsets = [0, 0], sizes = [1, 256], strides = [1, 1]} : vector<4x256xf32> to vector<1x256xf32>
    %c1_308 = arith.constant 1 : index
    %c28_309 = arith.constant 28 : index
    %c0_310 = arith.constant 0 : index
    %c0_311 = arith.constant 0 : index
    %492 = vector.load %arg2[%c1_308, %c28_309, %c0_310, %c0_311] : memref<4x36x4x256xf32, #tpu.memory_space<vmem>>, vector<1x1x4x256xf32>
    %493 = vector.shape_cast %492 : vector<1x1x4x256xf32> to vector<4x256xf32>
    %494 = vector.broadcast %491 : vector<1x256xf32> to vector<4x256xf32>
    %495 = arith.mulf %493, %494 : vector<4x256xf32>
    %496 = arith.addf %465, %495 : vector<4x256xf32>
    %497 = vector.extract_strided_slice %490 {offsets = [1, 0], sizes = [1, 256], strides = [1, 1]} : vector<4x256xf32> to vector<1x256xf32>
    %c1_312 = arith.constant 1 : index
    %c29_313 = arith.constant 29 : index
    %c0_314 = arith.constant 0 : index
    %c0_315 = arith.constant 0 : index
    %498 = vector.load %arg2[%c1_312, %c29_313, %c0_314, %c0_315] : memref<4x36x4x256xf32, #tpu.memory_space<vmem>>, vector<1x1x4x256xf32>
    %499 = vector.shape_cast %498 : vector<1x1x4x256xf32> to vector<4x256xf32>
    %500 = vector.broadcast %497 : vector<1x256xf32> to vector<4x256xf32>
    %501 = arith.mulf %499, %500 : vector<4x256xf32>
    %502 = arith.addf %471, %501 : vector<4x256xf32>
    %503 = vector.extract_strided_slice %490 {offsets = [2, 0], sizes = [1, 256], strides = [1, 1]} : vector<4x256xf32> to vector<1x256xf32>
    %c1_316 = arith.constant 1 : index
    %c30_317 = arith.constant 30 : index
    %c0_318 = arith.constant 0 : index
    %c0_319 = arith.constant 0 : index
    %504 = vector.load %arg2[%c1_316, %c30_317, %c0_318, %c0_319] : memref<4x36x4x256xf32, #tpu.memory_space<vmem>>, vector<1x1x4x256xf32>
    %505 = vector.shape_cast %504 : vector<1x1x4x256xf32> to vector<4x256xf32>
    %506 = vector.broadcast %503 : vector<1x256xf32> to vector<4x256xf32>
    %507 = arith.mulf %505, %506 : vector<4x256xf32>
    %508 = arith.addf %477, %507 : vector<4x256xf32>
    %509 = vector.extract_strided_slice %490 {offsets = [3, 0], sizes = [1, 256], strides = [1, 1]} : vector<4x256xf32> to vector<1x256xf32>
    %c1_320 = arith.constant 1 : index
    %c31_321 = arith.constant 31 : index
    %c0_322 = arith.constant 0 : index
    %c0_323 = arith.constant 0 : index
    %510 = vector.load %arg2[%c1_320, %c31_321, %c0_322, %c0_323] : memref<4x36x4x256xf32, #tpu.memory_space<vmem>>, vector<1x1x4x256xf32>
    %511 = vector.shape_cast %510 : vector<1x1x4x256xf32> to vector<4x256xf32>
    %512 = vector.broadcast %509 : vector<1x256xf32> to vector<4x256xf32>
    %513 = arith.mulf %511, %512 : vector<4x256xf32>
    %514 = arith.addf %483, %513 : vector<4x256xf32>
    %c239_i32_324 = arith.constant 239 : i32
    %515 = tpu.dynamic_rotate %277 by %c239_i32_324 dim 1 : vector<4x256xf32>, i32 -> vector<4x256xf32>
    %c8_325 = arith.constant 8 : index
    %c0_326 = arith.constant 0 : index
    %c0_327 = arith.constant 0 : index
    %516 = vector.load %arg4[%c8_325, %c0_326, %c0_327] : memref<9x4x256xf32, #tpu.memory_space<vmem>>, vector<1x4x256xf32>
    %517 = vector.shape_cast %516 : vector<1x4x256xf32> to vector<4x256xf32>
    %cst_328 = arith.constant 0.000000e+00 : f32
    %518 = vector.broadcast %cst_328 : f32 to vector<4x256xf32>
    %519 = arith.cmpf one, %517, %518 : vector<4x256xf32>
    %cst_329 = arith.constant 0.000000e+00 : f32
    %520 = vector.broadcast %cst_329 : f32 to vector<4x256xf32>
    %521 = arith.select %519, %515, %520 : vector<4x256xi1>, vector<4x256xf32>
    %522 = vector.extract_strided_slice %521 {offsets = [0, 0], sizes = [1, 256], strides = [1, 1]} : vector<4x256xf32> to vector<1x256xf32>
    %c1_330 = arith.constant 1 : index
    %c32_331 = arith.constant 32 : index
    %c0_332 = arith.constant 0 : index
    %c0_333 = arith.constant 0 : index
    %523 = vector.load %arg2[%c1_330, %c32_331, %c0_332, %c0_333] : memref<4x36x4x256xf32, #tpu.memory_space<vmem>>, vector<1x1x4x256xf32>
    %524 = vector.shape_cast %523 : vector<1x1x4x256xf32> to vector<4x256xf32>
    %525 = vector.broadcast %522 : vector<1x256xf32> to vector<4x256xf32>
    %526 = arith.mulf %524, %525 : vector<4x256xf32>
    %527 = arith.addf %496, %526 : vector<4x256xf32>
    %528 = vector.extract_strided_slice %521 {offsets = [1, 0], sizes = [1, 256], strides = [1, 1]} : vector<4x256xf32> to vector<1x256xf32>
    %c1_334 = arith.constant 1 : index
    %c33_335 = arith.constant 33 : index
    %c0_336 = arith.constant 0 : index
    %c0_337 = arith.constant 0 : index
    %529 = vector.load %arg2[%c1_334, %c33_335, %c0_336, %c0_337] : memref<4x36x4x256xf32, #tpu.memory_space<vmem>>, vector<1x1x4x256xf32>
    %530 = vector.shape_cast %529 : vector<1x1x4x256xf32> to vector<4x256xf32>
    %531 = vector.broadcast %528 : vector<1x256xf32> to vector<4x256xf32>
    %532 = arith.mulf %530, %531 : vector<4x256xf32>
    %533 = arith.addf %502, %532 : vector<4x256xf32>
    %534 = vector.extract_strided_slice %521 {offsets = [2, 0], sizes = [1, 256], strides = [1, 1]} : vector<4x256xf32> to vector<1x256xf32>
    %c1_338 = arith.constant 1 : index
    %c34_339 = arith.constant 34 : index
    %c0_340 = arith.constant 0 : index
    %c0_341 = arith.constant 0 : index
    %535 = vector.load %arg2[%c1_338, %c34_339, %c0_340, %c0_341] : memref<4x36x4x256xf32, #tpu.memory_space<vmem>>, vector<1x1x4x256xf32>
    %536 = vector.shape_cast %535 : vector<1x1x4x256xf32> to vector<4x256xf32>
    %537 = vector.broadcast %534 : vector<1x256xf32> to vector<4x256xf32>
    %538 = arith.mulf %536, %537 : vector<4x256xf32>
    %539 = arith.addf %508, %538 : vector<4x256xf32>
    %540 = vector.extract_strided_slice %521 {offsets = [3, 0], sizes = [1, 256], strides = [1, 1]} : vector<4x256xf32> to vector<1x256xf32>
    %c1_342 = arith.constant 1 : index
    %c35_343 = arith.constant 35 : index
    %c0_344 = arith.constant 0 : index
    %c0_345 = arith.constant 0 : index
    %541 = vector.load %arg2[%c1_342, %c35_343, %c0_344, %c0_345] : memref<4x36x4x256xf32, #tpu.memory_space<vmem>>, vector<1x1x4x256xf32>
    %542 = vector.shape_cast %541 : vector<1x1x4x256xf32> to vector<4x256xf32>
    %543 = vector.broadcast %540 : vector<1x256xf32> to vector<4x256xf32>
    %544 = arith.mulf %542, %543 : vector<4x256xf32>
    %545 = arith.addf %514, %544 : vector<4x256xf32>
    %c1_346 = arith.constant 1 : index
    %c0_347 = arith.constant 0 : index
    %c0_348 = arith.constant 0 : index
    %546 = vector.load %arg3[%c1_346, %c0_347, %c0_348] : memref<4x4x256xf32, #tpu.memory_space<vmem>>, vector<1x4x256xf32>
    %547 = vector.shape_cast %546 : vector<1x4x256xf32> to vector<4x256xf32>
    %548 = arith.addf %547, %527 : vector<4x256xf32>
    %549 = arith.addf %548, %533 : vector<4x256xf32>
    %550 = arith.addf %549, %539 : vector<4x256xf32>
    %551 = arith.addf %550, %545 : vector<4x256xf32>
    %552 = arith.addf %551, %1 : vector<4x256xf32>
    %c17_i32_349 = arith.constant 17 : i32
    %553 = tpu.dynamic_rotate %552 by %c17_i32_349 dim 1 : vector<4x256xf32>, i32 -> vector<4x256xf32>
    %c0_350 = arith.constant 0 : index
    %c0_351 = arith.constant 0 : index
    %c0_352 = arith.constant 0 : index
    %554 = vector.load %arg4[%c0_350, %c0_351, %c0_352] : memref<9x4x256xf32, #tpu.memory_space<vmem>>, vector<1x4x256xf32>
    %555 = vector.shape_cast %554 : vector<1x4x256xf32> to vector<4x256xf32>
    %cst_353 = arith.constant 0.000000e+00 : f32
    %556 = vector.broadcast %cst_353 : f32 to vector<4x256xf32>
    %557 = arith.cmpf one, %555, %556 : vector<4x256xf32>
    %cst_354 = arith.constant 0.000000e+00 : f32
    %558 = vector.broadcast %cst_354 : f32 to vector<4x256xf32>
    %559 = arith.select %557, %553, %558 : vector<4x256xi1>, vector<4x256xf32>
    %560 = vector.extract_strided_slice %559 {offsets = [0, 0], sizes = [1, 256], strides = [1, 1]} : vector<4x256xf32> to vector<1x256xf32>
    %c2_355 = arith.constant 2 : index
    %c0_356 = arith.constant 0 : index
    %c0_357 = arith.constant 0 : index
    %c0_358 = arith.constant 0 : index
    %561 = vector.load %arg2[%c2_355, %c0_356, %c0_357, %c0_358] : memref<4x36x4x256xf32, #tpu.memory_space<vmem>>, vector<1x1x4x256xf32>
    %562 = vector.shape_cast %561 : vector<1x1x4x256xf32> to vector<4x256xf32>
    %563 = vector.broadcast %560 : vector<1x256xf32> to vector<4x256xf32>
    %564 = arith.mulf %562, %563 : vector<4x256xf32>
    %565 = vector.extract_strided_slice %559 {offsets = [1, 0], sizes = [1, 256], strides = [1, 1]} : vector<4x256xf32> to vector<1x256xf32>
    %c2_359 = arith.constant 2 : index
    %c1_360 = arith.constant 1 : index
    %c0_361 = arith.constant 0 : index
    %c0_362 = arith.constant 0 : index
    %566 = vector.load %arg2[%c2_359, %c1_360, %c0_361, %c0_362] : memref<4x36x4x256xf32, #tpu.memory_space<vmem>>, vector<1x1x4x256xf32>
    %567 = vector.shape_cast %566 : vector<1x1x4x256xf32> to vector<4x256xf32>
    %568 = vector.broadcast %565 : vector<1x256xf32> to vector<4x256xf32>
    %569 = arith.mulf %567, %568 : vector<4x256xf32>
    %570 = vector.extract_strided_slice %559 {offsets = [2, 0], sizes = [1, 256], strides = [1, 1]} : vector<4x256xf32> to vector<1x256xf32>
    %c2_363 = arith.constant 2 : index
    %c2_364 = arith.constant 2 : index
    %c0_365 = arith.constant 0 : index
    %c0_366 = arith.constant 0 : index
    %571 = vector.load %arg2[%c2_363, %c2_364, %c0_365, %c0_366] : memref<4x36x4x256xf32, #tpu.memory_space<vmem>>, vector<1x1x4x256xf32>
    %572 = vector.shape_cast %571 : vector<1x1x4x256xf32> to vector<4x256xf32>
    %573 = vector.broadcast %570 : vector<1x256xf32> to vector<4x256xf32>
    %574 = arith.mulf %572, %573 : vector<4x256xf32>
    %575 = vector.extract_strided_slice %559 {offsets = [3, 0], sizes = [1, 256], strides = [1, 1]} : vector<4x256xf32> to vector<1x256xf32>
    %c2_367 = arith.constant 2 : index
    %c3_368 = arith.constant 3 : index
    %c0_369 = arith.constant 0 : index
    %c0_370 = arith.constant 0 : index
    %576 = vector.load %arg2[%c2_367, %c3_368, %c0_369, %c0_370] : memref<4x36x4x256xf32, #tpu.memory_space<vmem>>, vector<1x1x4x256xf32>
    %577 = vector.shape_cast %576 : vector<1x1x4x256xf32> to vector<4x256xf32>
    %578 = vector.broadcast %575 : vector<1x256xf32> to vector<4x256xf32>
    %579 = arith.mulf %577, %578 : vector<4x256xf32>
    %c16_i32_371 = arith.constant 16 : i32
    %580 = tpu.dynamic_rotate %552 by %c16_i32_371 dim 1 : vector<4x256xf32>, i32 -> vector<4x256xf32>
    %c1_372 = arith.constant 1 : index
    %c0_373 = arith.constant 0 : index
    %c0_374 = arith.constant 0 : index
    %581 = vector.load %arg4[%c1_372, %c0_373, %c0_374] : memref<9x4x256xf32, #tpu.memory_space<vmem>>, vector<1x4x256xf32>
    %582 = vector.shape_cast %581 : vector<1x4x256xf32> to vector<4x256xf32>
    %cst_375 = arith.constant 0.000000e+00 : f32
    %583 = vector.broadcast %cst_375 : f32 to vector<4x256xf32>
    %584 = arith.cmpf one, %582, %583 : vector<4x256xf32>
    %cst_376 = arith.constant 0.000000e+00 : f32
    %585 = vector.broadcast %cst_376 : f32 to vector<4x256xf32>
    %586 = arith.select %584, %580, %585 : vector<4x256xi1>, vector<4x256xf32>
    %587 = vector.extract_strided_slice %586 {offsets = [0, 0], sizes = [1, 256], strides = [1, 1]} : vector<4x256xf32> to vector<1x256xf32>
    %c2_377 = arith.constant 2 : index
    %c4_378 = arith.constant 4 : index
    %c0_379 = arith.constant 0 : index
    %c0_380 = arith.constant 0 : index
    %588 = vector.load %arg2[%c2_377, %c4_378, %c0_379, %c0_380] : memref<4x36x4x256xf32, #tpu.memory_space<vmem>>, vector<1x1x4x256xf32>
    %589 = vector.shape_cast %588 : vector<1x1x4x256xf32> to vector<4x256xf32>
    %590 = vector.broadcast %587 : vector<1x256xf32> to vector<4x256xf32>
    %591 = arith.mulf %589, %590 : vector<4x256xf32>
    %592 = arith.addf %564, %591 : vector<4x256xf32>
    %593 = vector.extract_strided_slice %586 {offsets = [1, 0], sizes = [1, 256], strides = [1, 1]} : vector<4x256xf32> to vector<1x256xf32>
    %c2_381 = arith.constant 2 : index
    %c5_382 = arith.constant 5 : index
    %c0_383 = arith.constant 0 : index
    %c0_384 = arith.constant 0 : index
    %594 = vector.load %arg2[%c2_381, %c5_382, %c0_383, %c0_384] : memref<4x36x4x256xf32, #tpu.memory_space<vmem>>, vector<1x1x4x256xf32>
    %595 = vector.shape_cast %594 : vector<1x1x4x256xf32> to vector<4x256xf32>
    %596 = vector.broadcast %593 : vector<1x256xf32> to vector<4x256xf32>
    %597 = arith.mulf %595, %596 : vector<4x256xf32>
    %598 = arith.addf %569, %597 : vector<4x256xf32>
    %599 = vector.extract_strided_slice %586 {offsets = [2, 0], sizes = [1, 256], strides = [1, 1]} : vector<4x256xf32> to vector<1x256xf32>
    %c2_385 = arith.constant 2 : index
    %c6_386 = arith.constant 6 : index
    %c0_387 = arith.constant 0 : index
    %c0_388 = arith.constant 0 : index
    %600 = vector.load %arg2[%c2_385, %c6_386, %c0_387, %c0_388] : memref<4x36x4x256xf32, #tpu.memory_space<vmem>>, vector<1x1x4x256xf32>
    %601 = vector.shape_cast %600 : vector<1x1x4x256xf32> to vector<4x256xf32>
    %602 = vector.broadcast %599 : vector<1x256xf32> to vector<4x256xf32>
    %603 = arith.mulf %601, %602 : vector<4x256xf32>
    %604 = arith.addf %574, %603 : vector<4x256xf32>
    %605 = vector.extract_strided_slice %586 {offsets = [3, 0], sizes = [1, 256], strides = [1, 1]} : vector<4x256xf32> to vector<1x256xf32>
    %c2_389 = arith.constant 2 : index
    %c7_390 = arith.constant 7 : index
    %c0_391 = arith.constant 0 : index
    %c0_392 = arith.constant 0 : index
    %606 = vector.load %arg2[%c2_389, %c7_390, %c0_391, %c0_392] : memref<4x36x4x256xf32, #tpu.memory_space<vmem>>, vector<1x1x4x256xf32>
    %607 = vector.shape_cast %606 : vector<1x1x4x256xf32> to vector<4x256xf32>
    %608 = vector.broadcast %605 : vector<1x256xf32> to vector<4x256xf32>
    %609 = arith.mulf %607, %608 : vector<4x256xf32>
    %610 = arith.addf %579, %609 : vector<4x256xf32>
    %c15_i32_393 = arith.constant 15 : i32
    %611 = tpu.dynamic_rotate %552 by %c15_i32_393 dim 1 : vector<4x256xf32>, i32 -> vector<4x256xf32>
    %c2_394 = arith.constant 2 : index
    %c0_395 = arith.constant 0 : index
    %c0_396 = arith.constant 0 : index
    %612 = vector.load %arg4[%c2_394, %c0_395, %c0_396] : memref<9x4x256xf32, #tpu.memory_space<vmem>>, vector<1x4x256xf32>
    %613 = vector.shape_cast %612 : vector<1x4x256xf32> to vector<4x256xf32>
    %cst_397 = arith.constant 0.000000e+00 : f32
    %614 = vector.broadcast %cst_397 : f32 to vector<4x256xf32>
    %615 = arith.cmpf one, %613, %614 : vector<4x256xf32>
    %cst_398 = arith.constant 0.000000e+00 : f32
    %616 = vector.broadcast %cst_398 : f32 to vector<4x256xf32>
    %617 = arith.select %615, %611, %616 : vector<4x256xi1>, vector<4x256xf32>
    %618 = vector.extract_strided_slice %617 {offsets = [0, 0], sizes = [1, 256], strides = [1, 1]} : vector<4x256xf32> to vector<1x256xf32>
    %c2_399 = arith.constant 2 : index
    %c8_400 = arith.constant 8 : index
    %c0_401 = arith.constant 0 : index
    %c0_402 = arith.constant 0 : index
    %619 = vector.load %arg2[%c2_399, %c8_400, %c0_401, %c0_402] : memref<4x36x4x256xf32, #tpu.memory_space<vmem>>, vector<1x1x4x256xf32>
    %620 = vector.shape_cast %619 : vector<1x1x4x256xf32> to vector<4x256xf32>
    %621 = vector.broadcast %618 : vector<1x256xf32> to vector<4x256xf32>
    %622 = arith.mulf %620, %621 : vector<4x256xf32>
    %623 = arith.addf %592, %622 : vector<4x256xf32>
    %624 = vector.extract_strided_slice %617 {offsets = [1, 0], sizes = [1, 256], strides = [1, 1]} : vector<4x256xf32> to vector<1x256xf32>
    %c2_403 = arith.constant 2 : index
    %c9_404 = arith.constant 9 : index
    %c0_405 = arith.constant 0 : index
    %c0_406 = arith.constant 0 : index
    %625 = vector.load %arg2[%c2_403, %c9_404, %c0_405, %c0_406] : memref<4x36x4x256xf32, #tpu.memory_space<vmem>>, vector<1x1x4x256xf32>
    %626 = vector.shape_cast %625 : vector<1x1x4x256xf32> to vector<4x256xf32>
    %627 = vector.broadcast %624 : vector<1x256xf32> to vector<4x256xf32>
    %628 = arith.mulf %626, %627 : vector<4x256xf32>
    %629 = arith.addf %598, %628 : vector<4x256xf32>
    %630 = vector.extract_strided_slice %617 {offsets = [2, 0], sizes = [1, 256], strides = [1, 1]} : vector<4x256xf32> to vector<1x256xf32>
    %c2_407 = arith.constant 2 : index
    %c10_408 = arith.constant 10 : index
    %c0_409 = arith.constant 0 : index
    %c0_410 = arith.constant 0 : index
    %631 = vector.load %arg2[%c2_407, %c10_408, %c0_409, %c0_410] : memref<4x36x4x256xf32, #tpu.memory_space<vmem>>, vector<1x1x4x256xf32>
    %632 = vector.shape_cast %631 : vector<1x1x4x256xf32> to vector<4x256xf32>
    %633 = vector.broadcast %630 : vector<1x256xf32> to vector<4x256xf32>
    %634 = arith.mulf %632, %633 : vector<4x256xf32>
    %635 = arith.addf %604, %634 : vector<4x256xf32>
    %636 = vector.extract_strided_slice %617 {offsets = [3, 0], sizes = [1, 256], strides = [1, 1]} : vector<4x256xf32> to vector<1x256xf32>
    %c2_411 = arith.constant 2 : index
    %c11_412 = arith.constant 11 : index
    %c0_413 = arith.constant 0 : index
    %c0_414 = arith.constant 0 : index
    %637 = vector.load %arg2[%c2_411, %c11_412, %c0_413, %c0_414] : memref<4x36x4x256xf32, #tpu.memory_space<vmem>>, vector<1x1x4x256xf32>
    %638 = vector.shape_cast %637 : vector<1x1x4x256xf32> to vector<4x256xf32>
    %639 = vector.broadcast %636 : vector<1x256xf32> to vector<4x256xf32>
    %640 = arith.mulf %638, %639 : vector<4x256xf32>
    %641 = arith.addf %610, %640 : vector<4x256xf32>
    %c1_i32_415 = arith.constant 1 : i32
    %642 = tpu.dynamic_rotate %552 by %c1_i32_415 dim 1 : vector<4x256xf32>, i32 -> vector<4x256xf32>
    %c3_416 = arith.constant 3 : index
    %c0_417 = arith.constant 0 : index
    %c0_418 = arith.constant 0 : index
    %643 = vector.load %arg4[%c3_416, %c0_417, %c0_418] : memref<9x4x256xf32, #tpu.memory_space<vmem>>, vector<1x4x256xf32>
    %644 = vector.shape_cast %643 : vector<1x4x256xf32> to vector<4x256xf32>
    %cst_419 = arith.constant 0.000000e+00 : f32
    %645 = vector.broadcast %cst_419 : f32 to vector<4x256xf32>
    %646 = arith.cmpf one, %644, %645 : vector<4x256xf32>
    %cst_420 = arith.constant 0.000000e+00 : f32
    %647 = vector.broadcast %cst_420 : f32 to vector<4x256xf32>
    %648 = arith.select %646, %642, %647 : vector<4x256xi1>, vector<4x256xf32>
    %649 = vector.extract_strided_slice %648 {offsets = [0, 0], sizes = [1, 256], strides = [1, 1]} : vector<4x256xf32> to vector<1x256xf32>
    %c2_421 = arith.constant 2 : index
    %c12_422 = arith.constant 12 : index
    %c0_423 = arith.constant 0 : index
    %c0_424 = arith.constant 0 : index
    %650 = vector.load %arg2[%c2_421, %c12_422, %c0_423, %c0_424] : memref<4x36x4x256xf32, #tpu.memory_space<vmem>>, vector<1x1x4x256xf32>
    %651 = vector.shape_cast %650 : vector<1x1x4x256xf32> to vector<4x256xf32>
    %652 = vector.broadcast %649 : vector<1x256xf32> to vector<4x256xf32>
    %653 = arith.mulf %651, %652 : vector<4x256xf32>
    %654 = arith.addf %623, %653 : vector<4x256xf32>
    %655 = vector.extract_strided_slice %648 {offsets = [1, 0], sizes = [1, 256], strides = [1, 1]} : vector<4x256xf32> to vector<1x256xf32>
    %c2_425 = arith.constant 2 : index
    %c13_426 = arith.constant 13 : index
    %c0_427 = arith.constant 0 : index
    %c0_428 = arith.constant 0 : index
    %656 = vector.load %arg2[%c2_425, %c13_426, %c0_427, %c0_428] : memref<4x36x4x256xf32, #tpu.memory_space<vmem>>, vector<1x1x4x256xf32>
    %657 = vector.shape_cast %656 : vector<1x1x4x256xf32> to vector<4x256xf32>
    %658 = vector.broadcast %655 : vector<1x256xf32> to vector<4x256xf32>
    %659 = arith.mulf %657, %658 : vector<4x256xf32>
    %660 = arith.addf %629, %659 : vector<4x256xf32>
    %661 = vector.extract_strided_slice %648 {offsets = [2, 0], sizes = [1, 256], strides = [1, 1]} : vector<4x256xf32> to vector<1x256xf32>
    %c2_429 = arith.constant 2 : index
    %c14_430 = arith.constant 14 : index
    %c0_431 = arith.constant 0 : index
    %c0_432 = arith.constant 0 : index
    %662 = vector.load %arg2[%c2_429, %c14_430, %c0_431, %c0_432] : memref<4x36x4x256xf32, #tpu.memory_space<vmem>>, vector<1x1x4x256xf32>
    %663 = vector.shape_cast %662 : vector<1x1x4x256xf32> to vector<4x256xf32>
    %664 = vector.broadcast %661 : vector<1x256xf32> to vector<4x256xf32>
    %665 = arith.mulf %663, %664 : vector<4x256xf32>
    %666 = arith.addf %635, %665 : vector<4x256xf32>
    %667 = vector.extract_strided_slice %648 {offsets = [3, 0], sizes = [1, 256], strides = [1, 1]} : vector<4x256xf32> to vector<1x256xf32>
    %c2_433 = arith.constant 2 : index
    %c15_434 = arith.constant 15 : index
    %c0_435 = arith.constant 0 : index
    %c0_436 = arith.constant 0 : index
    %668 = vector.load %arg2[%c2_433, %c15_434, %c0_435, %c0_436] : memref<4x36x4x256xf32, #tpu.memory_space<vmem>>, vector<1x1x4x256xf32>
    %669 = vector.shape_cast %668 : vector<1x1x4x256xf32> to vector<4x256xf32>
    %670 = vector.broadcast %667 : vector<1x256xf32> to vector<4x256xf32>
    %671 = arith.mulf %669, %670 : vector<4x256xf32>
    %672 = arith.addf %641, %671 : vector<4x256xf32>
    %673 = vector.extract_strided_slice %552 {offsets = [0, 0], sizes = [1, 256], strides = [1, 1]} : vector<4x256xf32> to vector<1x256xf32>
    %c2_437 = arith.constant 2 : index
    %c16_438 = arith.constant 16 : index
    %c0_439 = arith.constant 0 : index
    %c0_440 = arith.constant 0 : index
    %674 = vector.load %arg2[%c2_437, %c16_438, %c0_439, %c0_440] : memref<4x36x4x256xf32, #tpu.memory_space<vmem>>, vector<1x1x4x256xf32>
    %675 = vector.shape_cast %674 : vector<1x1x4x256xf32> to vector<4x256xf32>
    %676 = vector.broadcast %673 : vector<1x256xf32> to vector<4x256xf32>
    %677 = arith.mulf %675, %676 : vector<4x256xf32>
    %678 = arith.addf %654, %677 : vector<4x256xf32>
    %679 = vector.extract_strided_slice %552 {offsets = [1, 0], sizes = [1, 256], strides = [1, 1]} : vector<4x256xf32> to vector<1x256xf32>
    %c2_441 = arith.constant 2 : index
    %c17_442 = arith.constant 17 : index
    %c0_443 = arith.constant 0 : index
    %c0_444 = arith.constant 0 : index
    %680 = vector.load %arg2[%c2_441, %c17_442, %c0_443, %c0_444] : memref<4x36x4x256xf32, #tpu.memory_space<vmem>>, vector<1x1x4x256xf32>
    %681 = vector.shape_cast %680 : vector<1x1x4x256xf32> to vector<4x256xf32>
    %682 = vector.broadcast %679 : vector<1x256xf32> to vector<4x256xf32>
    %683 = arith.mulf %681, %682 : vector<4x256xf32>
    %684 = arith.addf %660, %683 : vector<4x256xf32>
    %685 = vector.extract_strided_slice %552 {offsets = [2, 0], sizes = [1, 256], strides = [1, 1]} : vector<4x256xf32> to vector<1x256xf32>
    %c2_445 = arith.constant 2 : index
    %c18_446 = arith.constant 18 : index
    %c0_447 = arith.constant 0 : index
    %c0_448 = arith.constant 0 : index
    %686 = vector.load %arg2[%c2_445, %c18_446, %c0_447, %c0_448] : memref<4x36x4x256xf32, #tpu.memory_space<vmem>>, vector<1x1x4x256xf32>
    %687 = vector.shape_cast %686 : vector<1x1x4x256xf32> to vector<4x256xf32>
    %688 = vector.broadcast %685 : vector<1x256xf32> to vector<4x256xf32>
    %689 = arith.mulf %687, %688 : vector<4x256xf32>
    %690 = arith.addf %666, %689 : vector<4x256xf32>
    %691 = vector.extract_strided_slice %552 {offsets = [3, 0], sizes = [1, 256], strides = [1, 1]} : vector<4x256xf32> to vector<1x256xf32>
    %c2_449 = arith.constant 2 : index
    %c19_450 = arith.constant 19 : index
    %c0_451 = arith.constant 0 : index
    %c0_452 = arith.constant 0 : index
    %692 = vector.load %arg2[%c2_449, %c19_450, %c0_451, %c0_452] : memref<4x36x4x256xf32, #tpu.memory_space<vmem>>, vector<1x1x4x256xf32>
    %693 = vector.shape_cast %692 : vector<1x1x4x256xf32> to vector<4x256xf32>
    %694 = vector.broadcast %691 : vector<1x256xf32> to vector<4x256xf32>
    %695 = arith.mulf %693, %694 : vector<4x256xf32>
    %696 = arith.addf %672, %695 : vector<4x256xf32>
    %c255_i32_453 = arith.constant 255 : i32
    %697 = tpu.dynamic_rotate %552 by %c255_i32_453 dim 1 : vector<4x256xf32>, i32 -> vector<4x256xf32>
    %c5_454 = arith.constant 5 : index
    %c0_455 = arith.constant 0 : index
    %c0_456 = arith.constant 0 : index
    %698 = vector.load %arg4[%c5_454, %c0_455, %c0_456] : memref<9x4x256xf32, #tpu.memory_space<vmem>>, vector<1x4x256xf32>
    %699 = vector.shape_cast %698 : vector<1x4x256xf32> to vector<4x256xf32>
    %cst_457 = arith.constant 0.000000e+00 : f32
    %700 = vector.broadcast %cst_457 : f32 to vector<4x256xf32>
    %701 = arith.cmpf one, %699, %700 : vector<4x256xf32>
    %cst_458 = arith.constant 0.000000e+00 : f32
    %702 = vector.broadcast %cst_458 : f32 to vector<4x256xf32>
    %703 = arith.select %701, %697, %702 : vector<4x256xi1>, vector<4x256xf32>
    %704 = vector.extract_strided_slice %703 {offsets = [0, 0], sizes = [1, 256], strides = [1, 1]} : vector<4x256xf32> to vector<1x256xf32>
    %c2_459 = arith.constant 2 : index
    %c20_460 = arith.constant 20 : index
    %c0_461 = arith.constant 0 : index
    %c0_462 = arith.constant 0 : index
    %705 = vector.load %arg2[%c2_459, %c20_460, %c0_461, %c0_462] : memref<4x36x4x256xf32, #tpu.memory_space<vmem>>, vector<1x1x4x256xf32>
    %706 = vector.shape_cast %705 : vector<1x1x4x256xf32> to vector<4x256xf32>
    %707 = vector.broadcast %704 : vector<1x256xf32> to vector<4x256xf32>
    %708 = arith.mulf %706, %707 : vector<4x256xf32>
    %709 = arith.addf %678, %708 : vector<4x256xf32>
    %710 = vector.extract_strided_slice %703 {offsets = [1, 0], sizes = [1, 256], strides = [1, 1]} : vector<4x256xf32> to vector<1x256xf32>
    %c2_463 = arith.constant 2 : index
    %c21_464 = arith.constant 21 : index
    %c0_465 = arith.constant 0 : index
    %c0_466 = arith.constant 0 : index
    %711 = vector.load %arg2[%c2_463, %c21_464, %c0_465, %c0_466] : memref<4x36x4x256xf32, #tpu.memory_space<vmem>>, vector<1x1x4x256xf32>
    %712 = vector.shape_cast %711 : vector<1x1x4x256xf32> to vector<4x256xf32>
    %713 = vector.broadcast %710 : vector<1x256xf32> to vector<4x256xf32>
    %714 = arith.mulf %712, %713 : vector<4x256xf32>
    %715 = arith.addf %684, %714 : vector<4x256xf32>
    %716 = vector.extract_strided_slice %703 {offsets = [2, 0], sizes = [1, 256], strides = [1, 1]} : vector<4x256xf32> to vector<1x256xf32>
    %c2_467 = arith.constant 2 : index
    %c22_468 = arith.constant 22 : index
    %c0_469 = arith.constant 0 : index
    %c0_470 = arith.constant 0 : index
    %717 = vector.load %arg2[%c2_467, %c22_468, %c0_469, %c0_470] : memref<4x36x4x256xf32, #tpu.memory_space<vmem>>, vector<1x1x4x256xf32>
    %718 = vector.shape_cast %717 : vector<1x1x4x256xf32> to vector<4x256xf32>
    %719 = vector.broadcast %716 : vector<1x256xf32> to vector<4x256xf32>
    %720 = arith.mulf %718, %719 : vector<4x256xf32>
    %721 = arith.addf %690, %720 : vector<4x256xf32>
    %722 = vector.extract_strided_slice %703 {offsets = [3, 0], sizes = [1, 256], strides = [1, 1]} : vector<4x256xf32> to vector<1x256xf32>
    %c2_471 = arith.constant 2 : index
    %c23_472 = arith.constant 23 : index
    %c0_473 = arith.constant 0 : index
    %c0_474 = arith.constant 0 : index
    %723 = vector.load %arg2[%c2_471, %c23_472, %c0_473, %c0_474] : memref<4x36x4x256xf32, #tpu.memory_space<vmem>>, vector<1x1x4x256xf32>
    %724 = vector.shape_cast %723 : vector<1x1x4x256xf32> to vector<4x256xf32>
    %725 = vector.broadcast %722 : vector<1x256xf32> to vector<4x256xf32>
    %726 = arith.mulf %724, %725 : vector<4x256xf32>
    %727 = arith.addf %696, %726 : vector<4x256xf32>
    %c241_i32_475 = arith.constant 241 : i32
    %728 = tpu.dynamic_rotate %552 by %c241_i32_475 dim 1 : vector<4x256xf32>, i32 -> vector<4x256xf32>
    %c6_476 = arith.constant 6 : index
    %c0_477 = arith.constant 0 : index
    %c0_478 = arith.constant 0 : index
    %729 = vector.load %arg4[%c6_476, %c0_477, %c0_478] : memref<9x4x256xf32, #tpu.memory_space<vmem>>, vector<1x4x256xf32>
    %730 = vector.shape_cast %729 : vector<1x4x256xf32> to vector<4x256xf32>
    %cst_479 = arith.constant 0.000000e+00 : f32
    %731 = vector.broadcast %cst_479 : f32 to vector<4x256xf32>
    %732 = arith.cmpf one, %730, %731 : vector<4x256xf32>
    %cst_480 = arith.constant 0.000000e+00 : f32
    %733 = vector.broadcast %cst_480 : f32 to vector<4x256xf32>
    %734 = arith.select %732, %728, %733 : vector<4x256xi1>, vector<4x256xf32>
    %735 = vector.extract_strided_slice %734 {offsets = [0, 0], sizes = [1, 256], strides = [1, 1]} : vector<4x256xf32> to vector<1x256xf32>
    %c2_481 = arith.constant 2 : index
    %c24_482 = arith.constant 24 : index
    %c0_483 = arith.constant 0 : index
    %c0_484 = arith.constant 0 : index
    %736 = vector.load %arg2[%c2_481, %c24_482, %c0_483, %c0_484] : memref<4x36x4x256xf32, #tpu.memory_space<vmem>>, vector<1x1x4x256xf32>
    %737 = vector.shape_cast %736 : vector<1x1x4x256xf32> to vector<4x256xf32>
    %738 = vector.broadcast %735 : vector<1x256xf32> to vector<4x256xf32>
    %739 = arith.mulf %737, %738 : vector<4x256xf32>
    %740 = arith.addf %709, %739 : vector<4x256xf32>
    %741 = vector.extract_strided_slice %734 {offsets = [1, 0], sizes = [1, 256], strides = [1, 1]} : vector<4x256xf32> to vector<1x256xf32>
    %c2_485 = arith.constant 2 : index
    %c25_486 = arith.constant 25 : index
    %c0_487 = arith.constant 0 : index
    %c0_488 = arith.constant 0 : index
    %742 = vector.load %arg2[%c2_485, %c25_486, %c0_487, %c0_488] : memref<4x36x4x256xf32, #tpu.memory_space<vmem>>, vector<1x1x4x256xf32>
    %743 = vector.shape_cast %742 : vector<1x1x4x256xf32> to vector<4x256xf32>
    %744 = vector.broadcast %741 : vector<1x256xf32> to vector<4x256xf32>
    %745 = arith.mulf %743, %744 : vector<4x256xf32>
    %746 = arith.addf %715, %745 : vector<4x256xf32>
    %747 = vector.extract_strided_slice %734 {offsets = [2, 0], sizes = [1, 256], strides = [1, 1]} : vector<4x256xf32> to vector<1x256xf32>
    %c2_489 = arith.constant 2 : index
    %c26_490 = arith.constant 26 : index
    %c0_491 = arith.constant 0 : index
    %c0_492 = arith.constant 0 : index
    %748 = vector.load %arg2[%c2_489, %c26_490, %c0_491, %c0_492] : memref<4x36x4x256xf32, #tpu.memory_space<vmem>>, vector<1x1x4x256xf32>
    %749 = vector.shape_cast %748 : vector<1x1x4x256xf32> to vector<4x256xf32>
    %750 = vector.broadcast %747 : vector<1x256xf32> to vector<4x256xf32>
    %751 = arith.mulf %749, %750 : vector<4x256xf32>
    %752 = arith.addf %721, %751 : vector<4x256xf32>
    %753 = vector.extract_strided_slice %734 {offsets = [3, 0], sizes = [1, 256], strides = [1, 1]} : vector<4x256xf32> to vector<1x256xf32>
    %c2_493 = arith.constant 2 : index
    %c27_494 = arith.constant 27 : index
    %c0_495 = arith.constant 0 : index
    %c0_496 = arith.constant 0 : index
    %754 = vector.load %arg2[%c2_493, %c27_494, %c0_495, %c0_496] : memref<4x36x4x256xf32, #tpu.memory_space<vmem>>, vector<1x1x4x256xf32>
    %755 = vector.shape_cast %754 : vector<1x1x4x256xf32> to vector<4x256xf32>
    %756 = vector.broadcast %753 : vector<1x256xf32> to vector<4x256xf32>
    %757 = arith.mulf %755, %756 : vector<4x256xf32>
    %758 = arith.addf %727, %757 : vector<4x256xf32>
    %c240_i32_497 = arith.constant 240 : i32
    %759 = tpu.dynamic_rotate %552 by %c240_i32_497 dim 1 : vector<4x256xf32>, i32 -> vector<4x256xf32>
    %c7_498 = arith.constant 7 : index
    %c0_499 = arith.constant 0 : index
    %c0_500 = arith.constant 0 : index
    %760 = vector.load %arg4[%c7_498, %c0_499, %c0_500] : memref<9x4x256xf32, #tpu.memory_space<vmem>>, vector<1x4x256xf32>
    %761 = vector.shape_cast %760 : vector<1x4x256xf32> to vector<4x256xf32>
    %cst_501 = arith.constant 0.000000e+00 : f32
    %762 = vector.broadcast %cst_501 : f32 to vector<4x256xf32>
    %763 = arith.cmpf one, %761, %762 : vector<4x256xf32>
    %cst_502 = arith.constant 0.000000e+00 : f32
    %764 = vector.broadcast %cst_502 : f32 to vector<4x256xf32>
    %765 = arith.select %763, %759, %764 : vector<4x256xi1>, vector<4x256xf32>
    %766 = vector.extract_strided_slice %765 {offsets = [0, 0], sizes = [1, 256], strides = [1, 1]} : vector<4x256xf32> to vector<1x256xf32>
    %c2_503 = arith.constant 2 : index
    %c28_504 = arith.constant 28 : index
    %c0_505 = arith.constant 0 : index
    %c0_506 = arith.constant 0 : index
    %767 = vector.load %arg2[%c2_503, %c28_504, %c0_505, %c0_506] : memref<4x36x4x256xf32, #tpu.memory_space<vmem>>, vector<1x1x4x256xf32>
    %768 = vector.shape_cast %767 : vector<1x1x4x256xf32> to vector<4x256xf32>
    %769 = vector.broadcast %766 : vector<1x256xf32> to vector<4x256xf32>
    %770 = arith.mulf %768, %769 : vector<4x256xf32>
    %771 = arith.addf %740, %770 : vector<4x256xf32>
    %772 = vector.extract_strided_slice %765 {offsets = [1, 0], sizes = [1, 256], strides = [1, 1]} : vector<4x256xf32> to vector<1x256xf32>
    %c2_507 = arith.constant 2 : index
    %c29_508 = arith.constant 29 : index
    %c0_509 = arith.constant 0 : index
    %c0_510 = arith.constant 0 : index
    %773 = vector.load %arg2[%c2_507, %c29_508, %c0_509, %c0_510] : memref<4x36x4x256xf32, #tpu.memory_space<vmem>>, vector<1x1x4x256xf32>
    %774 = vector.shape_cast %773 : vector<1x1x4x256xf32> to vector<4x256xf32>
    %775 = vector.broadcast %772 : vector<1x256xf32> to vector<4x256xf32>
    %776 = arith.mulf %774, %775 : vector<4x256xf32>
    %777 = arith.addf %746, %776 : vector<4x256xf32>
    %778 = vector.extract_strided_slice %765 {offsets = [2, 0], sizes = [1, 256], strides = [1, 1]} : vector<4x256xf32> to vector<1x256xf32>
    %c2_511 = arith.constant 2 : index
    %c30_512 = arith.constant 30 : index
    %c0_513 = arith.constant 0 : index
    %c0_514 = arith.constant 0 : index
    %779 = vector.load %arg2[%c2_511, %c30_512, %c0_513, %c0_514] : memref<4x36x4x256xf32, #tpu.memory_space<vmem>>, vector<1x1x4x256xf32>
    %780 = vector.shape_cast %779 : vector<1x1x4x256xf32> to vector<4x256xf32>
    %781 = vector.broadcast %778 : vector<1x256xf32> to vector<4x256xf32>
    %782 = arith.mulf %780, %781 : vector<4x256xf32>
    %783 = arith.addf %752, %782 : vector<4x256xf32>
    %784 = vector.extract_strided_slice %765 {offsets = [3, 0], sizes = [1, 256], strides = [1, 1]} : vector<4x256xf32> to vector<1x256xf32>
    %c2_515 = arith.constant 2 : index
    %c31_516 = arith.constant 31 : index
    %c0_517 = arith.constant 0 : index
    %c0_518 = arith.constant 0 : index
    %785 = vector.load %arg2[%c2_515, %c31_516, %c0_517, %c0_518] : memref<4x36x4x256xf32, #tpu.memory_space<vmem>>, vector<1x1x4x256xf32>
    %786 = vector.shape_cast %785 : vector<1x1x4x256xf32> to vector<4x256xf32>
    %787 = vector.broadcast %784 : vector<1x256xf32> to vector<4x256xf32>
    %788 = arith.mulf %786, %787 : vector<4x256xf32>
    %789 = arith.addf %758, %788 : vector<4x256xf32>
    %c239_i32_519 = arith.constant 239 : i32
    %790 = tpu.dynamic_rotate %552 by %c239_i32_519 dim 1 : vector<4x256xf32>, i32 -> vector<4x256xf32>
    %c8_520 = arith.constant 8 : index
    %c0_521 = arith.constant 0 : index
    %c0_522 = arith.constant 0 : index
    %791 = vector.load %arg4[%c8_520, %c0_521, %c0_522] : memref<9x4x256xf32, #tpu.memory_space<vmem>>, vector<1x4x256xf32>
    %792 = vector.shape_cast %791 : vector<1x4x256xf32> to vector<4x256xf32>
    %cst_523 = arith.constant 0.000000e+00 : f32
    %793 = vector.broadcast %cst_523 : f32 to vector<4x256xf32>
    %794 = arith.cmpf one, %792, %793 : vector<4x256xf32>
    %cst_524 = arith.constant 0.000000e+00 : f32
    %795 = vector.broadcast %cst_524 : f32 to vector<4x256xf32>
    %796 = arith.select %794, %790, %795 : vector<4x256xi1>, vector<4x256xf32>
    %797 = vector.extract_strided_slice %796 {offsets = [0, 0], sizes = [1, 256], strides = [1, 1]} : vector<4x256xf32> to vector<1x256xf32>
    %c2_525 = arith.constant 2 : index
    %c32_526 = arith.constant 32 : index
    %c0_527 = arith.constant 0 : index
    %c0_528 = arith.constant 0 : index
    %798 = vector.load %arg2[%c2_525, %c32_526, %c0_527, %c0_528] : memref<4x36x4x256xf32, #tpu.memory_space<vmem>>, vector<1x1x4x256xf32>
    %799 = vector.shape_cast %798 : vector<1x1x4x256xf32> to vector<4x256xf32>
    %800 = vector.broadcast %797 : vector<1x256xf32> to vector<4x256xf32>
    %801 = arith.mulf %799, %800 : vector<4x256xf32>
    %802 = arith.addf %771, %801 : vector<4x256xf32>
    %803 = vector.extract_strided_slice %796 {offsets = [1, 0], sizes = [1, 256], strides = [1, 1]} : vector<4x256xf32> to vector<1x256xf32>
    %c2_529 = arith.constant 2 : index
    %c33_530 = arith.constant 33 : index
    %c0_531 = arith.constant 0 : index
    %c0_532 = arith.constant 0 : index
    %804 = vector.load %arg2[%c2_529, %c33_530, %c0_531, %c0_532] : memref<4x36x4x256xf32, #tpu.memory_space<vmem>>, vector<1x1x4x256xf32>
    %805 = vector.shape_cast %804 : vector<1x1x4x256xf32> to vector<4x256xf32>
    %806 = vector.broadcast %803 : vector<1x256xf32> to vector<4x256xf32>
    %807 = arith.mulf %805, %806 : vector<4x256xf32>
    %808 = arith.addf %777, %807 : vector<4x256xf32>
    %809 = vector.extract_strided_slice %796 {offsets = [2, 0], sizes = [1, 256], strides = [1, 1]} : vector<4x256xf32> to vector<1x256xf32>
    %c2_533 = arith.constant 2 : index
    %c34_534 = arith.constant 34 : index
    %c0_535 = arith.constant 0 : index
    %c0_536 = arith.constant 0 : index
    %810 = vector.load %arg2[%c2_533, %c34_534, %c0_535, %c0_536] : memref<4x36x4x256xf32, #tpu.memory_space<vmem>>, vector<1x1x4x256xf32>
    %811 = vector.shape_cast %810 : vector<1x1x4x256xf32> to vector<4x256xf32>
    %812 = vector.broadcast %809 : vector<1x256xf32> to vector<4x256xf32>
    %813 = arith.mulf %811, %812 : vector<4x256xf32>
    %814 = arith.addf %783, %813 : vector<4x256xf32>
    %815 = vector.extract_strided_slice %796 {offsets = [3, 0], sizes = [1, 256], strides = [1, 1]} : vector<4x256xf32> to vector<1x256xf32>
    %c2_537 = arith.constant 2 : index
    %c35_538 = arith.constant 35 : index
    %c0_539 = arith.constant 0 : index
    %c0_540 = arith.constant 0 : index
    %816 = vector.load %arg2[%c2_537, %c35_538, %c0_539, %c0_540] : memref<4x36x4x256xf32, #tpu.memory_space<vmem>>, vector<1x1x4x256xf32>
    %817 = vector.shape_cast %816 : vector<1x1x4x256xf32> to vector<4x256xf32>
    %818 = vector.broadcast %815 : vector<1x256xf32> to vector<4x256xf32>
    %819 = arith.mulf %817, %818 : vector<4x256xf32>
    %820 = arith.addf %789, %819 : vector<4x256xf32>
    %c2_541 = arith.constant 2 : index
    %c0_542 = arith.constant 0 : index
    %c0_543 = arith.constant 0 : index
    %821 = vector.load %arg3[%c2_541, %c0_542, %c0_543] : memref<4x4x256xf32, #tpu.memory_space<vmem>>, vector<1x4x256xf32>
    %822 = vector.shape_cast %821 : vector<1x4x256xf32> to vector<4x256xf32>
    %823 = arith.addf %822, %802 : vector<4x256xf32>
    %824 = arith.addf %823, %808 : vector<4x256xf32>
    %825 = arith.addf %824, %814 : vector<4x256xf32>
    %826 = arith.addf %825, %820 : vector<4x256xf32>
    %cst_544 = arith.constant 0.000000e+00 : f32
    %827 = vector.broadcast %cst_544 : f32 to vector<4x256xf32>
    %828 = arith.maximumf %826, %827 : vector<4x256xf32>
    %c17_i32_545 = arith.constant 17 : i32
    %829 = tpu.dynamic_rotate %828 by %c17_i32_545 dim 1 : vector<4x256xf32>, i32 -> vector<4x256xf32>
    %c0_546 = arith.constant 0 : index
    %c0_547 = arith.constant 0 : index
    %c0_548 = arith.constant 0 : index
    %830 = vector.load %arg4[%c0_546, %c0_547, %c0_548] : memref<9x4x256xf32, #tpu.memory_space<vmem>>, vector<1x4x256xf32>
    %831 = vector.shape_cast %830 : vector<1x4x256xf32> to vector<4x256xf32>
    %cst_549 = arith.constant 0.000000e+00 : f32
    %832 = vector.broadcast %cst_549 : f32 to vector<4x256xf32>
    %833 = arith.cmpf one, %831, %832 : vector<4x256xf32>
    %cst_550 = arith.constant 0.000000e+00 : f32
    %834 = vector.broadcast %cst_550 : f32 to vector<4x256xf32>
    %835 = arith.select %833, %829, %834 : vector<4x256xi1>, vector<4x256xf32>
    %836 = vector.extract_strided_slice %835 {offsets = [0, 0], sizes = [1, 256], strides = [1, 1]} : vector<4x256xf32> to vector<1x256xf32>
    %c3_551 = arith.constant 3 : index
    %c0_552 = arith.constant 0 : index
    %c0_553 = arith.constant 0 : index
    %c0_554 = arith.constant 0 : index
    %837 = vector.load %arg2[%c3_551, %c0_552, %c0_553, %c0_554] : memref<4x36x4x256xf32, #tpu.memory_space<vmem>>, vector<1x1x4x256xf32>
    %838 = vector.shape_cast %837 : vector<1x1x4x256xf32> to vector<4x256xf32>
    %839 = vector.broadcast %836 : vector<1x256xf32> to vector<4x256xf32>
    %840 = arith.mulf %838, %839 : vector<4x256xf32>
    %841 = vector.extract_strided_slice %835 {offsets = [1, 0], sizes = [1, 256], strides = [1, 1]} : vector<4x256xf32> to vector<1x256xf32>
    %c3_555 = arith.constant 3 : index
    %c1_556 = arith.constant 1 : index
    %c0_557 = arith.constant 0 : index
    %c0_558 = arith.constant 0 : index
    %842 = vector.load %arg2[%c3_555, %c1_556, %c0_557, %c0_558] : memref<4x36x4x256xf32, #tpu.memory_space<vmem>>, vector<1x1x4x256xf32>
    %843 = vector.shape_cast %842 : vector<1x1x4x256xf32> to vector<4x256xf32>
    %844 = vector.broadcast %841 : vector<1x256xf32> to vector<4x256xf32>
    %845 = arith.mulf %843, %844 : vector<4x256xf32>
    %846 = vector.extract_strided_slice %835 {offsets = [2, 0], sizes = [1, 256], strides = [1, 1]} : vector<4x256xf32> to vector<1x256xf32>
    %c3_559 = arith.constant 3 : index
    %c2_560 = arith.constant 2 : index
    %c0_561 = arith.constant 0 : index
    %c0_562 = arith.constant 0 : index
    %847 = vector.load %arg2[%c3_559, %c2_560, %c0_561, %c0_562] : memref<4x36x4x256xf32, #tpu.memory_space<vmem>>, vector<1x1x4x256xf32>
    %848 = vector.shape_cast %847 : vector<1x1x4x256xf32> to vector<4x256xf32>
    %849 = vector.broadcast %846 : vector<1x256xf32> to vector<4x256xf32>
    %850 = arith.mulf %848, %849 : vector<4x256xf32>
    %851 = vector.extract_strided_slice %835 {offsets = [3, 0], sizes = [1, 256], strides = [1, 1]} : vector<4x256xf32> to vector<1x256xf32>
    %c3_563 = arith.constant 3 : index
    %c3_564 = arith.constant 3 : index
    %c0_565 = arith.constant 0 : index
    %c0_566 = arith.constant 0 : index
    %852 = vector.load %arg2[%c3_563, %c3_564, %c0_565, %c0_566] : memref<4x36x4x256xf32, #tpu.memory_space<vmem>>, vector<1x1x4x256xf32>
    %853 = vector.shape_cast %852 : vector<1x1x4x256xf32> to vector<4x256xf32>
    %854 = vector.broadcast %851 : vector<1x256xf32> to vector<4x256xf32>
    %855 = arith.mulf %853, %854 : vector<4x256xf32>
    %c16_i32_567 = arith.constant 16 : i32
    %856 = tpu.dynamic_rotate %828 by %c16_i32_567 dim 1 : vector<4x256xf32>, i32 -> vector<4x256xf32>
    %c1_568 = arith.constant 1 : index
    %c0_569 = arith.constant 0 : index
    %c0_570 = arith.constant 0 : index
    %857 = vector.load %arg4[%c1_568, %c0_569, %c0_570] : memref<9x4x256xf32, #tpu.memory_space<vmem>>, vector<1x4x256xf32>
    %858 = vector.shape_cast %857 : vector<1x4x256xf32> to vector<4x256xf32>
    %cst_571 = arith.constant 0.000000e+00 : f32
    %859 = vector.broadcast %cst_571 : f32 to vector<4x256xf32>
    %860 = arith.cmpf one, %858, %859 : vector<4x256xf32>
    %cst_572 = arith.constant 0.000000e+00 : f32
    %861 = vector.broadcast %cst_572 : f32 to vector<4x256xf32>
    %862 = arith.select %860, %856, %861 : vector<4x256xi1>, vector<4x256xf32>
    %863 = vector.extract_strided_slice %862 {offsets = [0, 0], sizes = [1, 256], strides = [1, 1]} : vector<4x256xf32> to vector<1x256xf32>
    %c3_573 = arith.constant 3 : index
    %c4_574 = arith.constant 4 : index
    %c0_575 = arith.constant 0 : index
    %c0_576 = arith.constant 0 : index
    %864 = vector.load %arg2[%c3_573, %c4_574, %c0_575, %c0_576] : memref<4x36x4x256xf32, #tpu.memory_space<vmem>>, vector<1x1x4x256xf32>
    %865 = vector.shape_cast %864 : vector<1x1x4x256xf32> to vector<4x256xf32>
    %866 = vector.broadcast %863 : vector<1x256xf32> to vector<4x256xf32>
    %867 = arith.mulf %865, %866 : vector<4x256xf32>
    %868 = arith.addf %840, %867 : vector<4x256xf32>
    %869 = vector.extract_strided_slice %862 {offsets = [1, 0], sizes = [1, 256], strides = [1, 1]} : vector<4x256xf32> to vector<1x256xf32>
    %c3_577 = arith.constant 3 : index
    %c5_578 = arith.constant 5 : index
    %c0_579 = arith.constant 0 : index
    %c0_580 = arith.constant 0 : index
    %870 = vector.load %arg2[%c3_577, %c5_578, %c0_579, %c0_580] : memref<4x36x4x256xf32, #tpu.memory_space<vmem>>, vector<1x1x4x256xf32>
    %871 = vector.shape_cast %870 : vector<1x1x4x256xf32> to vector<4x256xf32>
    %872 = vector.broadcast %869 : vector<1x256xf32> to vector<4x256xf32>
    %873 = arith.mulf %871, %872 : vector<4x256xf32>
    %874 = arith.addf %845, %873 : vector<4x256xf32>
    %875 = vector.extract_strided_slice %862 {offsets = [2, 0], sizes = [1, 256], strides = [1, 1]} : vector<4x256xf32> to vector<1x256xf32>
    %c3_581 = arith.constant 3 : index
    %c6_582 = arith.constant 6 : index
    %c0_583 = arith.constant 0 : index
    %c0_584 = arith.constant 0 : index
    %876 = vector.load %arg2[%c3_581, %c6_582, %c0_583, %c0_584] : memref<4x36x4x256xf32, #tpu.memory_space<vmem>>, vector<1x1x4x256xf32>
    %877 = vector.shape_cast %876 : vector<1x1x4x256xf32> to vector<4x256xf32>
    %878 = vector.broadcast %875 : vector<1x256xf32> to vector<4x256xf32>
    %879 = arith.mulf %877, %878 : vector<4x256xf32>
    %880 = arith.addf %850, %879 : vector<4x256xf32>
    %881 = vector.extract_strided_slice %862 {offsets = [3, 0], sizes = [1, 256], strides = [1, 1]} : vector<4x256xf32> to vector<1x256xf32>
    %c3_585 = arith.constant 3 : index
    %c7_586 = arith.constant 7 : index
    %c0_587 = arith.constant 0 : index
    %c0_588 = arith.constant 0 : index
    %882 = vector.load %arg2[%c3_585, %c7_586, %c0_587, %c0_588] : memref<4x36x4x256xf32, #tpu.memory_space<vmem>>, vector<1x1x4x256xf32>
    %883 = vector.shape_cast %882 : vector<1x1x4x256xf32> to vector<4x256xf32>
    %884 = vector.broadcast %881 : vector<1x256xf32> to vector<4x256xf32>
    %885 = arith.mulf %883, %884 : vector<4x256xf32>
    %886 = arith.addf %855, %885 : vector<4x256xf32>
    %c15_i32_589 = arith.constant 15 : i32
    %887 = tpu.dynamic_rotate %828 by %c15_i32_589 dim 1 : vector<4x256xf32>, i32 -> vector<4x256xf32>
    %c2_590 = arith.constant 2 : index
    %c0_591 = arith.constant 0 : index
    %c0_592 = arith.constant 0 : index
    %888 = vector.load %arg4[%c2_590, %c0_591, %c0_592] : memref<9x4x256xf32, #tpu.memory_space<vmem>>, vector<1x4x256xf32>
    %889 = vector.shape_cast %888 : vector<1x4x256xf32> to vector<4x256xf32>
    %cst_593 = arith.constant 0.000000e+00 : f32
    %890 = vector.broadcast %cst_593 : f32 to vector<4x256xf32>
    %891 = arith.cmpf one, %889, %890 : vector<4x256xf32>
    %cst_594 = arith.constant 0.000000e+00 : f32
    %892 = vector.broadcast %cst_594 : f32 to vector<4x256xf32>
    %893 = arith.select %891, %887, %892 : vector<4x256xi1>, vector<4x256xf32>
    %894 = vector.extract_strided_slice %893 {offsets = [0, 0], sizes = [1, 256], strides = [1, 1]} : vector<4x256xf32> to vector<1x256xf32>
    %c3_595 = arith.constant 3 : index
    %c8_596 = arith.constant 8 : index
    %c0_597 = arith.constant 0 : index
    %c0_598 = arith.constant 0 : index
    %895 = vector.load %arg2[%c3_595, %c8_596, %c0_597, %c0_598] : memref<4x36x4x256xf32, #tpu.memory_space<vmem>>, vector<1x1x4x256xf32>
    %896 = vector.shape_cast %895 : vector<1x1x4x256xf32> to vector<4x256xf32>
    %897 = vector.broadcast %894 : vector<1x256xf32> to vector<4x256xf32>
    %898 = arith.mulf %896, %897 : vector<4x256xf32>
    %899 = arith.addf %868, %898 : vector<4x256xf32>
    %900 = vector.extract_strided_slice %893 {offsets = [1, 0], sizes = [1, 256], strides = [1, 1]} : vector<4x256xf32> to vector<1x256xf32>
    %c3_599 = arith.constant 3 : index
    %c9_600 = arith.constant 9 : index
    %c0_601 = arith.constant 0 : index
    %c0_602 = arith.constant 0 : index
    %901 = vector.load %arg2[%c3_599, %c9_600, %c0_601, %c0_602] : memref<4x36x4x256xf32, #tpu.memory_space<vmem>>, vector<1x1x4x256xf32>
    %902 = vector.shape_cast %901 : vector<1x1x4x256xf32> to vector<4x256xf32>
    %903 = vector.broadcast %900 : vector<1x256xf32> to vector<4x256xf32>
    %904 = arith.mulf %902, %903 : vector<4x256xf32>
    %905 = arith.addf %874, %904 : vector<4x256xf32>
    %906 = vector.extract_strided_slice %893 {offsets = [2, 0], sizes = [1, 256], strides = [1, 1]} : vector<4x256xf32> to vector<1x256xf32>
    %c3_603 = arith.constant 3 : index
    %c10_604 = arith.constant 10 : index
    %c0_605 = arith.constant 0 : index
    %c0_606 = arith.constant 0 : index
    %907 = vector.load %arg2[%c3_603, %c10_604, %c0_605, %c0_606] : memref<4x36x4x256xf32, #tpu.memory_space<vmem>>, vector<1x1x4x256xf32>
    %908 = vector.shape_cast %907 : vector<1x1x4x256xf32> to vector<4x256xf32>
    %909 = vector.broadcast %906 : vector<1x256xf32> to vector<4x256xf32>
    %910 = arith.mulf %908, %909 : vector<4x256xf32>
    %911 = arith.addf %880, %910 : vector<4x256xf32>
    %912 = vector.extract_strided_slice %893 {offsets = [3, 0], sizes = [1, 256], strides = [1, 1]} : vector<4x256xf32> to vector<1x256xf32>
    %c3_607 = arith.constant 3 : index
    %c11_608 = arith.constant 11 : index
    %c0_609 = arith.constant 0 : index
    %c0_610 = arith.constant 0 : index
    %913 = vector.load %arg2[%c3_607, %c11_608, %c0_609, %c0_610] : memref<4x36x4x256xf32, #tpu.memory_space<vmem>>, vector<1x1x4x256xf32>
    %914 = vector.shape_cast %913 : vector<1x1x4x256xf32> to vector<4x256xf32>
    %915 = vector.broadcast %912 : vector<1x256xf32> to vector<4x256xf32>
    %916 = arith.mulf %914, %915 : vector<4x256xf32>
    %917 = arith.addf %886, %916 : vector<4x256xf32>
    %c1_i32_611 = arith.constant 1 : i32
    %918 = tpu.dynamic_rotate %828 by %c1_i32_611 dim 1 : vector<4x256xf32>, i32 -> vector<4x256xf32>
    %c3_612 = arith.constant 3 : index
    %c0_613 = arith.constant 0 : index
    %c0_614 = arith.constant 0 : index
    %919 = vector.load %arg4[%c3_612, %c0_613, %c0_614] : memref<9x4x256xf32, #tpu.memory_space<vmem>>, vector<1x4x256xf32>
    %920 = vector.shape_cast %919 : vector<1x4x256xf32> to vector<4x256xf32>
    %cst_615 = arith.constant 0.000000e+00 : f32
    %921 = vector.broadcast %cst_615 : f32 to vector<4x256xf32>
    %922 = arith.cmpf one, %920, %921 : vector<4x256xf32>
    %cst_616 = arith.constant 0.000000e+00 : f32
    %923 = vector.broadcast %cst_616 : f32 to vector<4x256xf32>
    %924 = arith.select %922, %918, %923 : vector<4x256xi1>, vector<4x256xf32>
    %925 = vector.extract_strided_slice %924 {offsets = [0, 0], sizes = [1, 256], strides = [1, 1]} : vector<4x256xf32> to vector<1x256xf32>
    %c3_617 = arith.constant 3 : index
    %c12_618 = arith.constant 12 : index
    %c0_619 = arith.constant 0 : index
    %c0_620 = arith.constant 0 : index
    %926 = vector.load %arg2[%c3_617, %c12_618, %c0_619, %c0_620] : memref<4x36x4x256xf32, #tpu.memory_space<vmem>>, vector<1x1x4x256xf32>
    %927 = vector.shape_cast %926 : vector<1x1x4x256xf32> to vector<4x256xf32>
    %928 = vector.broadcast %925 : vector<1x256xf32> to vector<4x256xf32>
    %929 = arith.mulf %927, %928 : vector<4x256xf32>
    %930 = arith.addf %899, %929 : vector<4x256xf32>
    %931 = vector.extract_strided_slice %924 {offsets = [1, 0], sizes = [1, 256], strides = [1, 1]} : vector<4x256xf32> to vector<1x256xf32>
    %c3_621 = arith.constant 3 : index
    %c13_622 = arith.constant 13 : index
    %c0_623 = arith.constant 0 : index
    %c0_624 = arith.constant 0 : index
    %932 = vector.load %arg2[%c3_621, %c13_622, %c0_623, %c0_624] : memref<4x36x4x256xf32, #tpu.memory_space<vmem>>, vector<1x1x4x256xf32>
    %933 = vector.shape_cast %932 : vector<1x1x4x256xf32> to vector<4x256xf32>
    %934 = vector.broadcast %931 : vector<1x256xf32> to vector<4x256xf32>
    %935 = arith.mulf %933, %934 : vector<4x256xf32>
    %936 = arith.addf %905, %935 : vector<4x256xf32>
    %937 = vector.extract_strided_slice %924 {offsets = [2, 0], sizes = [1, 256], strides = [1, 1]} : vector<4x256xf32> to vector<1x256xf32>
    %c3_625 = arith.constant 3 : index
    %c14_626 = arith.constant 14 : index
    %c0_627 = arith.constant 0 : index
    %c0_628 = arith.constant 0 : index
    %938 = vector.load %arg2[%c3_625, %c14_626, %c0_627, %c0_628] : memref<4x36x4x256xf32, #tpu.memory_space<vmem>>, vector<1x1x4x256xf32>
    %939 = vector.shape_cast %938 : vector<1x1x4x256xf32> to vector<4x256xf32>
    %940 = vector.broadcast %937 : vector<1x256xf32> to vector<4x256xf32>
    %941 = arith.mulf %939, %940 : vector<4x256xf32>
    %942 = arith.addf %911, %941 : vector<4x256xf32>
    %943 = vector.extract_strided_slice %924 {offsets = [3, 0], sizes = [1, 256], strides = [1, 1]} : vector<4x256xf32> to vector<1x256xf32>
    %c3_629 = arith.constant 3 : index
    %c15_630 = arith.constant 15 : index
    %c0_631 = arith.constant 0 : index
    %c0_632 = arith.constant 0 : index
    %944 = vector.load %arg2[%c3_629, %c15_630, %c0_631, %c0_632] : memref<4x36x4x256xf32, #tpu.memory_space<vmem>>, vector<1x1x4x256xf32>
    %945 = vector.shape_cast %944 : vector<1x1x4x256xf32> to vector<4x256xf32>
    %946 = vector.broadcast %943 : vector<1x256xf32> to vector<4x256xf32>
    %947 = arith.mulf %945, %946 : vector<4x256xf32>
    %948 = arith.addf %917, %947 : vector<4x256xf32>
    %949 = vector.extract_strided_slice %828 {offsets = [0, 0], sizes = [1, 256], strides = [1, 1]} : vector<4x256xf32> to vector<1x256xf32>
    %c3_633 = arith.constant 3 : index
    %c16_634 = arith.constant 16 : index
    %c0_635 = arith.constant 0 : index
    %c0_636 = arith.constant 0 : index
    %950 = vector.load %arg2[%c3_633, %c16_634, %c0_635, %c0_636] : memref<4x36x4x256xf32, #tpu.memory_space<vmem>>, vector<1x1x4x256xf32>
    %951 = vector.shape_cast %950 : vector<1x1x4x256xf32> to vector<4x256xf32>
    %952 = vector.broadcast %949 : vector<1x256xf32> to vector<4x256xf32>
    %953 = arith.mulf %951, %952 : vector<4x256xf32>
    %954 = arith.addf %930, %953 : vector<4x256xf32>
    %955 = vector.extract_strided_slice %828 {offsets = [1, 0], sizes = [1, 256], strides = [1, 1]} : vector<4x256xf32> to vector<1x256xf32>
    %c3_637 = arith.constant 3 : index
    %c17_638 = arith.constant 17 : index
    %c0_639 = arith.constant 0 : index
    %c0_640 = arith.constant 0 : index
    %956 = vector.load %arg2[%c3_637, %c17_638, %c0_639, %c0_640] : memref<4x36x4x256xf32, #tpu.memory_space<vmem>>, vector<1x1x4x256xf32>
    %957 = vector.shape_cast %956 : vector<1x1x4x256xf32> to vector<4x256xf32>
    %958 = vector.broadcast %955 : vector<1x256xf32> to vector<4x256xf32>
    %959 = arith.mulf %957, %958 : vector<4x256xf32>
    %960 = arith.addf %936, %959 : vector<4x256xf32>
    %961 = vector.extract_strided_slice %828 {offsets = [2, 0], sizes = [1, 256], strides = [1, 1]} : vector<4x256xf32> to vector<1x256xf32>
    %c3_641 = arith.constant 3 : index
    %c18_642 = arith.constant 18 : index
    %c0_643 = arith.constant 0 : index
    %c0_644 = arith.constant 0 : index
    %962 = vector.load %arg2[%c3_641, %c18_642, %c0_643, %c0_644] : memref<4x36x4x256xf32, #tpu.memory_space<vmem>>, vector<1x1x4x256xf32>
    %963 = vector.shape_cast %962 : vector<1x1x4x256xf32> to vector<4x256xf32>
    %964 = vector.broadcast %961 : vector<1x256xf32> to vector<4x256xf32>
    %965 = arith.mulf %963, %964 : vector<4x256xf32>
    %966 = arith.addf %942, %965 : vector<4x256xf32>
    %967 = vector.extract_strided_slice %828 {offsets = [3, 0], sizes = [1, 256], strides = [1, 1]} : vector<4x256xf32> to vector<1x256xf32>
    %c3_645 = arith.constant 3 : index
    %c19_646 = arith.constant 19 : index
    %c0_647 = arith.constant 0 : index
    %c0_648 = arith.constant 0 : index
    %968 = vector.load %arg2[%c3_645, %c19_646, %c0_647, %c0_648] : memref<4x36x4x256xf32, #tpu.memory_space<vmem>>, vector<1x1x4x256xf32>
    %969 = vector.shape_cast %968 : vector<1x1x4x256xf32> to vector<4x256xf32>
    %970 = vector.broadcast %967 : vector<1x256xf32> to vector<4x256xf32>
    %971 = arith.mulf %969, %970 : vector<4x256xf32>
    %972 = arith.addf %948, %971 : vector<4x256xf32>
    %c255_i32_649 = arith.constant 255 : i32
    %973 = tpu.dynamic_rotate %828 by %c255_i32_649 dim 1 : vector<4x256xf32>, i32 -> vector<4x256xf32>
    %c5_650 = arith.constant 5 : index
    %c0_651 = arith.constant 0 : index
    %c0_652 = arith.constant 0 : index
    %974 = vector.load %arg4[%c5_650, %c0_651, %c0_652] : memref<9x4x256xf32, #tpu.memory_space<vmem>>, vector<1x4x256xf32>
    %975 = vector.shape_cast %974 : vector<1x4x256xf32> to vector<4x256xf32>
    %cst_653 = arith.constant 0.000000e+00 : f32
    %976 = vector.broadcast %cst_653 : f32 to vector<4x256xf32>
    %977 = arith.cmpf one, %975, %976 : vector<4x256xf32>
    %cst_654 = arith.constant 0.000000e+00 : f32
    %978 = vector.broadcast %cst_654 : f32 to vector<4x256xf32>
    %979 = arith.select %977, %973, %978 : vector<4x256xi1>, vector<4x256xf32>
    %980 = vector.extract_strided_slice %979 {offsets = [0, 0], sizes = [1, 256], strides = [1, 1]} : vector<4x256xf32> to vector<1x256xf32>
    %c3_655 = arith.constant 3 : index
    %c20_656 = arith.constant 20 : index
    %c0_657 = arith.constant 0 : index
    %c0_658 = arith.constant 0 : index
    %981 = vector.load %arg2[%c3_655, %c20_656, %c0_657, %c0_658] : memref<4x36x4x256xf32, #tpu.memory_space<vmem>>, vector<1x1x4x256xf32>
    %982 = vector.shape_cast %981 : vector<1x1x4x256xf32> to vector<4x256xf32>
    %983 = vector.broadcast %980 : vector<1x256xf32> to vector<4x256xf32>
    %984 = arith.mulf %982, %983 : vector<4x256xf32>
    %985 = arith.addf %954, %984 : vector<4x256xf32>
    %986 = vector.extract_strided_slice %979 {offsets = [1, 0], sizes = [1, 256], strides = [1, 1]} : vector<4x256xf32> to vector<1x256xf32>
    %c3_659 = arith.constant 3 : index
    %c21_660 = arith.constant 21 : index
    %c0_661 = arith.constant 0 : index
    %c0_662 = arith.constant 0 : index
    %987 = vector.load %arg2[%c3_659, %c21_660, %c0_661, %c0_662] : memref<4x36x4x256xf32, #tpu.memory_space<vmem>>, vector<1x1x4x256xf32>
    %988 = vector.shape_cast %987 : vector<1x1x4x256xf32> to vector<4x256xf32>
    %989 = vector.broadcast %986 : vector<1x256xf32> to vector<4x256xf32>
    %990 = arith.mulf %988, %989 : vector<4x256xf32>
    %991 = arith.addf %960, %990 : vector<4x256xf32>
    %992 = vector.extract_strided_slice %979 {offsets = [2, 0], sizes = [1, 256], strides = [1, 1]} : vector<4x256xf32> to vector<1x256xf32>
    %c3_663 = arith.constant 3 : index
    %c22_664 = arith.constant 22 : index
    %c0_665 = arith.constant 0 : index
    %c0_666 = arith.constant 0 : index
    %993 = vector.load %arg2[%c3_663, %c22_664, %c0_665, %c0_666] : memref<4x36x4x256xf32, #tpu.memory_space<vmem>>, vector<1x1x4x256xf32>
    %994 = vector.shape_cast %993 : vector<1x1x4x256xf32> to vector<4x256xf32>
    %995 = vector.broadcast %992 : vector<1x256xf32> to vector<4x256xf32>
    %996 = arith.mulf %994, %995 : vector<4x256xf32>
    %997 = arith.addf %966, %996 : vector<4x256xf32>
    %998 = vector.extract_strided_slice %979 {offsets = [3, 0], sizes = [1, 256], strides = [1, 1]} : vector<4x256xf32> to vector<1x256xf32>
    %c3_667 = arith.constant 3 : index
    %c23_668 = arith.constant 23 : index
    %c0_669 = arith.constant 0 : index
    %c0_670 = arith.constant 0 : index
    %999 = vector.load %arg2[%c3_667, %c23_668, %c0_669, %c0_670] : memref<4x36x4x256xf32, #tpu.memory_space<vmem>>, vector<1x1x4x256xf32>
    %1000 = vector.shape_cast %999 : vector<1x1x4x256xf32> to vector<4x256xf32>
    %1001 = vector.broadcast %998 : vector<1x256xf32> to vector<4x256xf32>
    %1002 = arith.mulf %1000, %1001 : vector<4x256xf32>
    %1003 = arith.addf %972, %1002 : vector<4x256xf32>
    %c241_i32_671 = arith.constant 241 : i32
    %1004 = tpu.dynamic_rotate %828 by %c241_i32_671 dim 1 : vector<4x256xf32>, i32 -> vector<4x256xf32>
    %c6_672 = arith.constant 6 : index
    %c0_673 = arith.constant 0 : index
    %c0_674 = arith.constant 0 : index
    %1005 = vector.load %arg4[%c6_672, %c0_673, %c0_674] : memref<9x4x256xf32, #tpu.memory_space<vmem>>, vector<1x4x256xf32>
    %1006 = vector.shape_cast %1005 : vector<1x4x256xf32> to vector<4x256xf32>
    %cst_675 = arith.constant 0.000000e+00 : f32
    %1007 = vector.broadcast %cst_675 : f32 to vector<4x256xf32>
    %1008 = arith.cmpf one, %1006, %1007 : vector<4x256xf32>
    %cst_676 = arith.constant 0.000000e+00 : f32
    %1009 = vector.broadcast %cst_676 : f32 to vector<4x256xf32>
    %1010 = arith.select %1008, %1004, %1009 : vector<4x256xi1>, vector<4x256xf32>
    %1011 = vector.extract_strided_slice %1010 {offsets = [0, 0], sizes = [1, 256], strides = [1, 1]} : vector<4x256xf32> to vector<1x256xf32>
    %c3_677 = arith.constant 3 : index
    %c24_678 = arith.constant 24 : index
    %c0_679 = arith.constant 0 : index
    %c0_680 = arith.constant 0 : index
    %1012 = vector.load %arg2[%c3_677, %c24_678, %c0_679, %c0_680] : memref<4x36x4x256xf32, #tpu.memory_space<vmem>>, vector<1x1x4x256xf32>
    %1013 = vector.shape_cast %1012 : vector<1x1x4x256xf32> to vector<4x256xf32>
    %1014 = vector.broadcast %1011 : vector<1x256xf32> to vector<4x256xf32>
    %1015 = arith.mulf %1013, %1014 : vector<4x256xf32>
    %1016 = arith.addf %985, %1015 : vector<4x256xf32>
    %1017 = vector.extract_strided_slice %1010 {offsets = [1, 0], sizes = [1, 256], strides = [1, 1]} : vector<4x256xf32> to vector<1x256xf32>
    %c3_681 = arith.constant 3 : index
    %c25_682 = arith.constant 25 : index
    %c0_683 = arith.constant 0 : index
    %c0_684 = arith.constant 0 : index
    %1018 = vector.load %arg2[%c3_681, %c25_682, %c0_683, %c0_684] : memref<4x36x4x256xf32, #tpu.memory_space<vmem>>, vector<1x1x4x256xf32>
    %1019 = vector.shape_cast %1018 : vector<1x1x4x256xf32> to vector<4x256xf32>
    %1020 = vector.broadcast %1017 : vector<1x256xf32> to vector<4x256xf32>
    %1021 = arith.mulf %1019, %1020 : vector<4x256xf32>
    %1022 = arith.addf %991, %1021 : vector<4x256xf32>
    %1023 = vector.extract_strided_slice %1010 {offsets = [2, 0], sizes = [1, 256], strides = [1, 1]} : vector<4x256xf32> to vector<1x256xf32>
    %c3_685 = arith.constant 3 : index
    %c26_686 = arith.constant 26 : index
    %c0_687 = arith.constant 0 : index
    %c0_688 = arith.constant 0 : index
    %1024 = vector.load %arg2[%c3_685, %c26_686, %c0_687, %c0_688] : memref<4x36x4x256xf32, #tpu.memory_space<vmem>>, vector<1x1x4x256xf32>
    %1025 = vector.shape_cast %1024 : vector<1x1x4x256xf32> to vector<4x256xf32>
    %1026 = vector.broadcast %1023 : vector<1x256xf32> to vector<4x256xf32>
    %1027 = arith.mulf %1025, %1026 : vector<4x256xf32>
    %1028 = arith.addf %997, %1027 : vector<4x256xf32>
    %1029 = vector.extract_strided_slice %1010 {offsets = [3, 0], sizes = [1, 256], strides = [1, 1]} : vector<4x256xf32> to vector<1x256xf32>
    %c3_689 = arith.constant 3 : index
    %c27_690 = arith.constant 27 : index
    %c0_691 = arith.constant 0 : index
    %c0_692 = arith.constant 0 : index
    %1030 = vector.load %arg2[%c3_689, %c27_690, %c0_691, %c0_692] : memref<4x36x4x256xf32, #tpu.memory_space<vmem>>, vector<1x1x4x256xf32>
    %1031 = vector.shape_cast %1030 : vector<1x1x4x256xf32> to vector<4x256xf32>
    %1032 = vector.broadcast %1029 : vector<1x256xf32> to vector<4x256xf32>
    %1033 = arith.mulf %1031, %1032 : vector<4x256xf32>
    %1034 = arith.addf %1003, %1033 : vector<4x256xf32>
    %c240_i32_693 = arith.constant 240 : i32
    %1035 = tpu.dynamic_rotate %828 by %c240_i32_693 dim 1 : vector<4x256xf32>, i32 -> vector<4x256xf32>
    %c7_694 = arith.constant 7 : index
    %c0_695 = arith.constant 0 : index
    %c0_696 = arith.constant 0 : index
    %1036 = vector.load %arg4[%c7_694, %c0_695, %c0_696] : memref<9x4x256xf32, #tpu.memory_space<vmem>>, vector<1x4x256xf32>
    %1037 = vector.shape_cast %1036 : vector<1x4x256xf32> to vector<4x256xf32>
    %cst_697 = arith.constant 0.000000e+00 : f32
    %1038 = vector.broadcast %cst_697 : f32 to vector<4x256xf32>
    %1039 = arith.cmpf one, %1037, %1038 : vector<4x256xf32>
    %cst_698 = arith.constant 0.000000e+00 : f32
    %1040 = vector.broadcast %cst_698 : f32 to vector<4x256xf32>
    %1041 = arith.select %1039, %1035, %1040 : vector<4x256xi1>, vector<4x256xf32>
    %1042 = vector.extract_strided_slice %1041 {offsets = [0, 0], sizes = [1, 256], strides = [1, 1]} : vector<4x256xf32> to vector<1x256xf32>
    %c3_699 = arith.constant 3 : index
    %c28_700 = arith.constant 28 : index
    %c0_701 = arith.constant 0 : index
    %c0_702 = arith.constant 0 : index
    %1043 = vector.load %arg2[%c3_699, %c28_700, %c0_701, %c0_702] : memref<4x36x4x256xf32, #tpu.memory_space<vmem>>, vector<1x1x4x256xf32>
    %1044 = vector.shape_cast %1043 : vector<1x1x4x256xf32> to vector<4x256xf32>
    %1045 = vector.broadcast %1042 : vector<1x256xf32> to vector<4x256xf32>
    %1046 = arith.mulf %1044, %1045 : vector<4x256xf32>
    %1047 = arith.addf %1016, %1046 : vector<4x256xf32>
    %1048 = vector.extract_strided_slice %1041 {offsets = [1, 0], sizes = [1, 256], strides = [1, 1]} : vector<4x256xf32> to vector<1x256xf32>
    %c3_703 = arith.constant 3 : index
    %c29_704 = arith.constant 29 : index
    %c0_705 = arith.constant 0 : index
    %c0_706 = arith.constant 0 : index
    %1049 = vector.load %arg2[%c3_703, %c29_704, %c0_705, %c0_706] : memref<4x36x4x256xf32, #tpu.memory_space<vmem>>, vector<1x1x4x256xf32>
    %1050 = vector.shape_cast %1049 : vector<1x1x4x256xf32> to vector<4x256xf32>
    %1051 = vector.broadcast %1048 : vector<1x256xf32> to vector<4x256xf32>
    %1052 = arith.mulf %1050, %1051 : vector<4x256xf32>
    %1053 = arith.addf %1022, %1052 : vector<4x256xf32>
    %1054 = vector.extract_strided_slice %1041 {offsets = [2, 0], sizes = [1, 256], strides = [1, 1]} : vector<4x256xf32> to vector<1x256xf32>
    %c3_707 = arith.constant 3 : index
    %c30_708 = arith.constant 30 : index
    %c0_709 = arith.constant 0 : index
    %c0_710 = arith.constant 0 : index
    %1055 = vector.load %arg2[%c3_707, %c30_708, %c0_709, %c0_710] : memref<4x36x4x256xf32, #tpu.memory_space<vmem>>, vector<1x1x4x256xf32>
    %1056 = vector.shape_cast %1055 : vector<1x1x4x256xf32> to vector<4x256xf32>
    %1057 = vector.broadcast %1054 : vector<1x256xf32> to vector<4x256xf32>
    %1058 = arith.mulf %1056, %1057 : vector<4x256xf32>
    %1059 = arith.addf %1028, %1058 : vector<4x256xf32>
    %1060 = vector.extract_strided_slice %1041 {offsets = [3, 0], sizes = [1, 256], strides = [1, 1]} : vector<4x256xf32> to vector<1x256xf32>
    %c3_711 = arith.constant 3 : index
    %c31_712 = arith.constant 31 : index
    %c0_713 = arith.constant 0 : index
    %c0_714 = arith.constant 0 : index
    %1061 = vector.load %arg2[%c3_711, %c31_712, %c0_713, %c0_714] : memref<4x36x4x256xf32, #tpu.memory_space<vmem>>, vector<1x1x4x256xf32>
    %1062 = vector.shape_cast %1061 : vector<1x1x4x256xf32> to vector<4x256xf32>
    %1063 = vector.broadcast %1060 : vector<1x256xf32> to vector<4x256xf32>
    %1064 = arith.mulf %1062, %1063 : vector<4x256xf32>
    %1065 = arith.addf %1034, %1064 : vector<4x256xf32>
    %c239_i32_715 = arith.constant 239 : i32
    %1066 = tpu.dynamic_rotate %828 by %c239_i32_715 dim 1 : vector<4x256xf32>, i32 -> vector<4x256xf32>
    %c8_716 = arith.constant 8 : index
    %c0_717 = arith.constant 0 : index
    %c0_718 = arith.constant 0 : index
    %1067 = vector.load %arg4[%c8_716, %c0_717, %c0_718] : memref<9x4x256xf32, #tpu.memory_space<vmem>>, vector<1x4x256xf32>
    %1068 = vector.shape_cast %1067 : vector<1x4x256xf32> to vector<4x256xf32>
    %cst_719 = arith.constant 0.000000e+00 : f32
    %1069 = vector.broadcast %cst_719 : f32 to vector<4x256xf32>
    %1070 = arith.cmpf one, %1068, %1069 : vector<4x256xf32>
    %cst_720 = arith.constant 0.000000e+00 : f32
    %1071 = vector.broadcast %cst_720 : f32 to vector<4x256xf32>
    %1072 = arith.select %1070, %1066, %1071 : vector<4x256xi1>, vector<4x256xf32>
    %1073 = vector.extract_strided_slice %1072 {offsets = [0, 0], sizes = [1, 256], strides = [1, 1]} : vector<4x256xf32> to vector<1x256xf32>
    %c3_721 = arith.constant 3 : index
    %c32_722 = arith.constant 32 : index
    %c0_723 = arith.constant 0 : index
    %c0_724 = arith.constant 0 : index
    %1074 = vector.load %arg2[%c3_721, %c32_722, %c0_723, %c0_724] : memref<4x36x4x256xf32, #tpu.memory_space<vmem>>, vector<1x1x4x256xf32>
    %1075 = vector.shape_cast %1074 : vector<1x1x4x256xf32> to vector<4x256xf32>
    %1076 = vector.broadcast %1073 : vector<1x256xf32> to vector<4x256xf32>
    %1077 = arith.mulf %1075, %1076 : vector<4x256xf32>
    %1078 = arith.addf %1047, %1077 : vector<4x256xf32>
    %1079 = vector.extract_strided_slice %1072 {offsets = [1, 0], sizes = [1, 256], strides = [1, 1]} : vector<4x256xf32> to vector<1x256xf32>
    %c3_725 = arith.constant 3 : index
    %c33_726 = arith.constant 33 : index
    %c0_727 = arith.constant 0 : index
    %c0_728 = arith.constant 0 : index
    %1080 = vector.load %arg2[%c3_725, %c33_726, %c0_727, %c0_728] : memref<4x36x4x256xf32, #tpu.memory_space<vmem>>, vector<1x1x4x256xf32>
    %1081 = vector.shape_cast %1080 : vector<1x1x4x256xf32> to vector<4x256xf32>
    %1082 = vector.broadcast %1079 : vector<1x256xf32> to vector<4x256xf32>
    %1083 = arith.mulf %1081, %1082 : vector<4x256xf32>
    %1084 = arith.addf %1053, %1083 : vector<4x256xf32>
    %1085 = vector.extract_strided_slice %1072 {offsets = [2, 0], sizes = [1, 256], strides = [1, 1]} : vector<4x256xf32> to vector<1x256xf32>
    %c3_729 = arith.constant 3 : index
    %c34_730 = arith.constant 34 : index
    %c0_731 = arith.constant 0 : index
    %c0_732 = arith.constant 0 : index
    %1086 = vector.load %arg2[%c3_729, %c34_730, %c0_731, %c0_732] : memref<4x36x4x256xf32, #tpu.memory_space<vmem>>, vector<1x1x4x256xf32>
    %1087 = vector.shape_cast %1086 : vector<1x1x4x256xf32> to vector<4x256xf32>
    %1088 = vector.broadcast %1085 : vector<1x256xf32> to vector<4x256xf32>
    %1089 = arith.mulf %1087, %1088 : vector<4x256xf32>
    %1090 = arith.addf %1059, %1089 : vector<4x256xf32>
    %1091 = vector.extract_strided_slice %1072 {offsets = [3, 0], sizes = [1, 256], strides = [1, 1]} : vector<4x256xf32> to vector<1x256xf32>
    %c3_733 = arith.constant 3 : index
    %c35_734 = arith.constant 35 : index
    %c0_735 = arith.constant 0 : index
    %c0_736 = arith.constant 0 : index
    %1092 = vector.load %arg2[%c3_733, %c35_734, %c0_735, %c0_736] : memref<4x36x4x256xf32, #tpu.memory_space<vmem>>, vector<1x1x4x256xf32>
    %1093 = vector.shape_cast %1092 : vector<1x1x4x256xf32> to vector<4x256xf32>
    %1094 = vector.broadcast %1091 : vector<1x256xf32> to vector<4x256xf32>
    %1095 = arith.mulf %1093, %1094 : vector<4x256xf32>
    %1096 = arith.addf %1065, %1095 : vector<4x256xf32>
    %c3_737 = arith.constant 3 : index
    %c0_738 = arith.constant 0 : index
    %c0_739 = arith.constant 0 : index
    %1097 = vector.load %arg3[%c3_737, %c0_738, %c0_739] : memref<4x4x256xf32, #tpu.memory_space<vmem>>, vector<1x4x256xf32>
    %1098 = vector.shape_cast %1097 : vector<1x4x256xf32> to vector<4x256xf32>
    %1099 = arith.addf %1098, %1078 : vector<4x256xf32>
    %1100 = arith.addf %1099, %1084 : vector<4x256xf32>
    %1101 = arith.addf %1100, %1090 : vector<4x256xf32>
    %1102 = arith.addf %1101, %1096 : vector<4x256xf32>
    %1103 = arith.addf %1102, %552 : vector<4x256xf32>
    %c0_740 = arith.constant 0 : index
    %c0_741 = arith.constant 0 : index
    %c0_742 = arith.constant 0 : index
    %1104 = vector.load %arg5[%c0_740, %c0_741, %c0_742] : memref<1x4x256xf32, #tpu.memory_space<vmem>>, vector<1x4x256xf32>
    %1105 = vector.shape_cast %1104 : vector<1x4x256xf32> to vector<4x256xf32>
    %1106 = vector.shape_cast %1103 : vector<4x256xf32> to vector<1x4x256xf32>
    tpu.vector_store %arg5[%c0_740, %c0_741, %c0_742], %1106 {strides = array<i32>} : memref<1x4x256xf32, #tpu.memory_space<vmem>>, vector<1x4x256xf32>,
    return
  }
  func.func @transform_0(%arg0: i32) -> (i32, i32, i32) {
    %c0_i32 = arith.constant 0 : i32
    %c0_i32_0 = arith.constant 0 : i32
    %c0_i32_1 = arith.constant 0 : i32
    return %arg0, %c0_i32, %c0_i32_0 : i32, i32, i32
  }
  func.func @transform_1(%arg0: i32) -> (i32, i32, i32, i32) {
    %c0_i32 = arith.constant 0 : i32
    %c0_i32_0 = arith.constant 0 : i32
    %c0_i32_1 = arith.constant 0 : i32
    %c0_i32_2 = arith.constant 0 : i32
    %c0_i32_3 = arith.constant 0 : i32
    return %c0_i32, %c0_i32_0, %c0_i32_1, %c0_i32_2 : i32, i32, i32, i32
  }
  func.func @transform_2(%arg0: i32) -> (i32, i32, i32) {
    %c0_i32 = arith.constant 0 : i32
    %c0_i32_0 = arith.constant 0 : i32
    %c0_i32_1 = arith.constant 0 : i32
    %c0_i32_2 = arith.constant 0 : i32
    return %c0_i32, %c0_i32_0, %c0_i32_1 : i32, i32, i32
  }
  func.func @transform_3(%arg0: i32) -> (i32, i32, i32) {
    %c0_i32 = arith.constant 0 : i32
    %c0_i32_0 = arith.constant 0 : i32
    %c0_i32_1 = arith.constant 0 : i32
    %c0_i32_2 = arith.constant 0 : i32
    return %c0_i32, %c0_i32_0, %c0_i32_1 : i32, i32, i32
  }
  func.func @transform_4(%arg0: i32) -> (i32, i32, i32) {
    %c0_i32 = arith.constant 0 : i32
    %c0_i32_0 = arith.constant 0 : i32
    %c0_i32_1 = arith.constant 0 : i32
    return %arg0, %c0_i32, %c0_i32_0 : i32, i32, i32
  }
}

</mosaic_0001>

<llo_original>
// kernel: tpu_custom_call.1
$region0: #{tpu_custom_call.1}
  #allocation0 [shape = 'u32[]', space=smem, size = 0x4, offset = 0x4, fixed_abs, tag = 'smem constant byte address 0x4 - core index']
  #allocation1 [shape = 'u32[72,128]{1,0:T(1,128)}', space=vmem, size = 0x9000, scoped, tag = 'internal scratch']
  %s0 = inlined_call_operand.hbm [shape: f32[2,4,256], index: 0, kind: input, shape index: {}]
  %s1 = inlined_call_operand.hbm [shape: f32[4,36,4,256], index: 1, kind: input, shape index: {}]
  %s2 = inlined_call_operand.hbm [shape: f32[4,4,256], index: 2, kind: input, shape index: {}]
  %s3 = inlined_call_operand.hbm [shape: f32[9,4,256], index: 3, kind: input, shape index: {}]
  %s4 = inlined_call_operand.hbm [shape: f32[2,4,256], index: 4, kind: output, shape index: {}]
  %s5 = sld [smem:[#allocation0]]
  $region65: #{tpu_custom_call.1} parent=0
    _
  %s7 = ssub.s32 1, %s5
  %s8 = scalar_select 0, %s7, %s5
  $region1: #{tpu_custom_call.1} parent=0
    #allocation2 [shape = 'u8[8192]{0}', space=vmem, size = 0x2000, scoped, tag = 'input window, operand 0']
    #allocation3 [shape = 's32[2]{0}', space=sflag, size = 0x8, scoped, tag = 'scoped memory for tpu_custom_call.1']
    #allocation4 [shape = 's32[2]{0}', space=sflag, size = 0x8, scoped, tag = 'scoped memory for tpu_custom_call.1']
    #allocation5 [shape = 'u8[589824]{0}', space=vmem, size = 0x90000, scoped, tag = 'input window, operand 1, single buffered']
    #allocation6 [shape = 's32[1]{0}', space=sflag, size = 0x4, scoped, tag = 'scoped memory for tpu_custom_call.1']
    #allocation7 [shape = 'u8[16384]{0}', space=vmem, size = 0x4000, scoped, tag = 'input window, operand 2, single buffered']
    #allocation8 [shape = 'u8[36864]{0}', space=vmem, size = 0x9000, scoped, tag = 'input window, operand 3, single buffered']
    #allocation9 [shape = 's32[1]{0}', space=sflag, size = 0x4, scoped, tag = 'scoped memory for tpu_custom_call.1']
    #allocation10 [shape = 'u8[8192]{0}', space=vmem, size = 0x2000, scoped, tag = 'output window, operand 0']
    %9 = vsyncpa [#allocation3], 0
    %s10 = scalar_lea.sflag [#allocation3], 1
    %11 = vsyncpa %s10, 0
    %12 = vsyncpa [#allocation6], 0
    %13 = vsyncpa [#allocation9], 0
    %14 = vsyncpa [#allocation4], 0
    %s15 = scalar_lea.sflag [#allocation4], 1
    %16 = vsyncpa %s15, 0
    loop: start=0, step=1, limit=4
    $region2: #{tpu_custom_call.1} parent=1 // loop_pre_header
      _
    $region3: #{tpu_custom_call.1} parent=1 // loop_header
      %s18 = sphi 0, %s22
      %p19 = scmp.ge.s32.totalorder %s18, 4
      %s28 = sphi 0, %s30
      %s31 = sphi 0, %s28
      %s32 = sphi 0, %s31
      %s48 = sphi 0, %s32
      %s52 = sphi 0, %s52
      %s54 = sphi 0, %s52
      %s55 = sphi 0, %s54
      %s69 = sphi 0, %s55
      %s73 = sphi 0, %s73
      %s75 = sphi 0, %s73
      %s76 = sphi 0, %s75
      %s90 = sphi 0, %s76
      %s94 = sphi 0, %s94
      %s96 = sphi 0, %s94
      %s97 = sphi 0, %s96
      %s111 = sphi 0, %s97
      %s117 = sphi 0, %s119
      %s120 = sphi 0, %s117
      %s121 = sphi 0, %s120
      %s137 = sphi 0, %s121
    $region4: #{tpu_custom_call.1} parent=1 // loop_header_branch
      %21 = sbr.rel (%p19) target = $region8
    $region5: #{tpu_custom_call.1} parent=1 // loop_body
      %s23 = ssub.s32 %s18, 1
      %s24 = ssub.s32 %s18, 2
      %s25 = sadd.s32 %s18, 1
      %s26 = ssub.s32 %s18, %s25
      %p27 = scmp.eq.s32.totalorder %s26, 0
      %s29 = sadd.s32 %s28, 1
      %s30 = scalar_select %p27, %s28, %s29
      %p33 = pneg %p27
      %p34 = scmp.eq.s32.totalorder %s18, 1
      %p35 = por %p33, %p34
      %p36 = scmp.ne.s32.totalorder %s28, %s31
      %p37 = scmp.eq.s32.totalorder %s18, 0
      %p38 = por %p36, %p37
      %p39 = scmp.ne.s32.totalorder %s28, %s31
      %p40 = scmp.eq.s32.totalorder %s23, 1
      %p41 = por %p39, %p40
      %p42 = scmp.ne.s32.totalorder %s31, %s32
      %p43 = scmp.eq.s32.totalorder %s23, 0
      %p44 = por %p42, %p43
      %p45 = scmp.ne.s32.totalorder %s31, %s32
      %p46 = scmp.eq.s32.totalorder %s24, 1
      %p47 = por %p45, %p46
      %p49 = scmp.ne.s32.totalorder %s32, %s48
      %p50 = scmp.eq.s32.totalorder %s24, 0
      %p51 = por %p49, %p50
      %s53 = sadd.s32 %s52, 1
      %p56 = scmp.eq.s32.totalorder %s18, 1
      %p57 = scmp.ne.s32.totalorder %s52, %s54
      %p58 = scmp.eq.s32.totalorder %s18, 0
      %p59 = por %p57, %p58
      %p60 = scmp.ne.s32.totalorder %s52, %s54
      %p61 = scmp.eq.s32.totalorder %s23, 1
      %p62 = por %p60, %p61
      %p63 = scmp.ne.s32.totalorder %s54, %s55
      %p64 = scmp.eq.s32.totalorder %s23, 0
      %p65 = por %p63, %p64
      %p66 = scmp.ne.s32.totalorder %s54, %s55
      %p67 = scmp.eq.s32.totalorder %s24, 1
      %p68 = por %p66, %p67
      %p70 = scmp.ne.s32.totalorder %s55, %s69
      %p71 = scmp.eq.s32.totalorder %s24, 0
      %p72 = por %p70, %p71
      %s74 = sadd.s32 %s73, 1
      %p77 = scmp.eq.s32.totalorder %s18, 1
      %p78 = scmp.ne.s32.totalorder %s73, %s75
      %p79 = scmp.eq.s32.totalorder %s18, 0
      %p80 = por %p78, %p79
      %p81 = scmp.ne.s32.totalorder %s73, %s75
      %p82 = scmp.eq.s32.totalorder %s23, 1
      %p83 = por %p81, %p82
      %p84 = scmp.ne.s32.totalorder %s75, %s76
      %p85 = scmp.eq.s32.totalorder %s23, 0
      %p86 = por %p84, %p85
      %p87 = scmp.ne.s32.totalorder %s75, %s76
      %p88 = scmp.eq.s32.totalorder %s24, 1
      %p89 = por %p87, %p88
      %p91 = scmp.ne.s32.totalorder %s76, %s90
      %p92 = scmp.eq.s32.totalorder %s24, 0
      %p93 = por %p91, %p92
      %s95 = sadd.s32 %s94, 1
      %p98 = scmp.eq.s32.totalorder %s18, 1
      %p99 = scmp.ne.s32.totalorder %s94, %s96
      %p100 = scmp.eq.s32.totalorder %s18, 0
      %p101 = por %p99, %p100
      %p102 = scmp.ne.s32.totalorder %s94, %s96
      %p103 = scmp.eq.s32.totalorder %s23, 1
      %p104 = por %p102, %p103
      %p105 = scmp.ne.s32.totalorder %s96, %s97
      %p106 = scmp.eq.s32.totalorder %s23, 0
      %p107 = por %p105, %p106
      %p108 = scmp.ne.s32.totalorder %s96, %s97
      %p109 = scmp.eq.s32.totalorder %s24, 1
      %p110 = por %p108, %p109
      %p112 = scmp.ne.s32.totalorder %s97, %s111
      %p113 = scmp.eq.s32.totalorder %s24, 0
      %p114 = por %p112, %p113
      %s115 = ssub.s32 %s18, %s25
      %p116 = scmp.eq.s32.totalorder %s115, 0
      %s118 = sadd.s32 %s117, 1
      %s119 = scalar_select %p116, %s117, %s118
      %p122 = pneg %p116
      %p123 = scmp.eq.s32.totalorder %s18, 1
      %p124 = por %p122, %p123
      %p125 = scmp.ne.s32.totalorder %s117, %s120
      %p126 = scmp.eq.s32.totalorder %s18, 0
      %p127 = por %p125, %p126
      %p128 = scmp.ne.s32.totalorder %s117, %s120
      %p129 = scmp.eq.s32.totalorder %s23, 1
      %p130 = por %p128, %p129
      %p131 = scmp.ne.s32.totalorder %s120, %s121
      %p132 = scmp.eq.s32.totalorder %s23, 0
      %p133 = por %p131, %p132
      %p134 = scmp.ne.s32.totalorder %s120, %s121
      %p135 = scmp.eq.s32.totalorder %s24, 1
      %p136 = por %p134, %p135
      %p138 = scmp.ne.s32.totalorder %s121, %s137
      %p139 = scmp.eq.s32.totalorder %s24, 0
      %p140 = por %p138, %p139
      %p141 = scmp.le.s32.totalorder 1, %s18
      %p142 = scmp.lt.s32.totalorder %s18, 3
      %p143 = pnand %p141, %p142
      %p144 = pneg %p143
      // Predicated region
      $region9: #{tpu_custom_call.1} parent=5 // pred_check
        _
      $region10: #{tpu_custom_call.1} parent=5 // pred_check_branch
        %146 = sbr.rel (%p143) target = $region12
      $region11: #{tpu_custom_call.1} parent=5 // pred_region
        %s147 = ssub.s32 %s18, 1
        // Predicated region
        $region13: #{tpu_custom_call.1} parent=11 // pred_check
          %p148 = pneg %p65
        $region14: #{tpu_custom_call.1} parent=11 // pred_check_branch
          %150 = sbr.rel (%p148) target = $region16
        $region15: #{tpu_custom_call.1} parent=11 // pred_region
          %152 = vsyncadd [#allocation6], 0
          %s153 = sshll.u32 %s1, 4
          %s154 = int_to_ptr.hbm [resolvable:$true] %s153
          %s155 = sshll.u32 [#allocation5], 4
          %s156 = int_to_ptr.vmem [resolvable:$true] %s155
          %161 = dma.hbm_to_vmem [thread:$0]  %s154, 18432, %s156, [#allocation6], 128, 128, 8
        $region16: #{tpu_custom_call.1} parent=11 // pred_fallthru
          _
        // Predicated region
        $region17: #{tpu_custom_call.1} parent=11 // pred_check
          %p162 = pneg %p86
        $region18: #{tpu_custom_call.1} parent=11 // pred_check_branch
          %164 = sbr.rel (%p162) target = $region20
        $region19: #{tpu_custom_call.1} parent=11 // pred_region
          %166 = vsyncadd [#allocation6], 0
          %s167 = sshll.u32 %s2, 4
          %s168 = int_to_ptr.hbm [resolvable:$true] %s167
          %s169 = sshll.u32 [#allocation7], 4
          %s170 = int_to_ptr.vmem [resolvable:$true] %s169
          %175 = dma.hbm_to_vmem [thread:$0]  %s168, 512, %s170, [#allocation6], 128, 128, 8
        $region20: #{tpu_custom_call.1} parent=11 // pred_fallthru
          _
        // Predicated region
        $region21: #{tpu_custom_call.1} parent=11 // pred_check
          %p176 = pneg %p107
        $region22: #{tpu_custom_call.1} parent=11 // pred_check_branch
          %178 = sbr.rel (%p176) target = $region24
        $region23: #{tpu_custom_call.1} parent=11 // pred_region
          %180 = vsyncadd [#allocation9], 0
          %s181 = sshll.u32 %s3, 4
          %s182 = int_to_ptr.hbm [resolvable:$true] %s181
          %s183 = sshll.u32 [#allocation8], 4
          %s184 = int_to_ptr.vmem [resolvable:$true] %s183
          %189 = dma.hbm_to_vmem [thread:$0]  %s182, 1152, %s184, [#allocation9], 128, 128, 8
        $region24: #{tpu_custom_call.1} parent=11 // pred_fallthru
          _
      $region12: #{tpu_custom_call.1} parent=5 // pred_fallthru
        _
      %p190 = scmp.lt.s32.totalorder %s18, 2
      // Predicated region
      $region25: #{tpu_custom_call.1} parent=5 // pred_check
        %p191 = pneg %p190
      $region26: #{tpu_custom_call.1} parent=5 // pred_check_branch
        %193 = sbr.rel (%p191) target = $region28
      $region27: #{tpu_custom_call.1} parent=5 // pred_region
        // Predicated region
        $region29: #{tpu_custom_call.1} parent=27 // pred_check
          %p194 = pneg %p38
        $region30: #{tpu_custom_call.1} parent=27 // pred_check_branch
          %196 = sbr.rel (%p194) target = $region32
        $region31: #{tpu_custom_call.1} parent=27 // pred_region
          %s197 = sand.u32 %s28, 1
          %s198 = scalar_lea.sflag [#allocation3], %s197
          %s199 = sand.u32 %s28, 1
          %s200 = smul.addr %s199, 8
          %s201 = scalar_lea.vmem [#allocation2], %s200
          %203 = vsyncadd %s198, 0
          %s204 = smul.addr %s18, 2
          %s205 = smul.addr %s204, 4
          %s206 = scalar_lea.hbm %s0, %s205
          %s208 = sshll.u32 %s206, 4
          %s209 = int_to_ptr.hbm [resolvable:$true] %s208
          %s210 = sshll.u32 %s201, 4
          %s211 = int_to_ptr.vmem [resolvable:$true] %s210
          %213 = dma.hbm_to_vmem [thread:$0]  %s209, 128, %s211, %s198
        $region32: #{tpu_custom_call.1} parent=27 // pred_fallthru
          _
      $region28: #{tpu_custom_call.1} parent=5 // pred_fallthru
        _
      %p214 = scmp.le.s32.totalorder 1, %s18
      %p215 = scmp.lt.s32.totalorder %s18, 3
      %p216 = pnand %p214, %p215
      %p217 = pneg %p216
      // Predicated region
      $region33: #{tpu_custom_call.1} parent=5 // pred_check
        _
      $region34: #{tpu_custom_call.1} parent=5 // pred_check_branch
        %219 = sbr.rel (%p216) target = $region36
      $region35: #{tpu_custom_call.1} parent=5 // pred_region
        %s220 = ssub.s32 %s18, 1
        %s221 = sand.u32 %s31, 1
        %s222 = scalar_lea.sflag [#allocation3], %s221
        %s223 = sand.u32 %s31, 1
        %s224 = smul.addr %s223, 8
        %s225 = scalar_lea.vmem [#allocation2], %s224
        // Predicated region
        $region37: #{tpu_custom_call.1} parent=35 // pred_check
          %p226 = pneg %p44
        $region38: #{tpu_custom_call.1} parent=35 // pred_check_branch
          %228 = sbr.rel (%p226) target = $region40
        $region39: #{tpu_custom_call.1} parent=35 // pred_region
          %230 = dma.done %s222, 128
        $region40: #{tpu_custom_call.1} parent=35 // pred_fallthru
          _
        // Predicated region
        $region41: #{tpu_custom_call.1} parent=35 // pred_check
          %p231 = pneg %p65
        $region42: #{tpu_custom_call.1} parent=35 // pred_check_branch
          %233 = sbr.rel (%p231) target = $region44
        $region43: #{tpu_custom_call.1} parent=35 // pred_region
          %235 = dma.done [#allocation6], 18432
        $region44: #{tpu_custom_call.1} parent=35 // pred_fallthru
          _
        // Predicated region
        $region45: #{tpu_custom_call.1} parent=35 // pred_check
          %p236 = pneg %p86
        $region46: #{tpu_custom_call.1} parent=35 // pred_check_branch
          %238 = sbr.rel (%p236) target = $region48
        $region47: #{tpu_custom_call.1} parent=35 // pred_region
          %240 = dma.done [#allocation6], 512
        $region48: #{tpu_custom_call.1} parent=35 // pred_fallthru
          _
        // Predicated region
        $region49: #{tpu_custom_call.1} parent=35 // pred_check
          %p241 = pneg %p107
        $region50: #{tpu_custom_call.1} parent=35 // pred_check_branch
          %243 = sbr.rel (%p241) target = $region52
        $region51: #{tpu_custom_call.1} parent=35 // pred_region
          %245 = dma.done [#allocation9], 1152
        $region52: #{tpu_custom_call.1} parent=35 // pred_fallthru
          _
        %s246 = sand.u32 %s31, 1
        %s247 = scalar_lea.sflag [#allocation3], %s246
        %s248 = sand.u32 %s31, 1
        %s249 = smul.addr %s248, 8
        %s250 = scalar_lea.vmem [#allocation2], %s249
        %p251 = pneg %p44
        %p252 = pneg %p41
        %p253 = pneg %p65
        %p254 = pneg %p62
        %p255 = pneg %p86
        %p256 = pneg %p83
        %p257 = pneg %p107
        %p258 = pneg %p104
        %p259 = pneg %p133
        %p260 = pneg %p130
        %s261 = sand.u32 %s120, 1
        %s262 = scalar_lea.sflag [#allocation4], %s261
        %s263 = sand.u32 %s120, 1
        %s264 = smul.addr %s263, 8
        %s265 = scalar_lea.vmem [#allocation10], %s264
        %v266 = vld [vmem:[%s225] sm:$0xff]
        %268 = vst [vmem:[#allocation1] ss:$2 sm:$0xff] %v266
        %v269 = vld.sshfl [vmem:[#allocation1] sm:$0xff pattern:$0x75316420]
        %v270 = vld.sshfl [vmem:[#allocation1 + $0x8] sm:$0xff pattern:$0x75316420]
        %273 = vrot.lane.b32.xlu0 %v269, 17
        %v274 = vpop.permute.xlu0 %273
        %275 = vrot.lane.b32.xlu0 %v270, 17
        %v276 = vpop.permute.xlu0 %275
        %v277 = vlaneseq
        %v278 = vand.u32 %v277, 127
        %vm279 = vcmp.lt.s32.totalorder %v278, 17
        %v280 = vsel %vm279, %v274, %v276
        %v281 = vsel %vm279, %v276, %v274
        %v282 = vld [vmem:[#allocation8] sm:$0xff]
        %vm283 = vcmp.ne.f32.partialorder %v282, 0.0
        %v286 = vrot.slane %v280, 4
        %vm287 = vcmask 1043456
        %v288 = vsel %vm287, %v281, %v286
        %v290 = vsel %vm283, %v288, 0.0
        %v291 = vld [vmem:[#allocation5] sm:$0xff]
        %v293 = vperm.slane %v290, 0
        %v294 = vperm.slane %v290, 4
        %v297 = vperm.slane %v293, 0
        %v298 = vperm.slane %v294, 0
        %v301 = vrot.slane %v298, 4
        %v302 = vsel %vm287, %v297, %v301
        %v304 = vmul.f32 %v291, %v302
        %s305 = scalar_lea.vmem [#allocation5], 8
        %v306 = vld [vmem:[%s305] sm:$0xff]
        %v307 = vperm.slane %v290, 1
        %v308 = vperm.slane %v290, 5
        %v311 = vperm.slane %v307, 1
        %v312 = vperm.slane %v308, 1
        %v315 = vrot.slane %v312, 4
        %v316 = vsel %vm287, %v311, %v315
        %v318 = vmul.f32 %v306, %v316
        %s319 = scalar_lea.vmem [#allocation5], 16
        %v320 = vld [vmem:[%s319] sm:$0xff]
        %v321 = vperm.slane %v290, 2
        %v322 = vperm.slane %v290, 6
        %v325 = vperm.slane %v321, 2
        %v326 = vperm.slane %v322, 2
        %v329 = vrot.slane %v326, 4
        %v330 = vsel %vm287, %v325, %v329
        %v332 = vmul.f32 %v320, %v330
        %s333 = scalar_lea.vmem [#allocation5], 24
        %v334 = vld [vmem:[%s333] sm:$0xff]
        %v335 = vperm.slane %v290, 3
        %v336 = vperm.slane %v290, 7
        %v339 = vperm.slane %v335, 3
        %v340 = vperm.slane %v336, 3
        %v343 = vrot.slane %v340, 4
        %v344 = vsel %vm287, %v339, %v343
        %v346 = vmul.f32 %v334, %v344
        %347 = vst [vmem:[#allocation1] ss:$2 sm:$0xff] %v266
        %v348 = vld.sshfl [vmem:[#allocation1] sm:$0xff pattern:$0x75316420]
        %v349 = vld.sshfl [vmem:[#allocation1 + $0x8] sm:$0xff pattern:$0x75316420]
        %352 = vrot.lane.b32.xlu0 %v348, 16
        %v353 = vpop.permute.xlu0 %352
        %354 = vrot.lane.b32.xlu0 %v349, 16
        %v355 = vpop.permute.xlu0 %354
        %vm356 = vcmp.lt.s32.totalorder %v278, 16
        %v357 = vsel %vm356, %v353, %v355
        %v358 = vsel %vm356, %v355, %v353
        %s359 = scalar_lea.vmem [#allocation8], 8
        %v360 = vld [vmem:[%s359] sm:$0xff]
        %vm361 = vcmp.ne.f32.partialorder %v360, 0.0
        %v364 = vrot.slane %v357, 4
        %v365 = vsel %vm287, %v358, %v364
        %v367 = vsel %vm361, %v365, 0.0
        %s368 = scalar_lea.vmem [#allocation5], 32
        %v369 = vld [vmem:[%s368] sm:$0xff]
        %v371 = vperm.slane %v367, 0
        %v372 = vperm.slane %v367, 4
        %v375 = vperm.slane %v371, 0
        %v376 = vperm.slane %v372, 0
        %v379 = vrot.slane %v376, 4
        %v380 = vsel %vm287, %v375, %v379
        %v382 = vmul.f32 %v369, %v380
        %v383 = vadd.f32 %v304, %v382
        %s384 = scalar_lea.vmem [#allocation5], 40
        %v385 = vld [vmem:[%s384] sm:$0xff]
        %v386 = vperm.slane %v367, 1
        %v387 = vperm.slane %v367, 5
        %v390 = vperm.slane %v386, 1
        %v391 = vperm.slane %v387, 1
        %v394 = vrot.slane %v391, 4
        %v395 = vsel %vm287, %v390, %v394
        %v397 = vmul.f32 %v385, %v395
        %v398 = vadd.f32 %v318, %v397
        %s399 = scalar_lea.vmem [#allocation5], 48
        %v400 = vld [vmem:[%s399] sm:$0xff]
        %v401 = vperm.slane %v367, 2
        %v402 = vperm.slane %v367, 6
        %v405 = vperm.slane %v401, 2
        %v406 = vperm.slane %v402, 2
        %v409 = vrot.slane %v406, 4
        %v410 = vsel %vm287, %v405, %v409
        %v412 = vmul.f32 %v400, %v410
        %v413 = vadd.f32 %v332, %v412
        %s414 = scalar_lea.vmem [#allocation5], 56
        %v415 = vld [vmem:[%s414] sm:$0xff]
        %v416 = vperm.slane %v367, 3
        %v417 = vperm.slane %v367, 7
        %v420 = vperm.slane %v416, 3
        %v421 = vperm.slane %v417, 3
        %v424 = vrot.slane %v421, 4
        %v425 = vsel %vm287, %v420, %v424
        %v427 = vmul.f32 %v415, %v425
        %v428 = vadd.f32 %v346, %v427
        %429 = vst [vmem:[#allocation1] ss:$2 sm:$0xff] %v266
        %v430 = vld.sshfl [vmem:[#allocation1] sm:$0xff pattern:$0x75316420]
        %v431 = vld.sshfl [vmem:[#allocation1 + $0x8] sm:$0xff pattern:$0x75316420]
        %434 = vrot.lane.b32.xlu0 %v430, 15
        %v435 = vpop.permute.xlu0 %434
        %436 = vrot.lane.b32.xlu0 %v431, 15
        %v437 = vpop.permute.xlu0 %436
        %vm438 = vcmp.lt.s32.totalorder %v278, 15
        %v439 = vsel %vm438, %v435, %v437
        %v440 = vsel %vm438, %v437, %v435
        %s441 = scalar_lea.vmem [#allocation8], 16
        %v442 = vld [vmem:[%s441] sm:$0xff]
        %vm443 = vcmp.ne.f32.partialorder %v442, 0.0
        %v446 = vrot.slane %v439, 4
        %v447 = vsel %vm287, %v440, %v446
        %v449 = vsel %vm443, %v447, 0.0
        %s450 = scalar_lea.vmem [#allocation5], 64
        %v451 = vld [vmem:[%s450] sm:$0xff]
        %v453 = vperm.slane %v449, 0
        %v454 = vperm.slane %v449, 4
        %v457 = vperm.slane %v453, 0
        %v458 = vperm.slane %v454, 0
        %v461 = vrot.slane %v458, 4
        %v462 = vsel %vm287, %v457, %v461
        %v464 = vmul.f32 %v451, %v462
        %v465 = vadd.f32 %v383, %v464
        %s466 = scalar_lea.vmem [#allocation5], 72
        %v467 = vld [vmem:[%s466] sm:$0xff]
        %v468 = vperm.slane %v449, 1
        %v469 = vperm.slane %v449, 5
        %v472 = vperm.slane %v468, 1
        %v473 = vperm.slane %v469, 1
        %v476 = vrot.slane %v473, 4
        %v477 = vsel %vm287, %v472, %v476
        %v479 = vmul.f32 %v467, %v477
        %v480 = vadd.f32 %v398, %v479
        %s481 = scalar_lea.vmem [#allocation5], 80
        %v482 = vld [vmem:[%s481] sm:$0xff]
        %v483 = vperm.slane %v449, 2
        %v484 = vperm.slane %v449, 6
        %v487 = vperm.slane %v483, 2
        %v488 = vperm.slane %v484, 2
        %v491 = vrot.slane %v488, 4
        %v492 = vsel %vm287, %v487, %v491
        %v494 = vmul.f32 %v482, %v492
        %v495 = vadd.f32 %v413, %v494
        %s496 = scalar_lea.vmem [#allocation5], 88
        %v497 = vld [vmem:[%s496] sm:$0xff]
        %v498 = vperm.slane %v449, 3
        %v499 = vperm.slane %v449, 7
        %v502 = vperm.slane %v498, 3
        %v503 = vperm.slane %v499, 3
        %v506 = vrot.slane %v503, 4
        %v507 = vsel %vm287, %v502, %v506
        %v509 = vmul.f32 %v497, %v507
        %v510 = vadd.f32 %v428, %v509
        %511 = vst [vmem:[#allocation1] ss:$2 sm:$0xff] %v266
        %v512 = vld.sshfl [vmem:[#allocation1] sm:$0xff pattern:$0x75316420]
        %v513 = vld.sshfl [vmem:[#allocation1 + $0x8] sm:$0xff pattern:$0x75316420]
        %516 = vrot.lane.b32.xlu0 %v512, 1
        %v517 = vpop.permute.xlu0 %516
        %518 = vrot.lane.b32.xlu0 %v513, 1
        %v519 = vpop.permute.xlu0 %518
        %vm520 = vcmp.lt.s32.totalorder %v278, 1
        %v521 = vsel %vm520, %v517, %v519
        %v522 = vsel %vm520, %v519, %v517
        %s523 = scalar_lea.vmem [#allocation8], 24
        %v524 = vld [vmem:[%s523] sm:$0xff]
        %vm525 = vcmp.ne.f32.partialorder %v524, 0.0
        %v528 = vrot.slane %v521, 4
        %v529 = vsel %vm287, %v522, %v528
        %v531 = vsel %vm525, %v529, 0.0
        %s532 = scalar_lea.vmem [#allocation5], 96
        %v533 = vld [vmem:[%s532] sm:$0xff]
        %v535 = vperm.slane %v531, 0
        %v536 = vperm.slane %v531, 4
        %v539 = vperm.slane %v535, 0
        %v540 = vperm.slane %v536, 0
        %v543 = vrot.slane %v540, 4
        %v544 = vsel %vm287, %v539, %v543
        %v546 = vmul.f32 %v533, %v544
        %v547 = vadd.f32 %v465, %v546
        %s548 = scalar_lea.vmem [#allocation5], 104
        %v549 = vld [vmem:[%s548] sm:$0xff]
        %v550 = vperm.slane %v531, 1
        %v551 = vperm.slane %v531, 5
        %v554 = vperm.slane %v550, 1
        %v555 = vperm.slane %v551, 1
        %v558 = vrot.slane %v555, 4
        %v559 = vsel %vm287, %v554, %v558
        %v561 = vmul.f32 %v549, %v559
        %v562 = vadd.f32 %v480, %v561
        %s563 = scalar_lea.vmem [#allocation5], 112
        %v564 = vld [vmem:[%s563] sm:$0xff]
        %v565 = vperm.slane %v531, 2
        %v566 = vperm.slane %v531, 6
        %v569 = vperm.slane %v565, 2
        %v570 = vperm.slane %v566, 2
        %v573 = vrot.slane %v570, 4
        %v574 = vsel %vm287, %v569, %v573
        %v576 = vmul.f32 %v564, %v574
        %v577 = vadd.f32 %v495, %v576
        %s578 = scalar_lea.vmem [#allocation5], 120
        %v579 = vld [vmem:[%s578] sm:$0xff]
        %v580 = vperm.slane %v531, 3
        %v581 = vperm.slane %v531, 7
        %v584 = vperm.slane %v580, 3
        %v585 = vperm.slane %v581, 3
        %v588 = vrot.slane %v585, 4
        %v589 = vsel %vm287, %v584, %v588
        %v591 = vmul.f32 %v579, %v589
        %v592 = vadd.f32 %v510, %v591
        %s593 = scalar_lea.vmem [#allocation5], 128
        %v594 = vld [vmem:[%s593] sm:$0xff]
        %v595 = vperm.slane %v266, 0
        %v596 = vperm.slane %v266, 4
        %v599 = vperm.slane %v595, 0
        %v600 = vperm.slane %v596, 0
        %v603 = vrot.slane %v600, 4
        %v604 = vsel %vm287, %v599, %v603
        %v606 = vmul.f32 %v594, %v604
        %v607 = vadd.f32 %v547, %v606
        %s608 = scalar_lea.vmem [#allocation5], 136
        %v609 = vld [vmem:[%s608] sm:$0xff]
        %v610 = vperm.slane %v266, 1
        %v611 = vperm.slane %v266, 5
        %v614 = vperm.slane %v610, 1
        %v615 = vperm.slane %v611, 1
        %v618 = vrot.slane %v615, 4
        %v619 = vsel %vm287, %v614, %v618
        %v621 = vmul.f32 %v609, %v619
        %v622 = vadd.f32 %v562, %v621
        %s623 = scalar_lea.vmem [#allocation5], 144
        %v624 = vld [vmem:[%s623] sm:$0xff]
        %v625 = vperm.slane %v266, 2
        %v626 = vperm.slane %v266, 6
        %v629 = vperm.slane %v625, 2
        %v630 = vperm.slane %v626, 2
        %v633 = vrot.slane %v630, 4
        %v634 = vsel %vm287, %v629, %v633
        %v636 = vmul.f32 %v624, %v634
        %v637 = vadd.f32 %v577, %v636
        %s638 = scalar_lea.vmem [#allocation5], 152
        %v639 = vld [vmem:[%s638] sm:$0xff]
        %v640 = vperm.slane %v266, 3
        %v641 = vperm.slane %v266, 7
        %v644 = vperm.slane %v640, 3
        %v645 = vperm.slane %v641, 3
        %v648 = vrot.slane %v645, 4
        %v649 = vsel %vm287, %v644, %v648
        %v651 = vmul.f32 %v639, %v649
        %v652 = vadd.f32 %v592, %v651
        %653 = vst [vmem:[#allocation1] ss:$2 sm:$0xff] %v266
        %v654 = vld.sshfl [vmem:[#allocation1] sm:$0xff pattern:$0x75316420]
        %v655 = vld.sshfl [vmem:[#allocation1 + $0x8] sm:$0xff pattern:$0x75316420]
        %658 = vrot.lane.b32.xlu0 %v654, 127
        %v659 = vpop.permute.xlu0 %658
        %660 = vrot.lane.b32.xlu0 %v655, 127
        %v661 = vpop.permute.xlu0 %660
        %vm662 = vcmp.lt.s32.totalorder %v278, 127
        %v663 = vsel %vm662, %v659, %v661
        %v664 = vsel %vm662, %v661, %v659
        %s665 = scalar_lea.vmem [#allocation8], 40
        %v666 = vld [vmem:[%s665] sm:$0xff]
        %vm667 = vcmp.ne.f32.partialorder %v666, 0.0
        %v670 = vrot.slane %v664, 4
        %v671 = vsel %vm287, %v663, %v670
        %v673 = vsel %vm667, %v671, 0.0
        %s674 = scalar_lea.vmem [#allocation5], 160
        %v675 = vld [vmem:[%s674] sm:$0xff]
        %v677 = vperm.slane %v673, 0
        %v678 = vperm.slane %v673, 4
        %v681 = vperm.slane %v677, 0
        %v682 = vperm.slane %v678, 0
        %v685 = vrot.slane %v682, 4
        %v686 = vsel %vm287, %v681, %v685
        %v688 = vmul.f32 %v675, %v686
        %v689 = vadd.f32 %v607, %v688
        %s690 = scalar_lea.vmem [#allocation5], 168
        %v691 = vld [vmem:[%s690] sm:$0xff]
        %v692 = vperm.slane %v673, 1
        %v693 = vperm.slane %v673, 5
        %v696 = vperm.slane %v692, 1
        %v697 = vperm.slane %v693, 1
        %v700 = vrot.slane %v697, 4
        %v701 = vsel %vm287, %v696, %v700
        %v703 = vmul.f32 %v691, %v701
        %v704 = vadd.f32 %v622, %v703
        %s705 = scalar_lea.vmem [#allocation5], 176
        %v706 = vld [vmem:[%s705] sm:$0xff]
        %v707 = vperm.slane %v673, 2
        %v708 = vperm.slane %v673, 6
        %v711 = vperm.slane %v707, 2
        %v712 = vperm.slane %v708, 2
        %v715 = vrot.slane %v712, 4
        %v716 = vsel %vm287, %v711, %v715
        %v718 = vmul.f32 %v706, %v716
        %v719 = vadd.f32 %v637, %v718
        %s720 = scalar_lea.vmem [#allocation5], 184
        %v721 = vld [vmem:[%s720] sm:$0xff]
        %v722 = vperm.slane %v673, 3
        %v723 = vperm.slane %v673, 7
        %v726 = vperm.slane %v722, 3
        %v727 = vperm.slane %v723, 3
        %v730 = vrot.slane %v727, 4
        %v731 = vsel %vm287, %v726, %v730
        %v733 = vmul.f32 %v721, %v731
        %v734 = vadd.f32 %v652, %v733
        %735 = vst [vmem:[#allocation1] ss:$2 sm:$0xff] %v266
        %v736 = vld.sshfl [vmem:[#allocation1] sm:$0xff pattern:$0x75316420]
        %v737 = vld.sshfl [vmem:[#allocation1 + $0x8] sm:$0xff pattern:$0x75316420]
        %740 = vrot.lane.b32.xlu0 %v736, 113
        %v741 = vpop.permute.xlu0 %740
        %742 = vrot.lane.b32.xlu0 %v737, 113
        %v743 = vpop.permute.xlu0 %742
        %vm744 = vcmp.lt.s32.totalorder %v278, 113
        %v745 = vsel %vm744, %v741, %v743
        %v746 = vsel %vm744, %v743, %v741
        %s747 = scalar_lea.vmem [#allocation8], 48
        %v748 = vld [vmem:[%s747] sm:$0xff]
        %vm749 = vcmp.ne.f32.partialorder %v748, 0.0
        %v752 = vrot.slane %v746, 4
        %v753 = vsel %vm287, %v745, %v752
        %v755 = vsel %vm749, %v753, 0.0
        %s756 = scalar_lea.vmem [#allocation5], 192
        %v757 = vld [vmem:[%s756] sm:$0xff]
        %v759 = vperm.slane %v755, 0
        %v760 = vperm.slane %v755, 4
        %v763 = vperm.slane %v759, 0
        %v764 = vperm.slane %v760, 0
        %v767 = vrot.slane %v764, 4
        %v768 = vsel %vm287, %v763, %v767
        %v770 = vmul.f32 %v757, %v768
        %v771 = vadd.f32 %v689, %v770
        %s772 = scalar_lea.vmem [#allocation5], 200
        %v773 = vld [vmem:[%s772] sm:$0xff]
        %v774 = vperm.slane %v755, 1
        %v775 = vperm.slane %v755, 5
        %v778 = vperm.slane %v774, 1
        %v779 = vperm.slane %v775, 1
        %v782 = vrot.slane %v779, 4
        %v783 = vsel %vm287, %v778, %v782
        %v785 = vmul.f32 %v773, %v783
        %v786 = vadd.f32 %v704, %v785
        %s787 = scalar_lea.vmem [#allocation5], 208
        %v788 = vld [vmem:[%s787] sm:$0xff]
        %v789 = vperm.slane %v755, 2
        %v790 = vperm.slane %v755, 6
        %v793 = vperm.slane %v789, 2
        %v794 = vperm.slane %v790, 2
        %v797 = vrot.slane %v794, 4
        %v798 = vsel %vm287, %v793, %v797
        %v800 = vmul.f32 %v788, %v798
        %v801 = vadd.f32 %v719, %v800
        %s802 = scalar_lea.vmem [#allocation5], 216
        %v803 = vld [vmem:[%s802] sm:$0xff]
        %v804 = vperm.slane %v755, 3
        %v805 = vperm.slane %v755, 7
        %v808 = vperm.slane %v804, 3
        %v809 = vperm.slane %v805, 3
        %v812 = vrot.slane %v809, 4
        %v813 = vsel %vm287, %v808, %v812
        %v815 = vmul.f32 %v803, %v813
        %v816 = vadd.f32 %v734, %v815
        %817 = vst [vmem:[#allocation1] ss:$2 sm:$0xff] %v266
        %v818 = vld.sshfl [vmem:[#allocation1] sm:$0xff pattern:$0x75316420]
        %v819 = vld.sshfl [vmem:[#allocation1 + $0x8] sm:$0xff pattern:$0x75316420]
        %822 = vrot.lane.b32.xlu0 %v818, 112
        %v823 = vpop.permute.xlu0 %822
        %824 = vrot.lane.b32.xlu0 %v819, 112
        %v825 = vpop.permute.xlu0 %824
        %vm826 = vcmp.lt.s32.totalorder %v278, 112
        %v827 = vsel %vm826, %v823, %v825
        %v828 = vsel %vm826, %v825, %v823
        %s829 = scalar_lea.vmem [#allocation8], 56
        %v830 = vld [vmem:[%s829] sm:$0xff]
        %vm831 = vcmp.ne.f32.partialorder %v830, 0.0
        %v834 = vrot.slane %v828, 4
        %v835 = vsel %vm287, %v827, %v834
        %v837 = vsel %vm831, %v835, 0.0
        %s838 = scalar_lea.vmem [#allocation5], 224
        %v839 = vld [vmem:[%s838] sm:$0xff]
        %v841 = vperm.slane %v837, 0
        %v842 = vperm.slane %v837, 4
        %v845 = vperm.slane %v841, 0
        %v846 = vperm.slane %v842, 0
        %v849 = vrot.slane %v846, 4
        %v850 = vsel %vm287, %v845, %v849
        %v852 = vmul.f32 %v839, %v850
        %v853 = vadd.f32 %v771, %v852
        %s854 = scalar_lea.vmem [#allocation5], 232
        %v855 = vld [vmem:[%s854] sm:$0xff]
        %v856 = vperm.slane %v837, 1
        %v857 = vperm.slane %v837, 5
        %v860 = vperm.slane %v856, 1
        %v861 = vperm.slane %v857, 1
        %v864 = vrot.slane %v861, 4
        %v865 = vsel %vm287, %v860, %v864
        %v867 = vmul.f32 %v855, %v865
        %v868 = vadd.f32 %v786, %v867
        %s869 = scalar_lea.vmem [#allocation5], 240
        %v870 = vld [vmem:[%s869] sm:$0xff]
        %v871 = vperm.slane %v837, 2
        %v872 = vperm.slane %v837, 6
        %v875 = vperm.slane %v871, 2
        %v876 = vperm.slane %v872, 2
        %v879 = vrot.slane %v876, 4
        %v880 = vsel %vm287, %v875, %v879
        %v882 = vmul.f32 %v870, %v880
        %v883 = vadd.f32 %v801, %v882
        %s884 = scalar_lea.vmem [#allocation5], 248
        %v885 = vld [vmem:[%s884] sm:$0xff]
        %v886 = vperm.slane %v837, 3
        %v887 = vperm.slane %v837, 7
        %v890 = vperm.slane %v886, 3
        %v891 = vperm.slane %v887, 3
        %v894 = vrot.slane %v891, 4
        %v895 = vsel %vm287, %v890, %v894
        %v897 = vmul.f32 %v885, %v895
        %v898 = vadd.f32 %v816, %v897
        %899 = vst [vmem:[#allocation1] ss:$2 sm:$0xff] %v266
        %v900 = vld.sshfl [vmem:[#allocation1] sm:$0xff pattern:$0x75316420]
        %v901 = vld.sshfl [vmem:[#allocation1 + $0x8] sm:$0xff pattern:$0x75316420]
        %904 = vrot.lane.b32.xlu0 %v900, 111
        %v905 = vpop.permute.xlu0 %904
        %906 = vrot.lane.b32.xlu0 %v901, 111
        %v907 = vpop.permute.xlu0 %906
        %vm908 = vcmp.lt.s32.totalorder %v278, 111
        %v909 = vsel %vm908, %v905, %v907
        %v910 = vsel %vm908, %v907, %v905
        %s911 = scalar_lea.vmem [#allocation8], 64
        %v912 = vld [vmem:[%s911] sm:$0xff]
        %vm913 = vcmp.ne.f32.partialorder %v912, 0.0
        %v916 = vrot.slane %v910, 4
        %v917 = vsel %vm287, %v909, %v916
        %v919 = vsel %vm913, %v917, 0.0
        %s920 = scalar_lea.vmem [#allocation5], 256
        %v921 = vld [vmem:[%s920] sm:$0xff]
        %v923 = vperm.slane %v919, 0
        %v924 = vperm.slane %v919, 4
        %v927 = vperm.slane %v923, 0
        %v928 = vperm.slane %v924, 0
        %v931 = vrot.slane %v928, 4
        %v932 = vsel %vm287, %v927, %v931
        %v934 = vmul.f32 %v921, %v932
        %v935 = vadd.f32 %v853, %v934
        %s936 = scalar_lea.vmem [#allocation5], 264
        %v937 = vld [vmem:[%s936] sm:$0xff]
        %v938 = vperm.slane %v919, 1
        %v939 = vperm.slane %v919, 5
        %v942 = vperm.slane %v938, 1
        %v943 = vperm.slane %v939, 1
        %v946 = vrot.slane %v943, 4
        %v947 = vsel %vm287, %v942, %v946
        %v949 = vmul.f32 %v937, %v947
        %v950 = vadd.f32 %v868, %v949
        %s951 = scalar_lea.vmem [#allocation5], 272
        %v952 = vld [vmem:[%s951] sm:$0xff]
        %v953 = vperm.slane %v919, 2
        %v954 = vperm.slane %v919, 6
        %v957 = vperm.slane %v953, 2
        %v958 = vperm.slane %v954, 2
        %v961 = vrot.slane %v958, 4
        %v962 = vsel %vm287, %v957, %v961
        %v964 = vmul.f32 %v952, %v962
        %v965 = vadd.f32 %v883, %v964
        %s966 = scalar_lea.vmem [#allocation5], 280
        %v967 = vld [vmem:[%s966] sm:$0xff]
        %v968 = vperm.slane %v919, 3
        %v969 = vperm.slane %v919, 7
        %v972 = vperm.slane %v968, 3
        %v973 = vperm.slane %v969, 3
        %v976 = vrot.slane %v973, 4
        %v977 = vsel %vm287, %v972, %v976
        %v979 = vmul.f32 %v967, %v977
        %v980 = vadd.f32 %v898, %v979
        %v981 = vld [vmem:[#allocation7] sm:$0xff]
        %v982 = vadd.f32 %v981, %v935
        %v983 = vadd.f32 %v982, %v950
        %v984 = vadd.f32 %v983, %v965
        %v985 = vadd.f32 %v984, %v980
        %v986 = vmax.f32 %v985, 0.0
        %988 = vst [vmem:[#allocation1] ss:$2 sm:$0xff] %v986
        %v989 = vld.sshfl [vmem:[#allocation1] sm:$0xff pattern:$0x75316420]
        %v990 = vld.sshfl [vmem:[#allocation1 + $0x8] sm:$0xff pattern:$0x75316420]
        %993 = vrot.lane.b32.xlu0 %v989, 17
        %v994 = vpop.permute.xlu0 %993
        %995 = vrot.lane.b32.xlu0 %v990, 17
        %v996 = vpop.permute.xlu0 %995
        %v997 = vsel %vm279, %v994, %v996
        %v998 = vsel %vm279, %v996, %v994
        %v1001 = vrot.slane %v997, 4
        %v1002 = vsel %vm287, %v998, %v1001
        %v1004 = vsel %vm283, %v1002, 0.0
        %s1005 = scalar_lea.vmem [#allocation5], 288
        %v1006 = vld [vmem:[%s1005] sm:$0xff]
        %v1008 = vperm.slane %v1004, 0
        %v1009 = vperm.slane %v1004, 4
        %v1012 = vperm.slane %v1008, 0
        %v1013 = vperm.slane %v1009, 0
        %v1016 = vrot.slane %v1013, 4
        %v1017 = vsel %vm287, %v1012, %v1016
        %v1019 = vmul.f32 %v1006, %v1017
        %s1020 = scalar_lea.vmem [#allocation5], 296
        %v1021 = vld [vmem:[%s1020] sm:$0xff]
        %v1022 = vperm.slane %v1004, 1
        %v1023 = vperm.slane %v1004, 5
        %v1026 = vperm.slane %v1022, 1
        %v1027 = vperm.slane %v1023, 1
        %v1030 = vrot.slane %v1027, 4
        %v1031 = vsel %vm287, %v1026, %v1030
        %v1033 = vmul.f32 %v1021, %v1031
        %s1034 = scalar_lea.vmem [#allocation5], 304
        %v1035 = vld [vmem:[%s1034] sm:$0xff]
        %v1036 = vperm.slane %v1004, 2
        %v1037 = vperm.slane %v1004, 6
        %v1040 = vperm.slane %v1036, 2
        %v1041 = vperm.slane %v1037, 2
        %v1044 = vrot.slane %v1041, 4
        %v1045 = vsel %vm287, %v1040, %v1044
        %v1047 = vmul.f32 %v1035, %v1045
        %s1048 = scalar_lea.vmem [#allocation5], 312
        %v1049 = vld [vmem:[%s1048] sm:$0xff]
        %v1050 = vperm.slane %v1004, 3
        %v1051 = vperm.slane %v1004, 7
        %v1054 = vperm.slane %v1050, 3
        %v1055 = vperm.slane %v1051, 3
        %v1058 = vrot.slane %v1055, 4
        %v1059 = vsel %vm287, %v1054, %v1058
        %v1061 = vmul.f32 %v1049, %v1059
        %1062 = vst [vmem:[#allocation1] ss:$2 sm:$0xff] %v986
        %v1063 = vld.sshfl [vmem:[#allocation1] sm:$0xff pattern:$0x75316420]
        %v1064 = vld.sshfl [vmem:[#allocation1 + $0x8] sm:$0xff pattern:$0x75316420]
        %1067 = vrot.lane.b32.xlu0 %v1063, 16
        %v1068 = vpop.permute.xlu0 %1067
        %1069 = vrot.lane.b32.xlu0 %v1064, 16
        %v1070 = vpop.permute.xlu0 %1069
        %v1071 = vsel %vm356, %v1068, %v1070
        %v1072 = vsel %vm356, %v1070, %v1068
        %v1075 = vrot.slane %v1071, 4
        %v1076 = vsel %vm287, %v1072, %v1075
        %v1078 = vsel %vm361, %v1076, 0.0
        %s1079 = scalar_lea.vmem [#allocation5], 320
        %v1080 = vld [vmem:[%s1079] sm:$0xff]
        %v1082 = vperm.slane %v1078, 0
        %v1083 = vperm.slane %v1078, 4
        %v1086 = vperm.slane %v1082, 0
        %v1087 = vperm.slane %v1083, 0
        %v1090 = vrot.slane %v1087, 4
        %v1091 = vsel %vm287, %v1086, %v1090
        %v1093 = vmul.f32 %v1080, %v1091
        %v1094 = vadd.f32 %v1019, %v1093
        %s1095 = scalar_lea.vmem [#allocation5], 328
        %v1096 = vld [vmem:[%s1095] sm:$0xff]
        %v1097 = vperm.slane %v1078, 1
        %v1098 = vperm.slane %v1078, 5
        %v1101 = vperm.slane %v1097, 1
        %v1102 = vperm.slane %v1098, 1
        %v1105 = vrot.slane %v1102, 4
        %v1106 = vsel %vm287, %v1101, %v1105
        %v1108 = vmul.f32 %v1096, %v1106
        %v1109 = vadd.f32 %v1033, %v1108
        %s1110 = scalar_lea.vmem [#allocation5], 336
        %v1111 = vld [vmem:[%s1110] sm:$0xff]
        %v1112 = vperm.slane %v1078, 2
        %v1113 = vperm.slane %v1078, 6
        %v1116 = vperm.slane %v1112, 2
        %v1117 = vperm.slane %v1113, 2
        %v1120 = vrot.slane %v1117, 4
        %v1121 = vsel %vm287, %v1116, %v1120
        %v1123 = vmul.f32 %v1111, %v1121
        %v1124 = vadd.f32 %v1047, %v1123
        %s1125 = scalar_lea.vmem [#allocation5], 344
        %v1126 = vld [vmem:[%s1125] sm:$0xff]
        %v1127 = vperm.slane %v1078, 3
        %v1128 = vperm.slane %v1078, 7
        %v1131 = vperm.slane %v1127, 3
        %v1132 = vperm.slane %v1128, 3
        %v1135 = vrot.slane %v1132, 4
        %v1136 = vsel %vm287, %v1131, %v1135
        %v1138 = vmul.f32 %v1126, %v1136
        %v1139 = vadd.f32 %v1061, %v1138
        %1140 = vst [vmem:[#allocation1] ss:$2 sm:$0xff] %v986
        %v1141 = vld.sshfl [vmem:[#allocation1] sm:$0xff pattern:$0x75316420]
        %v1142 = vld.sshfl [vmem:[#allocation1 + $0x8] sm:$0xff pattern:$0x75316420]
        %1145 = vrot.lane.b32.xlu0 %v1141, 15
        %v1146 = vpop.permute.xlu0 %1145
        %1147 = vrot.lane.b32.xlu0 %v1142, 15
        %v1148 = vpop.permute.xlu0 %1147
        %v1149 = vsel %vm438, %v1146, %v1148
        %v1150 = vsel %vm438, %v1148, %v1146
        %v1153 = vrot.slane %v1149, 4
        %v1154 = vsel %vm287, %v1150, %v1153
        %v1156 = vsel %vm443, %v1154, 0.0
        %s1157 = scalar_lea.vmem [#allocation5], 352
        %v1158 = vld [vmem:[%s1157] sm:$0xff]
        %v1160 = vperm.slane %v1156, 0
        %v1161 = vperm.slane %v1156, 4
        %v1164 = vperm.slane %v1160, 0
        %v1165 = vperm.slane %v1161, 0
        %v1168 = vrot.slane %v1165, 4
        %v1169 = vsel %vm287, %v1164, %v1168
        %v1171 = vmul.f32 %v1158, %v1169
        %v1172 = vadd.f32 %v1094, %v1171
        %s1173 = scalar_lea.vmem [#allocation5], 360
        %v1174 = vld [vmem:[%s1173] sm:$0xff]
        %v1175 = vperm.slane %v1156, 1
        %v1176 = vperm.slane %v1156, 5
        %v1179 = vperm.slane %v1175, 1
        %v1180 = vperm.slane %v1176, 1
        %v1183 = vrot.slane %v1180, 4
        %v1184 = vsel %vm287, %v1179, %v1183
        %v1186 = vmul.f32 %v1174, %v1184
        %v1187 = vadd.f32 %v1109, %v1186
        %s1188 = scalar_lea.vmem [#allocation5], 368
        %v1189 = vld [vmem:[%s1188] sm:$0xff]
        %v1190 = vperm.slane %v1156, 2
        %v1191 = vperm.slane %v1156, 6
        %v1194 = vperm.slane %v1190, 2
        %v1195 = vperm.slane %v1191, 2
        %v1198 = vrot.slane %v1195, 4
        %v1199 = vsel %vm287, %v1194, %v1198
        %v1201 = vmul.f32 %v1189, %v1199
        %v1202 = vadd.f32 %v1124, %v1201
        %s1203 = scalar_lea.vmem [#allocation5], 376
        %v1204 = vld [vmem:[%s1203] sm:$0xff]
        %v1205 = vperm.slane %v1156, 3
        %v1206 = vperm.slane %v1156, 7
        %v1209 = vperm.slane %v1205, 3
        %v1210 = vperm.slane %v1206, 3
        %v1213 = vrot.slane %v1210, 4
        %v1214 = vsel %vm287, %v1209, %v1213
        %v1216 = vmul.f32 %v1204, %v1214
        %v1217 = vadd.f32 %v1139, %v1216
        %1218 = vst [vmem:[#allocation1] ss:$2 sm:$0xff] %v986
        %v1219 = vld.sshfl [vmem:[#allocation1] sm:$0xff pattern:$0x75316420]
        %v1220 = vld.sshfl [vmem:[#allocation1 + $0x8] sm:$0xff pattern:$0x75316420]
        %1223 = vrot.lane.b32.xlu0 %v1219, 1
        %v1224 = vpop.permute.xlu0 %1223
        %1225 = vrot.lane.b32.xlu0 %v1220, 1
        %v1226 = vpop.permute.xlu0 %1225
        %v1227 = vsel %vm520, %v1224, %v1226
        %v1228 = vsel %vm520, %v1226, %v1224
        %v1231 = vrot.slane %v1227, 4
        %v1232 = vsel %vm287, %v1228, %v1231
        %v1234 = vsel %vm525, %v1232, 0.0
        %s1235 = scalar_lea.vmem [#allocation5], 384
        %v1236 = vld [vmem:[%s1235] sm:$0xff]
        %v1238 = vperm.slane %v1234, 0
        %v1239 = vperm.slane %v1234, 4
        %v1242 = vperm.slane %v1238, 0
        %v1243 = vperm.slane %v1239, 0
        %v1246 = vrot.slane %v1243, 4
        %v1247 = vsel %vm287, %v1242, %v1246
        %v1249 = vmul.f32 %v1236, %v1247
        %v1250 = vadd.f32 %v1172, %v1249
        %s1251 = scalar_lea.vmem [#allocation5], 392
        %v1252 = vld [vmem:[%s1251] sm:$0xff]
        %v1253 = vperm.slane %v1234, 1
        %v1254 = vperm.slane %v1234, 5
        %v1257 = vperm.slane %v1253, 1
        %v1258 = vperm.slane %v1254, 1
        %v1261 = vrot.slane %v1258, 4
        %v1262 = vsel %vm287, %v1257, %v1261
        %v1264 = vmul.f32 %v1252, %v1262
        %v1265 = vadd.f32 %v1187, %v1264
        %s1266 = scalar_lea.vmem [#allocation5], 400
        %v1267 = vld [vmem:[%s1266] sm:$0xff]
        %v1268 = vperm.slane %v1234, 2
        %v1269 = vperm.slane %v1234, 6
        %v1272 = vperm.slane %v1268, 2
        %v1273 = vperm.slane %v1269, 2
        %v1276 = vrot.slane %v1273, 4
        %v1277 = vsel %vm287, %v1272, %v1276
        %v1279 = vmul.f32 %v1267, %v1277
        %v1280 = vadd.f32 %v1202, %v1279
        %s1281 = scalar_lea.vmem [#allocation5], 408
        %v1282 = vld [vmem:[%s1281] sm:$0xff]
        %v1283 = vperm.slane %v1234, 3
        %v1284 = vperm.slane %v1234, 7
        %v1287 = vperm.slane %v1283, 3
        %v1288 = vperm.slane %v1284, 3
        %v1291 = vrot.slane %v1288, 4
        %v1292 = vsel %vm287, %v1287, %v1291
        %v1294 = vmul.f32 %v1282, %v1292
        %v1295 = vadd.f32 %v1217, %v1294
        %s1296 = scalar_lea.vmem [#allocation5], 416
        %v1297 = vld [vmem:[%s1296] sm:$0xff]
        %v1298 = vperm.slane %v986, 0
        %v1299 = vperm.slane %v986, 4
        %v1302 = vperm.slane %v1298, 0
        %v1303 = vperm.slane %v1299, 0
        %v1306 = vrot.slane %v1303, 4
        %v1307 = vsel %vm287, %v1302, %v1306
        %v1309 = vmul.f32 %v1297, %v1307
        %v1310 = vadd.f32 %v1250, %v1309
        %s1311 = scalar_lea.vmem [#allocation5], 424
        %v1312 = vld [vmem:[%s1311] sm:$0xff]
        %v1313 = vperm.slane %v986, 1
        %v1314 = vperm.slane %v986, 5
        %v1317 = vperm.slane %v1313, 1
        %v1318 = vperm.slane %v1314, 1
        %v1321 = vrot.slane %v1318, 4
        %v1322 = vsel %vm287, %v1317, %v1321
        %v1324 = vmul.f32 %v1312, %v1322
        %v1325 = vadd.f32 %v1265, %v1324
        %s1326 = scalar_lea.vmem [#allocation5], 432
        %v1327 = vld [vmem:[%s1326] sm:$0xff]
        %v1328 = vperm.slane %v986, 2
        %v1329 = vperm.slane %v986, 6
        %v1332 = vperm.slane %v1328, 2
        %v1333 = vperm.slane %v1329, 2
        %v1336 = vrot.slane %v1333, 4
        %v1337 = vsel %vm287, %v1332, %v1336
        %v1339 = vmul.f32 %v1327, %v1337
        %v1340 = vadd.f32 %v1280, %v1339
        %s1341 = scalar_lea.vmem [#allocation5], 440
        %v1342 = vld [vmem:[%s1341] sm:$0xff]
        %v1343 = vperm.slane %v986, 3
        %v1344 = vperm.slane %v986, 7
        %v1347 = vperm.slane %v1343, 3
        %v1348 = vperm.slane %v1344, 3
        %v1351 = vrot.slane %v1348, 4
        %v1352 = vsel %vm287, %v1347, %v1351
        %v1354 = vmul.f32 %v1342, %v1352
        %v1355 = vadd.f32 %v1295, %v1354
        %1356 = vst [vmem:[#allocation1] ss:$2 sm:$0xff] %v986
        %v1357 = vld.sshfl [vmem:[#allocation1] sm:$0xff pattern:$0x75316420]
        %v1358 = vld.sshfl [vmem:[#allocation1 + $0x8] sm:$0xff pattern:$0x75316420]
        %1361 = vrot.lane.b32.xlu0 %v1357, 127
        %v1362 = vpop.permute.xlu0 %1361
        %1363 = vrot.lane.b32.xlu0 %v1358, 127
        %v1364 = vpop.permute.xlu0 %1363
        %v1365 = vsel %vm662, %v1362, %v1364
        %v1366 = vsel %vm662, %v1364, %v1362
        %v1369 = vrot.slane %v1366, 4
        %v1370 = vsel %vm287, %v1365, %v1369
        %v1372 = vsel %vm667, %v1370, 0.0
        %s1373 = scalar_lea.vmem [#allocation5], 448
        %v1374 = vld [vmem:[%s1373] sm:$0xff]
        %v1376 = vperm.slane %v1372, 0
        %v1377 = vperm.slane %v1372, 4
        %v1380 = vperm.slane %v1376, 0
        %v1381 = vperm.slane %v1377, 0
        %v1384 = vrot.slane %v1381, 4
        %v1385 = vsel %vm287, %v1380, %v1384
        %v1387 = vmul.f32 %v1374, %v1385
        %v1388 = vadd.f32 %v1310, %v1387
        %s1389 = scalar_lea.vmem [#allocation5], 456
        %v1390 = vld [vmem:[%s1389] sm:$0xff]
        %v1391 = vperm.slane %v1372, 1
        %v1392 = vperm.slane %v1372, 5
        %v1395 = vperm.slane %v1391, 1
        %v1396 = vperm.slane %v1392, 1
        %v1399 = vrot.slane %v1396, 4
        %v1400 = vsel %vm287, %v1395, %v1399
        %v1402 = vmul.f32 %v1390, %v1400
        %v1403 = vadd.f32 %v1325, %v1402
        %s1404 = scalar_lea.vmem [#allocation5], 464
        %v1405 = vld [vmem:[%s1404] sm:$0xff]
        %v1406 = vperm.slane %v1372, 2
        %v1407 = vperm.slane %v1372, 6
        %v1410 = vperm.slane %v1406, 2
        %v1411 = vperm.slane %v1407, 2
        %v1414 = vrot.slane %v1411, 4
        %v1415 = vsel %vm287, %v1410, %v1414
        %v1417 = vmul.f32 %v1405, %v1415
        %v1418 = vadd.f32 %v1340, %v1417
        %s1419 = scalar_lea.vmem [#allocation5], 472
        %v1420 = vld [vmem:[%s1419] sm:$0xff]
        %v1421 = vperm.slane %v1372, 3
        %v1422 = vperm.slane %v1372, 7
        %v1425 = vperm.slane %v1421, 3
        %v1426 = vperm.slane %v1422, 3
        %v1429 = vrot.slane %v1426, 4
        %v1430 = vsel %vm287, %v1425, %v1429
        %v1432 = vmul.f32 %v1420, %v1430
        %v1433 = vadd.f32 %v1355, %v1432
        %1434 = vst [vmem:[#allocation1] ss:$2 sm:$0xff] %v986
        %v1435 = vld.sshfl [vmem:[#allocation1] sm:$0xff pattern:$0x75316420]
        %v1436 = vld.sshfl [vmem:[#allocation1 + $0x8] sm:$0xff pattern:$0x75316420]
        %1439 = vrot.lane.b32.xlu0 %v1435, 113
        %v1440 = vpop.permute.xlu0 %1439
        %1441 = vrot.lane.b32.xlu0 %v1436, 113
        %v1442 = vpop.permute.xlu0 %1441
        %v1443 = vsel %vm744, %v1440, %v1442
        %v1444 = vsel %vm744, %v1442, %v1440
        %v1447 = vrot.slane %v1444, 4
        %v1448 = vsel %vm287, %v1443, %v1447
        %v1450 = vsel %vm749, %v1448, 0.0
        %s1451 = scalar_lea.vmem [#allocation5], 480
        %v1452 = vld [vmem:[%s1451] sm:$0xff]
        %v1454 = vperm.slane %v1450, 0
        %v1455 = vperm.slane %v1450, 4
        %v1458 = vperm.slane %v1454, 0
        %v1459 = vperm.slane %v1455, 0
        %v1462 = vrot.slane %v1459, 4
        %v1463 = vsel %vm287, %v1458, %v1462
        %v1465 = vmul.f32 %v1452, %v1463
        %v1466 = vadd.f32 %v1388, %v1465
        %s1467 = scalar_lea.vmem [#allocation5], 488
        %v1468 = vld [vmem:[%s1467] sm:$0xff]
        %v1469 = vperm.slane %v1450, 1
        %v1470 = vperm.slane %v1450, 5
        %v1473 = vperm.slane %v1469, 1
        %v1474 = vperm.slane %v1470, 1
        %v1477 = vrot.slane %v1474, 4
        %v1478 = vsel %vm287, %v1473, %v1477
        %v1480 = vmul.f32 %v1468, %v1478
        %v1481 = vadd.f32 %v1403, %v1480
        %s1482 = scalar_lea.vmem [#allocation5], 496
        %v1483 = vld [vmem:[%s1482] sm:$0xff]
        %v1484 = vperm.slane %v1450, 2
        %v1485 = vperm.slane %v1450, 6
        %v1488 = vperm.slane %v1484, 2
        %v1489 = vperm.slane %v1485, 2
        %v1492 = vrot.slane %v1489, 4
        %v1493 = vsel %vm287, %v1488, %v1492
        %v1495 = vmul.f32 %v1483, %v1493
        %v1496 = vadd.f32 %v1418, %v1495
        %s1497 = scalar_lea.vmem [#allocation5], 504
        %v1498 = vld [vmem:[%s1497] sm:$0xff]
        %v1499 = vperm.slane %v1450, 3
        %v1500 = vperm.slane %v1450, 7
        %v1503 = vperm.slane %v1499, 3
        %v1504 = vperm.slane %v1500, 3
        %v1507 = vrot.slane %v1504, 4
        %v1508 = vsel %vm287, %v1503, %v1507
        %v1510 = vmul.f32 %v1498, %v1508
        %v1511 = vadd.f32 %v1433, %v1510
        %1512 = vst [vmem:[#allocation1] ss:$2 sm:$0xff] %v986
        %v1513 = vld.sshfl [vmem:[#allocation1] sm:$0xff pattern:$0x75316420]
        %v1514 = vld.sshfl [vmem:[#allocation1 + $0x8] sm:$0xff pattern:$0x75316420]
        %1517 = vrot.lane.b32.xlu0 %v1513, 112
        %v1518 = vpop.permute.xlu0 %1517
        %1519 = vrot.lane.b32.xlu0 %v1514, 112
        %v1520 = vpop.permute.xlu0 %1519
        %v1521 = vsel %vm826, %v1518, %v1520
        %v1522 = vsel %vm826, %v1520, %v1518
        %v1525 = vrot.slane %v1522, 4
        %v1526 = vsel %vm287, %v1521, %v1525
        %v1528 = vsel %vm831, %v1526, 0.0
        %s1529 = scalar_lea.vmem [#allocation5], 512
        %v1530 = vld [vmem:[%s1529] sm:$0xff]
        %v1532 = vperm.slane %v1528, 0
        %v1533 = vperm.slane %v1528, 4
        %v1536 = vperm.slane %v1532, 0
        %v1537 = vperm.slane %v1533, 0
        %v1540 = vrot.slane %v1537, 4
        %v1541 = vsel %vm287, %v1536, %v1540
        %v1543 = vmul.f32 %v1530, %v1541
        %v1544 = vadd.f32 %v1466, %v1543
        %s1545 = scalar_lea.vmem [#allocation5], 520
        %v1546 = vld [vmem:[%s1545] sm:$0xff]
        %v1547 = vperm.slane %v1528, 1
        %v1548 = vperm.slane %v1528, 5
        %v1551 = vperm.slane %v1547, 1
        %v1552 = vperm.slane %v1548, 1
        %v1555 = vrot.slane %v1552, 4
        %v1556 = vsel %vm287, %v1551, %v1555
        %v1558 = vmul.f32 %v1546, %v1556
        %v1559 = vadd.f32 %v1481, %v1558
        %s1560 = scalar_lea.vmem [#allocation5], 528
        %v1561 = vld [vmem:[%s1560] sm:$0xff]
        %v1562 = vperm.slane %v1528, 2
        %v1563 = vperm.slane %v1528, 6
        %v1566 = vperm.slane %v1562, 2
        %v1567 = vperm.slane %v1563, 2
        %v1570 = vrot.slane %v1567, 4
        %v1571 = vsel %vm287, %v1566, %v1570
        %v1573 = vmul.f32 %v1561, %v1571
        %v1574 = vadd.f32 %v1496, %v1573
        %s1575 = scalar_lea.vmem [#allocation5], 536
        %v1576 = vld [vmem:[%s1575] sm:$0xff]
        %v1577 = vperm.slane %v1528, 3
        %v1578 = vperm.slane %v1528, 7
        %v1581 = vperm.slane %v1577, 3
        %v1582 = vperm.slane %v1578, 3
        %v1585 = vrot.slane %v1582, 4
        %v1586 = vsel %vm287, %v1581, %v1585
        %v1588 = vmul.f32 %v1576, %v1586
        %v1589 = vadd.f32 %v1511, %v1588
        %1590 = vst [vmem:[#allocation1] ss:$2 sm:$0xff] %v986
        %v1591 = vld.sshfl [vmem:[#allocation1] sm:$0xff pattern:$0x75316420]
        %v1592 = vld.sshfl [vmem:[#allocation1 + $0x8] sm:$0xff pattern:$0x75316420]
        %1595 = vrot.lane.b32.xlu0 %v1591, 111
        %v1596 = vpop.permute.xlu0 %1595
        %1597 = vrot.lane.b32.xlu0 %v1592, 111
        %v1598 = vpop.permute.xlu0 %1597
        %v1599 = vsel %vm908, %v1596, %v1598
        %v1600 = vsel %vm908, %v1598, %v1596
        %v1603 = vrot.slane %v1600, 4
        %v1604 = vsel %vm287, %v1599, %v1603
        %v1606 = vsel %vm913, %v1604, 0.0
        %s1607 = scalar_lea.vmem [#allocation5], 544
        %v1608 = vld [vmem:[%s1607] sm:$0xff]
        %v1610 = vperm.slane %v1606, 0
        %v1611 = vperm.slane %v1606, 4
        %v1614 = vperm.slane %v1610, 0
        %v1615 = vperm.slane %v1611, 0
        %v1618 = vrot.slane %v1615, 4
        %v1619 = vsel %vm287, %v1614, %v1618
        %v1621 = vmul.f32 %v1608, %v1619
        %v1622 = vadd.f32 %v1544, %v1621
        %s1623 = scalar_lea.vmem [#allocation5], 552
        %v1624 = vld [vmem:[%s1623] sm:$0xff]
        %v1625 = vperm.slane %v1606, 1
        %v1626 = vperm.slane %v1606, 5
        %v1629 = vperm.slane %v1625, 1
        %v1630 = vperm.slane %v1626, 1
        %v1633 = vrot.slane %v1630, 4
        %v1634 = vsel %vm287, %v1629, %v1633
        %v1636 = vmul.f32 %v1624, %v1634
        %v1637 = vadd.f32 %v1559, %v1636
        %s1638 = scalar_lea.vmem [#allocation5], 560
        %v1639 = vld [vmem:[%s1638] sm:$0xff]
        %v1640 = vperm.slane %v1606, 2
        %v1641 = vperm.slane %v1606, 6
        %v1644 = vperm.slane %v1640, 2
        %v1645 = vperm.slane %v1641, 2
        %v1648 = vrot.slane %v1645, 4
        %v1649 = vsel %vm287, %v1644, %v1648
        %v1651 = vmul.f32 %v1639, %v1649
        %v1652 = vadd.f32 %v1574, %v1651
        %s1653 = scalar_lea.vmem [#allocation5], 568
        %v1654 = vld [vmem:[%s1653] sm:$0xff]
        %v1655 = vperm.slane %v1606, 3
        %v1656 = vperm.slane %v1606, 7
        %v1659 = vperm.slane %v1655, 3
        %v1660 = vperm.slane %v1656, 3
        %v1663 = vrot.slane %v1660, 4
        %v1664 = vsel %vm287, %v1659, %v1663
        %v1666 = vmul.f32 %v1654, %v1664
        %v1667 = vadd.f32 %v1589, %v1666
        %s1668 = scalar_lea.vmem [#allocation7], 8
        %v1669 = vld [vmem:[%s1668] sm:$0xff]
        %v1670 = vadd.f32 %v1669, %v1622
        %v1671 = vadd.f32 %v1670, %v1637
        %v1672 = vadd.f32 %v1671, %v1652
        %v1673 = vadd.f32 %v1672, %v1667
        %v1674 = vadd.f32 %v1673, %v266
        %1676 = vst [vmem:[#allocation1] ss:$2 sm:$0xff] %v1674
        %v1677 = vld.sshfl [vmem:[#allocation1] sm:$0xff pattern:$0x75316420]
        %v1678 = vld.sshfl [vmem:[#allocation1 + $0x8] sm:$0xff pattern:$0x75316420]
        %1681 = vrot.lane.b32.xlu0 %v1677, 17
        %v1682 = vpop.permute.xlu0 %1681
        %1683 = vrot.lane.b32.xlu0 %v1678, 17
        %v1684 = vpop.permute.xlu0 %1683
        %v1685 = vsel %vm279, %v1682, %v1684
        %v1686 = vsel %vm279, %v1684, %v1682
        %v1689 = vrot.slane %v1685, 4
        %v1690 = vsel %vm287, %v1686, %v1689
        %v1692 = vsel %vm283, %v1690, 0.0
        %s1693 = scalar_lea.vmem [#allocation5], 576
        %v1694 = vld [vmem:[%s1693] sm:$0xff]
        %v1696 = vperm.slane %v1692, 0
        %v1697 = vperm.slane %v1692, 4
        %v1700 = vperm.slane %v1696, 0
        %v1701 = vperm.slane %v1697, 0
        %v1704 = vrot.slane %v1701, 4
        %v1705 = vsel %vm287, %v1700, %v1704
        %v1707 = vmul.f32 %v1694, %v1705
        %s1708 = scalar_lea.vmem [#allocation5], 584
        %v1709 = vld [vmem:[%s1708] sm:$0xff]
        %v1710 = vperm.slane %v1692, 1
        %v1711 = vperm.slane %v1692, 5
        %v1714 = vperm.slane %v1710, 1
        %v1715 = vperm.slane %v1711, 1
        %v1718 = vrot.slane %v1715, 4
        %v1719 = vsel %vm287, %v1714, %v1718
        %v1721 = vmul.f32 %v1709, %v1719
        %s1722 = scalar_lea.vmem [#allocation5], 592
        %v1723 = vld [vmem:[%s1722] sm:$0xff]
        %v1724 = vperm.slane %v1692, 2
        %v1725 = vperm.slane %v1692, 6
        %v1728 = vperm.slane %v1724, 2
        %v1729 = vperm.slane %v1725, 2
        %v1732 = vrot.slane %v1729, 4
        %v1733 = vsel %vm287, %v1728, %v1732
        %v1735 = vmul.f32 %v1723, %v1733
        %s1736 = scalar_lea.vmem [#allocation5], 600
        %v1737 = vld [vmem:[%s1736] sm:$0xff]
        %v1738 = vperm.slane %v1692, 3
        %v1739 = vperm.slane %v1692, 7
        %v1742 = vperm.slane %v1738, 3
        %v1743 = vperm.slane %v1739, 3
        %v1746 = vrot.slane %v1743, 4
        %v1747 = vsel %vm287, %v1742, %v1746
        %v1749 = vmul.f32 %v1737, %v1747
        %1750 = vst [vmem:[#allocation1] ss:$2 sm:$0xff] %v1674
        %v1751 = vld.sshfl [vmem:[#allocation1] sm:$0xff pattern:$0x75316420]
        %v1752 = vld.sshfl [vmem:[#allocation1 + $0x8] sm:$0xff pattern:$0x75316420]
        %1755 = vrot.lane.b32.xlu0 %v1751, 16
        %v1756 = vpop.permute.xlu0 %1755
        %1757 = vrot.lane.b32.xlu0 %v1752, 16
        %v1758 = vpop.permute.xlu0 %1757
        %v1759 = vsel %vm356, %v1756, %v1758
        %v1760 = vsel %vm356, %v1758, %v1756
        %v1763 = vrot.slane %v1759, 4
        %v1764 = vsel %vm287, %v1760, %v1763
        %v1766 = vsel %vm361, %v1764, 0.0
        %s1767 = scalar_lea.vmem [#allocation5], 608
        %v1768 = vld [vmem:[%s1767] sm:$0xff]
        %v1770 = vperm.slane %v1766, 0
        %v1771 = vperm.slane %v1766, 4
        %v1774 = vperm.slane %v1770, 0
        %v1775 = vperm.slane %v1771, 0
        %v1778 = vrot.slane %v1775, 4
        %v1779 = vsel %vm287, %v1774, %v1778
        %v1781 = vmul.f32 %v1768, %v1779
        %v1782 = vadd.f32 %v1707, %v1781
        %s1783 = scalar_lea.vmem [#allocation5], 616
        %v1784 = vld [vmem:[%s1783] sm:$0xff]
        %v1785 = vperm.slane %v1766, 1
        %v1786 = vperm.slane %v1766, 5
        %v1789 = vperm.slane %v1785, 1
        %v1790 = vperm.slane %v1786, 1
        %v1793 = vrot.slane %v1790, 4
        %v1794 = vsel %vm287, %v1789, %v1793
        %v1796 = vmul.f32 %v1784, %v1794
        %v1797 = vadd.f32 %v1721, %v1796
        %s1798 = scalar_lea.vmem [#allocation5], 624
        %v1799 = vld [vmem:[%s1798] sm:$0xff]
        %v1800 = vperm.slane %v1766, 2
        %v1801 = vperm.slane %v1766, 6
        %v1804 = vperm.slane %v1800, 2
        %v1805 = vperm.slane %v1801, 2
        %v1808 = vrot.slane %v1805, 4
        %v1809 = vsel %vm287, %v1804, %v1808
        %v1811 = vmul.f32 %v1799, %v1809
        %v1812 = vadd.f32 %v1735, %v1811
        %s1813 = scalar_lea.vmem [#allocation5], 632
        %v1814 = vld [vmem:[%s1813] sm:$0xff]
        %v1815 = vperm.slane %v1766, 3
        %v1816 = vperm.slane %v1766, 7
        %v1819 = vperm.slane %v1815, 3
        %v1820 = vperm.slane %v1816, 3
        %v1823 = vrot.slane %v1820, 4
        %v1824 = vsel %vm287, %v1819, %v1823
        %v1826 = vmul.f32 %v1814, %v1824
        %v1827 = vadd.f32 %v1749, %v1826
        %1828 = vst [vmem:[#allocation1] ss:$2 sm:$0xff] %v1674
        %v1829 = vld.sshfl [vmem:[#allocation1] sm:$0xff pattern:$0x75316420]
        %v1830 = vld.sshfl [vmem:[#allocation1 + $0x8] sm:$0xff pattern:$0x75316420]
        %1833 = vrot.lane.b32.xlu0 %v1829, 15
        %v1834 = vpop.permute.xlu0 %1833
        %1835 = vrot.lane.b32.xlu0 %v1830, 15
        %v1836 = vpop.permute.xlu0 %1835
        %v1837 = vsel %vm438, %v1834, %v1836
        %v1838 = vsel %vm438, %v1836, %v1834
        %v1841 = vrot.slane %v1837, 4
        %v1842 = vsel %vm287, %v1838, %v1841
        %v1844 = vsel %vm443, %v1842, 0.0
        %s1845 = scalar_lea.vmem [#allocation5], 640
        %v1846 = vld [vmem:[%s1845] sm:$0xff]
        %v1848 = vperm.slane %v1844, 0
        %v1849 = vperm.slane %v1844, 4
        %v1852 = vperm.slane %v1848, 0
        %v1853 = vperm.slane %v1849, 0
        %v1856 = vrot.slane %v1853, 4
        %v1857 = vsel %vm287, %v1852, %v1856
        %v1859 = vmul.f32 %v1846, %v1857
        %v1860 = vadd.f32 %v1782, %v1859
        %s1861 = scalar_lea.vmem [#allocation5], 648
        %v1862 = vld [vmem:[%s1861] sm:$0xff]
        %v1863 = vperm.slane %v1844, 1
        %v1864 = vperm.slane %v1844, 5
        %v1867 = vperm.slane %v1863, 1
        %v1868 = vperm.slane %v1864, 1
        %v1871 = vrot.slane %v1868, 4
        %v1872 = vsel %vm287, %v1867, %v1871
        %v1874 = vmul.f32 %v1862, %v1872
        %v1875 = vadd.f32 %v1797, %v1874
        %s1876 = scalar_lea.vmem [#allocation5], 656
        %v1877 = vld [vmem:[%s1876] sm:$0xff]
        %v1878 = vperm.slane %v1844, 2
        %v1879 = vperm.slane %v1844, 6
        %v1882 = vperm.slane %v1878, 2
        %v1883 = vperm.slane %v1879, 2
        %v1886 = vrot.slane %v1883, 4
        %v1887 = vsel %vm287, %v1882, %v1886
        %v1889 = vmul.f32 %v1877, %v1887
        %v1890 = vadd.f32 %v1812, %v1889
        %s1891 = scalar_lea.vmem [#allocation5], 664
        %v1892 = vld [vmem:[%s1891] sm:$0xff]
        %v1893 = vperm.slane %v1844, 3
        %v1894 = vperm.slane %v1844, 7
        %v1897 = vperm.slane %v1893, 3
        %v1898 = vperm.slane %v1894, 3
        %v1901 = vrot.slane %v1898, 4
        %v1902 = vsel %vm287, %v1897, %v1901
        %v1904 = vmul.f32 %v1892, %v1902
        %v1905 = vadd.f32 %v1827, %v1904
        %1906 = vst [vmem:[#allocation1] ss:$2 sm:$0xff] %v1674
        %v1907 = vld.sshfl [vmem:[#allocation1] sm:$0xff pattern:$0x75316420]
        %v1908 = vld.sshfl [vmem:[#allocation1 + $0x8] sm:$0xff pattern:$0x75316420]
        %1911 = vrot.lane.b32.xlu0 %v1907, 1
        %v1912 = vpop.permute.xlu0 %1911
        %1913 = vrot.lane.b32.xlu0 %v1908, 1
        %v1914 = vpop.permute.xlu0 %1913
        %v1915 = vsel %vm520, %v1912, %v1914
        %v1916 = vsel %vm520, %v1914, %v1912
        %v1919 = vrot.slane %v1915, 4
        %v1920 = vsel %vm287, %v1916, %v1919
        %v1922 = vsel %vm525, %v1920, 0.0
        %s1923 = scalar_lea.vmem [#allocation5], 672
        %v1924 = vld [vmem:[%s1923] sm:$0xff]
        %v1926 = vperm.slane %v1922, 0
        %v1927 = vperm.slane %v1922, 4
        %v1930 = vperm.slane %v1926, 0
        %v1931 = vperm.slane %v1927, 0
        %v1934 = vrot.slane %v1931, 4
        %v1935 = vsel %vm287, %v1930, %v1934
        %v1937 = vmul.f32 %v1924, %v1935
        %v1938 = vadd.f32 %v1860, %v1937
        %s1939 = scalar_lea.vmem [#allocation5], 680
        %v1940 = vld [vmem:[%s1939] sm:$0xff]
        %v1941 = vperm.slane %v1922, 1
        %v1942 = vperm.slane %v1922, 5
        %v1945 = vperm.slane %v1941, 1
        %v1946 = vperm.slane %v1942, 1
        %v1949 = vrot.slane %v1946, 4
        %v1950 = vsel %vm287, %v1945, %v1949
        %v1952 = vmul.f32 %v1940, %v1950
        %v1953 = vadd.f32 %v1875, %v1952
        %s1954 = scalar_lea.vmem [#allocation5], 688
        %v1955 = vld [vmem:[%s1954] sm:$0xff]
        %v1956 = vperm.slane %v1922, 2
        %v1957 = vperm.slane %v1922, 6
        %v1960 = vperm.slane %v1956, 2
        %v1961 = vperm.slane %v1957, 2
        %v1964 = vrot.slane %v1961, 4
        %v1965 = vsel %vm287, %v1960, %v1964
        %v1967 = vmul.f32 %v1955, %v1965
        %v1968 = vadd.f32 %v1890, %v1967
        %s1969 = scalar_lea.vmem [#allocation5], 696
        %v1970 = vld [vmem:[%s1969] sm:$0xff]
        %v1971 = vperm.slane %v1922, 3
        %v1972 = vperm.slane %v1922, 7
        %v1975 = vperm.slane %v1971, 3
        %v1976 = vperm.slane %v1972, 3
        %v1979 = vrot.slane %v1976, 4
        %v1980 = vsel %vm287, %v1975, %v1979
        %v1982 = vmul.f32 %v1970, %v1980
        %v1983 = vadd.f32 %v1905, %v1982
        %s1984 = scalar_lea.vmem [#allocation5], 704
        %v1985 = vld [vmem:[%s1984] sm:$0xff]
        %v1986 = vperm.slane %v1674, 0
        %v1987 = vperm.slane %v1674, 4
        %v1990 = vperm.slane %v1986, 0
        %v1991 = vperm.slane %v1987, 0
        %v1994 = vrot.slane %v1991, 4
        %v1995 = vsel %vm287, %v1990, %v1994
        %v1997 = vmul.f32 %v1985, %v1995
        %v1998 = vadd.f32 %v1938, %v1997
        %s1999 = scalar_lea.vmem [#allocation5], 712
        %v2000 = vld [vmem:[%s1999] sm:$0xff]
        %v2001 = vperm.slane %v1674, 1
        %v2002 = vperm.slane %v1674, 5
        %v2005 = vperm.slane %v2001, 1
        %v2006 = vperm.slane %v2002, 1
        %v2009 = vrot.slane %v2006, 4
        %v2010 = vsel %vm287, %v2005, %v2009
        %v2012 = vmul.f32 %v2000, %v2010
        %v2013 = vadd.f32 %v1953, %v2012
        %s2014 = scalar_lea.vmem [#allocation5], 720
        %v2015 = vld [vmem:[%s2014] sm:$0xff]
        %v2016 = vperm.slane %v1674, 2
        %v2017 = vperm.slane %v1674, 6
        %v2020 = vperm.slane %v2016, 2
        %v2021 = vperm.slane %v2017, 2
        %v2024 = vrot.slane %v2021, 4
        %v2025 = vsel %vm287, %v2020, %v2024
        %v2027 = vmul.f32 %v2015, %v2025
        %v2028 = vadd.f32 %v1968, %v2027
        %s2029 = scalar_lea.vmem [#allocation5], 728
        %v2030 = vld [vmem:[%s2029] sm:$0xff]
        %v2031 = vperm.slane %v1674, 3
        %v2032 = vperm.slane %v1674, 7
        %v2035 = vperm.slane %v2031, 3
        %v2036 = vperm.slane %v2032, 3
        %v2039 = vrot.slane %v2036, 4
        %v2040 = vsel %vm287, %v2035, %v2039
        %v2042 = vmul.f32 %v2030, %v2040
        %v2043 = vadd.f32 %v1983, %v2042
        %2044 = vst [vmem:[#allocation1] ss:$2 sm:$0xff] %v1674
        %v2045 = vld.sshfl [vmem:[#allocation1] sm:$0xff pattern:$0x75316420]
        %v2046 = vld.sshfl [vmem:[#allocation1 + $0x8] sm:$0xff pattern:$0x75316420]
        %2049 = vrot.lane.b32.xlu0 %v2045, 127
        %v2050 = vpop.permute.xlu0 %2049
        %2051 = vrot.lane.b32.xlu0 %v2046, 127
        %v2052 = vpop.permute.xlu0 %2051
        %v2053 = vsel %vm662, %v2050, %v2052
        %v2054 = vsel %vm662, %v2052, %v2050
        %v2057 = vrot.slane %v2054, 4
        %v2058 = vsel %vm287, %v2053, %v2057
        %v2060 = vsel %vm667, %v2058, 0.0
        %s2061 = scalar_lea.vmem [#allocation5], 736
        %v2062 = vld [vmem:[%s2061] sm:$0xff]
        %v2064 = vperm.slane %v2060, 0
        %v2065 = vperm.slane %v2060, 4
        %v2068 = vperm.slane %v2064, 0
        %v2069 = vperm.slane %v2065, 0
        %v2072 = vrot.slane %v2069, 4
        %v2073 = vsel %vm287, %v2068, %v2072
        %v2075 = vmul.f32 %v2062, %v2073
        %v2076 = vadd.f32 %v1998, %v2075
        %s2077 = scalar_lea.vmem [#allocation5], 744
        %v2078 = vld [vmem:[%s2077] sm:$0xff]
        %v2079 = vperm.slane %v2060, 1
        %v2080 = vperm.slane %v2060, 5
        %v2083 = vperm.slane %v2079, 1
        %v2084 = vperm.slane %v2080, 1
        %v2087 = vrot.slane %v2084, 4
        %v2088 = vsel %vm287, %v2083, %v2087
        %v2090 = vmul.f32 %v2078, %v2088
        %v2091 = vadd.f32 %v2013, %v2090
        %s2092 = scalar_lea.vmem [#allocation5], 752
        %v2093 = vld [vmem:[%s2092] sm:$0xff]
        %v2094 = vperm.slane %v2060, 2
        %v2095 = vperm.slane %v2060, 6
        %v2098 = vperm.slane %v2094, 2
        %v2099 = vperm.slane %v2095, 2
        %v2102 = vrot.slane %v2099, 4
        %v2103 = vsel %vm287, %v2098, %v2102
        %v2105 = vmul.f32 %v2093, %v2103
        %v2106 = vadd.f32 %v2028, %v2105
        %s2107 = scalar_lea.vmem [#allocation5], 760
        %v2108 = vld [vmem:[%s2107] sm:$0xff]
        %v2109 = vperm.slane %v2060, 3
        %v2110 = vperm.slane %v2060, 7
        %v2113 = vperm.slane %v2109, 3
        %v2114 = vperm.slane %v2110, 3
        %v2117 = vrot.slane %v2114, 4
        %v2118 = vsel %vm287, %v2113, %v2117
        %v2120 = vmul.f32 %v2108, %v2118
        %v2121 = vadd.f32 %v2043, %v2120
        %2122 = vst [vmem:[#allocation1] ss:$2 sm:$0xff] %v1674
        %v2123 = vld.sshfl [vmem:[#allocation1] sm:$0xff pattern:$0x75316420]
        %v2124 = vld.sshfl [vmem:[#allocation1 + $0x8] sm:$0xff pattern:$0x75316420]
        %2127 = vrot.lane.b32.xlu0 %v2123, 113
        %v2128 = vpop.permute.xlu0 %2127
        %2129 = vrot.lane.b32.xlu0 %v2124, 113
        %v2130 = vpop.permute.xlu0 %2129
        %v2131 = vsel %vm744, %v2128, %v2130
        %v2132 = vsel %vm744, %v2130, %v2128
        %v2135 = vrot.slane %v2132, 4
        %v2136 = vsel %vm287, %v2131, %v2135
        %v2138 = vsel %vm749, %v2136, 0.0
        %s2139 = scalar_lea.vmem [#allocation5], 768
        %v2140 = vld [vmem:[%s2139] sm:$0xff]
        %v2142 = vperm.slane %v2138, 0
        %v2143 = vperm.slane %v2138, 4
        %v2146 = vperm.slane %v2142, 0
        %v2147 = vperm.slane %v2143, 0
        %v2150 = vrot.slane %v2147, 4
        %v2151 = vsel %vm287, %v2146, %v2150
        %v2153 = vmul.f32 %v2140, %v2151
        %v2154 = vadd.f32 %v2076, %v2153
        %s2155 = scalar_lea.vmem [#allocation5], 776
        %v2156 = vld [vmem:[%s2155] sm:$0xff]
        %v2157 = vperm.slane %v2138, 1
        %v2158 = vperm.slane %v2138, 5
        %v2161 = vperm.slane %v2157, 1
        %v2162 = vperm.slane %v2158, 1
        %v2165 = vrot.slane %v2162, 4
        %v2166 = vsel %vm287, %v2161, %v2165
        %v2168 = vmul.f32 %v2156, %v2166
        %v2169 = vadd.f32 %v2091, %v2168
        %s2170 = scalar_lea.vmem [#allocation5], 784
        %v2171 = vld [vmem:[%s2170] sm:$0xff]
        %v2172 = vperm.slane %v2138, 2
        %v2173 = vperm.slane %v2138, 6
        %v2176 = vperm.slane %v2172, 2
        %v2177 = vperm.slane %v2173, 2
        %v2180 = vrot.slane %v2177, 4
        %v2181 = vsel %vm287, %v2176, %v2180
        %v2183 = vmul.f32 %v2171, %v2181
        %v2184 = vadd.f32 %v2106, %v2183
        %s2185 = scalar_lea.vmem [#allocation5], 792
        %v2186 = vld [vmem:[%s2185] sm:$0xff]
        %v2187 = vperm.slane %v2138, 3
        %v2188 = vperm.slane %v2138, 7
        %v2191 = vperm.slane %v2187, 3
        %v2192 = vperm.slane %v2188, 3
        %v2195 = vrot.slane %v2192, 4
        %v2196 = vsel %vm287, %v2191, %v2195
        %v2198 = vmul.f32 %v2186, %v2196
        %v2199 = vadd.f32 %v2121, %v2198
        %2200 = vst [vmem:[#allocation1] ss:$2 sm:$0xff] %v1674
        %v2201 = vld.sshfl [vmem:[#allocation1] sm:$0xff pattern:$0x75316420]
        %v2202 = vld.sshfl [vmem:[#allocation1 + $0x8] sm:$0xff pattern:$0x75316420]
        %2205 = vrot.lane.b32.xlu0 %v2201, 112
        %v2206 = vpop.permute.xlu0 %2205
        %2207 = vrot.lane.b32.xlu0 %v2202, 112
        %v2208 = vpop.permute.xlu0 %2207
        %v2209 = vsel %vm826, %v2206, %v2208
        %v2210 = vsel %vm826, %v2208, %v2206
        %v2213 = vrot.slane %v2210, 4
        %v2214 = vsel %vm287, %v2209, %v2213
        %v2216 = vsel %vm831, %v2214, 0.0
        %s2217 = scalar_lea.vmem [#allocation5], 800
        %v2218 = vld [vmem:[%s2217] sm:$0xff]
        %v2220 = vperm.slane %v2216, 0
        %v2221 = vperm.slane %v2216, 4
        %v2224 = vperm.slane %v2220, 0
        %v2225 = vperm.slane %v2221, 0
        %v2228 = vrot.slane %v2225, 4
        %v2229 = vsel %vm287, %v2224, %v2228
        %v2231 = vmul.f32 %v2218, %v2229
        %v2232 = vadd.f32 %v2154, %v2231
        %s2233 = scalar_lea.vmem [#allocation5], 808
        %v2234 = vld [vmem:[%s2233] sm:$0xff]
        %v2235 = vperm.slane %v2216, 1
        %v2236 = vperm.slane %v2216, 5
        %v2239 = vperm.slane %v2235, 1
        %v2240 = vperm.slane %v2236, 1
        %v2243 = vrot.slane %v2240, 4
        %v2244 = vsel %vm287, %v2239, %v2243
        %v2246 = vmul.f32 %v2234, %v2244
        %v2247 = vadd.f32 %v2169, %v2246
        %s2248 = scalar_lea.vmem [#allocation5], 816
        %v2249 = vld [vmem:[%s2248] sm:$0xff]
        %v2250 = vperm.slane %v2216, 2
        %v2251 = vperm.slane %v2216, 6
        %v2254 = vperm.slane %v2250, 2
        %v2255 = vperm.slane %v2251, 2
        %v2258 = vrot.slane %v2255, 4
        %v2259 = vsel %vm287, %v2254, %v2258
        %v2261 = vmul.f32 %v2249, %v2259
        %v2262 = vadd.f32 %v2184, %v2261
        %s2263 = scalar_lea.vmem [#allocation5], 824
        %v2264 = vld [vmem:[%s2263] sm:$0xff]
        %v2265 = vperm.slane %v2216, 3
        %v2266 = vperm.slane %v2216, 7
        %v2269 = vperm.slane %v2265, 3
        %v2270 = vperm.slane %v2266, 3
        %v2273 = vrot.slane %v2270, 4
        %v2274 = vsel %vm287, %v2269, %v2273
        %v2276 = vmul.f32 %v2264, %v2274
        %v2277 = vadd.f32 %v2199, %v2276
        %2278 = vst [vmem:[#allocation1] ss:$2 sm:$0xff] %v1674
        %v2279 = vld.sshfl [vmem:[#allocation1] sm:$0xff pattern:$0x75316420]
        %v2280 = vld.sshfl [vmem:[#allocation1 + $0x8] sm:$0xff pattern:$0x75316420]
        %2283 = vrot.lane.b32.xlu0 %v2279, 111
        %v2284 = vpop.permute.xlu0 %2283
        %2285 = vrot.lane.b32.xlu0 %v2280, 111
        %v2286 = vpop.permute.xlu0 %2285
        %v2287 = vsel %vm908, %v2284, %v2286
        %v2288 = vsel %vm908, %v2286, %v2284
        %v2291 = vrot.slane %v2288, 4
        %v2292 = vsel %vm287, %v2287, %v2291
        %v2294 = vsel %vm913, %v2292, 0.0
        %s2295 = scalar_lea.vmem [#allocation5], 832
        %v2296 = vld [vmem:[%s2295] sm:$0xff]
        %v2298 = vperm.slane %v2294, 0
        %v2299 = vperm.slane %v2294, 4
        %v2302 = vperm.slane %v2298, 0
        %v2303 = vperm.slane %v2299, 0
        %v2306 = vrot.slane %v2303, 4
        %v2307 = vsel %vm287, %v2302, %v2306
        %v2309 = vmul.f32 %v2296, %v2307
        %v2310 = vadd.f32 %v2232, %v2309
        %s2311 = scalar_lea.vmem [#allocation5], 840
        %v2312 = vld [vmem:[%s2311] sm:$0xff]
        %v2313 = vperm.slane %v2294, 1
        %v2314 = vperm.slane %v2294, 5
        %v2317 = vperm.slane %v2313, 1
        %v2318 = vperm.slane %v2314, 1
        %v2321 = vrot.slane %v2318, 4
        %v2322 = vsel %vm287, %v2317, %v2321
        %v2324 = vmul.f32 %v2312, %v2322
        %v2325 = vadd.f32 %v2247, %v2324
        %s2326 = scalar_lea.vmem [#allocation5], 848
        %v2327 = vld [vmem:[%s2326] sm:$0xff]
        %v2328 = vperm.slane %v2294, 2
        %v2329 = vperm.slane %v2294, 6
        %v2332 = vperm.slane %v2328, 2
        %v2333 = vperm.slane %v2329, 2
        %v2336 = vrot.slane %v2333, 4
        %v2337 = vsel %vm287, %v2332, %v2336
        %v2339 = vmul.f32 %v2327, %v2337
        %v2340 = vadd.f32 %v2262, %v2339
        %s2341 = scalar_lea.vmem [#allocation5], 856
        %v2342 = vld [vmem:[%s2341] sm:$0xff]
        %v2343 = vperm.slane %v2294, 3
        %v2344 = vperm.slane %v2294, 7
        %v2347 = vperm.slane %v2343, 3
        %v2348 = vperm.slane %v2344, 3
        %v2351 = vrot.slane %v2348, 4
        %v2352 = vsel %vm287, %v2347, %v2351
        %v2354 = vmul.f32 %v2342, %v2352
        %v2355 = vadd.f32 %v2277, %v2354
        %s2356 = scalar_lea.vmem [#allocation7], 16
        %v2357 = vld [vmem:[%s2356] sm:$0xff]
        %v2358 = vadd.f32 %v2357, %v2310
        %v2359 = vadd.f32 %v2358, %v2325
        %v2360 = vadd.f32 %v2359, %v2340
        %v2361 = vadd.f32 %v2360, %v2355
        %v2362 = vmax.f32 %v2361, 0.0
        %2364 = vst [vmem:[#allocation1] ss:$2 sm:$0xff] %v2362
        %v2365 = vld.sshfl [vmem:[#allocation1] sm:$0xff pattern:$0x75316420]
        %v2366 = vld.sshfl [vmem:[#allocation1 + $0x8] sm:$0xff pattern:$0x75316420]
        %2369 = vrot.lane.b32.xlu0 %v2365, 17
        %v2370 = vpop.permute.xlu0 %2369
        %2371 = vrot.lane.b32.xlu0 %v2366, 17
        %v2372 = vpop.permute.xlu0 %2371
        %v2373 = vsel %vm279, %v2370, %v2372
        %v2374 = vsel %vm279, %v2372, %v2370
        %v2377 = vrot.slane %v2373, 4
        %v2378 = vsel %vm287, %v2374, %v2377
        %v2380 = vsel %vm283, %v2378, 0.0
        %s2381 = scalar_lea.vmem [#allocation5], 864
        %v2382 = vld [vmem:[%s2381] sm:$0xff]
        %v2384 = vperm.slane %v2380, 0
        %v2385 = vperm.slane %v2380, 4
        %v2388 = vperm.slane %v2384, 0
        %v2389 = vperm.slane %v2385, 0
        %v2392 = vrot.slane %v2389, 4
        %v2393 = vsel %vm287, %v2388, %v2392
        %v2395 = vmul.f32 %v2382, %v2393
        %s2396 = scalar_lea.vmem [#allocation5], 872
        %v2397 = vld [vmem:[%s2396] sm:$0xff]
        %v2398 = vperm.slane %v2380, 1
        %v2399 = vperm.slane %v2380, 5
        %v2402 = vperm.slane %v2398, 1
        %v2403 = vperm.slane %v2399, 1
        %v2406 = vrot.slane %v2403, 4
        %v2407 = vsel %vm287, %v2402, %v2406
        %v2409 = vmul.f32 %v2397, %v2407
        %s2410 = scalar_lea.vmem [#allocation5], 880
        %v2411 = vld [vmem:[%s2410] sm:$0xff]
        %v2412 = vperm.slane %v2380, 2
        %v2413 = vperm.slane %v2380, 6
        %v2416 = vperm.slane %v2412, 2
        %v2417 = vperm.slane %v2413, 2
        %v2420 = vrot.slane %v2417, 4
        %v2421 = vsel %vm287, %v2416, %v2420
        %v2423 = vmul.f32 %v2411, %v2421
        %s2424 = scalar_lea.vmem [#allocation5], 888
        %v2425 = vld [vmem:[%s2424] sm:$0xff]
        %v2426 = vperm.slane %v2380, 3
        %v2427 = vperm.slane %v2380, 7
        %v2430 = vperm.slane %v2426, 3
        %v2431 = vperm.slane %v2427, 3
        %v2434 = vrot.slane %v2431, 4
        %v2435 = vsel %vm287, %v2430, %v2434
        %v2437 = vmul.f32 %v2425, %v2435
        %2438 = vst [vmem:[#allocation1] ss:$2 sm:$0xff] %v2362
        %v2439 = vld.sshfl [vmem:[#allocation1] sm:$0xff pattern:$0x75316420]
        %v2440 = vld.sshfl [vmem:[#allocation1 + $0x8] sm:$0xff pattern:$0x75316420]
        %2443 = vrot.lane.b32.xlu0 %v2439, 16
        %v2444 = vpop.permute.xlu0 %2443
        %2445 = vrot.lane.b32.xlu0 %v2440, 16
        %v2446 = vpop.permute.xlu0 %2445
        %v2447 = vsel %vm356, %v2444, %v2446
        %v2448 = vsel %vm356, %v2446, %v2444
        %v2451 = vrot.slane %v2447, 4
        %v2452 = vsel %vm287, %v2448, %v2451
        %v2454 = vsel %vm361, %v2452, 0.0
        %s2455 = scalar_lea.vmem [#allocation5], 896
        %v2456 = vld [vmem:[%s2455] sm:$0xff]
        %v2458 = vperm.slane %v2454, 0
        %v2459 = vperm.slane %v2454, 4
        %v2462 = vperm.slane %v2458, 0
        %v2463 = vperm.slane %v2459, 0
        %v2466 = vrot.slane %v2463, 4
        %v2467 = vsel %vm287, %v2462, %v2466
        %v2469 = vmul.f32 %v2456, %v2467
        %v2470 = vadd.f32 %v2395, %v2469
        %s2471 = scalar_lea.vmem [#allocation5], 904
        %v2472 = vld [vmem:[%s2471] sm:$0xff]
        %v2473 = vperm.slane %v2454, 1
        %v2474 = vperm.slane %v2454, 5
        %v2477 = vperm.slane %v2473, 1
        %v2478 = vperm.slane %v2474, 1
        %v2481 = vrot.slane %v2478, 4
        %v2482 = vsel %vm287, %v2477, %v2481
        %v2484 = vmul.f32 %v2472, %v2482
        %v2485 = vadd.f32 %v2409, %v2484
        %s2486 = scalar_lea.vmem [#allocation5], 912
        %v2487 = vld [vmem:[%s2486] sm:$0xff]
        %v2488 = vperm.slane %v2454, 2
        %v2489 = vperm.slane %v2454, 6
        %v2492 = vperm.slane %v2488, 2
        %v2493 = vperm.slane %v2489, 2
        %v2496 = vrot.slane %v2493, 4
        %v2497 = vsel %vm287, %v2492, %v2496
        %v2499 = vmul.f32 %v2487, %v2497
        %v2500 = vadd.f32 %v2423, %v2499
        %s2501 = scalar_lea.vmem [#allocation5], 920
        %v2502 = vld [vmem:[%s2501] sm:$0xff]
        %v2503 = vperm.slane %v2454, 3
        %v2504 = vperm.slane %v2454, 7
        %v2507 = vperm.slane %v2503, 3
        %v2508 = vperm.slane %v2504, 3
        %v2511 = vrot.slane %v2508, 4
        %v2512 = vsel %vm287, %v2507, %v2511
        %v2514 = vmul.f32 %v2502, %v2512
        %v2515 = vadd.f32 %v2437, %v2514
        %2516 = vst [vmem:[#allocation1] ss:$2 sm:$0xff] %v2362
        %v2517 = vld.sshfl [vmem:[#allocation1] sm:$0xff pattern:$0x75316420]
        %v2518 = vld.sshfl [vmem:[#allocation1 + $0x8] sm:$0xff pattern:$0x75316420]
        %2521 = vrot.lane.b32.xlu0 %v2517, 15
        %v2522 = vpop.permute.xlu0 %2521
        %2523 = vrot.lane.b32.xlu0 %v2518, 15
        %v2524 = vpop.permute.xlu0 %2523
        %v2525 = vsel %vm438, %v2522, %v2524
        %v2526 = vsel %vm438, %v2524, %v2522
        %v2529 = vrot.slane %v2525, 4
        %v2530 = vsel %vm287, %v2526, %v2529
        %v2532 = vsel %vm443, %v2530, 0.0
        %s2533 = scalar_lea.vmem [#allocation5], 928
        %v2534 = vld [vmem:[%s2533] sm:$0xff]
        %v2536 = vperm.slane %v2532, 0
        %v2537 = vperm.slane %v2532, 4
        %v2540 = vperm.slane %v2536, 0
        %v2541 = vperm.slane %v2537, 0
        %v2544 = vrot.slane %v2541, 4
        %v2545 = vsel %vm287, %v2540, %v2544
        %v2547 = vmul.f32 %v2534, %v2545
        %v2548 = vadd.f32 %v2470, %v2547
        %s2549 = scalar_lea.vmem [#allocation5], 936
        %v2550 = vld [vmem:[%s2549] sm:$0xff]
        %v2551 = vperm.slane %v2532, 1
        %v2552 = vperm.slane %v2532, 5
        %v2555 = vperm.slane %v2551, 1
        %v2556 = vperm.slane %v2552, 1
        %v2559 = vrot.slane %v2556, 4
        %v2560 = vsel %vm287, %v2555, %v2559
        %v2562 = vmul.f32 %v2550, %v2560
        %v2563 = vadd.f32 %v2485, %v2562
        %s2564 = scalar_lea.vmem [#allocation5], 944
        %v2565 = vld [vmem:[%s2564] sm:$0xff]
        %v2566 = vperm.slane %v2532, 2
        %v2567 = vperm.slane %v2532, 6
        %v2570 = vperm.slane %v2566, 2
        %v2571 = vperm.slane %v2567, 2
        %v2574 = vrot.slane %v2571, 4
        %v2575 = vsel %vm287, %v2570, %v2574
        %v2577 = vmul.f32 %v2565, %v2575
        %v2578 = vadd.f32 %v2500, %v2577
        %s2579 = scalar_lea.vmem [#allocation5], 952
        %v2580 = vld [vmem:[%s2579] sm:$0xff]
        %v2581 = vperm.slane %v2532, 3
        %v2582 = vperm.slane %v2532, 7
        %v2585 = vperm.slane %v2581, 3
        %v2586 = vperm.slane %v2582, 3
        %v2589 = vrot.slane %v2586, 4
        %v2590 = vsel %vm287, %v2585, %v2589
        %v2592 = vmul.f32 %v2580, %v2590
        %v2593 = vadd.f32 %v2515, %v2592
        %2594 = vst [vmem:[#allocation1] ss:$2 sm:$0xff] %v2362
        %v2595 = vld.sshfl [vmem:[#allocation1] sm:$0xff pattern:$0x75316420]
        %v2596 = vld.sshfl [vmem:[#allocation1 + $0x8] sm:$0xff pattern:$0x75316420]
        %2599 = vrot.lane.b32.xlu0 %v2595, 1
        %v2600 = vpop.permute.xlu0 %2599
        %2601 = vrot.lane.b32.xlu0 %v2596, 1
        %v2602 = vpop.permute.xlu0 %2601
        %v2603 = vsel %vm520, %v2600, %v2602
        %v2604 = vsel %vm520, %v2602, %v2600
        %v2607 = vrot.slane %v2603, 4
        %v2608 = vsel %vm287, %v2604, %v2607
        %v2610 = vsel %vm525, %v2608, 0.0
        %s2611 = scalar_lea.vmem [#allocation5], 960
        %v2612 = vld [vmem:[%s2611] sm:$0xff]
        %v2614 = vperm.slane %v2610, 0
        %v2615 = vperm.slane %v2610, 4
        %v2618 = vperm.slane %v2614, 0
        %v2619 = vperm.slane %v2615, 0
        %v2622 = vrot.slane %v2619, 4
        %v2623 = vsel %vm287, %v2618, %v2622
        %v2625 = vmul.f32 %v2612, %v2623
        %v2626 = vadd.f32 %v2548, %v2625
        %s2627 = scalar_lea.vmem [#allocation5], 968
        %v2628 = vld [vmem:[%s2627] sm:$0xff]
        %v2629 = vperm.slane %v2610, 1
        %v2630 = vperm.slane %v2610, 5
        %v2633 = vperm.slane %v2629, 1
        %v2634 = vperm.slane %v2630, 1
        %v2637 = vrot.slane %v2634, 4
        %v2638 = vsel %vm287, %v2633, %v2637
        %v2640 = vmul.f32 %v2628, %v2638
        %v2641 = vadd.f32 %v2563, %v2640
        %s2642 = scalar_lea.vmem [#allocation5], 976
        %v2643 = vld [vmem:[%s2642] sm:$0xff]
        %v2644 = vperm.slane %v2610, 2
        %v2645 = vperm.slane %v2610, 6
        %v2648 = vperm.slane %v2644, 2
        %v2649 = vperm.slane %v2645, 2
        %v2652 = vrot.slane %v2649, 4
        %v2653 = vsel %vm287, %v2648, %v2652
        %v2655 = vmul.f32 %v2643, %v2653
        %v2656 = vadd.f32 %v2578, %v2655
        %s2657 = scalar_lea.vmem [#allocation5], 984
        %v2658 = vld [vmem:[%s2657] sm:$0xff]
        %v2659 = vperm.slane %v2610, 3
        %v2660 = vperm.slane %v2610, 7
        %v2663 = vperm.slane %v2659, 3
        %v2664 = vperm.slane %v2660, 3
        %v2667 = vrot.slane %v2664, 4
        %v2668 = vsel %vm287, %v2663, %v2667
        %v2670 = vmul.f32 %v2658, %v2668
        %v2671 = vadd.f32 %v2593, %v2670
        %s2672 = scalar_lea.vmem [#allocation5], 992
        %v2673 = vld [vmem:[%s2672] sm:$0xff]
        %v2674 = vperm.slane %v2362, 0
        %v2675 = vperm.slane %v2362, 4
        %v2678 = vperm.slane %v2674, 0
        %v2679 = vperm.slane %v2675, 0
        %v2682 = vrot.slane %v2679, 4
        %v2683 = vsel %vm287, %v2678, %v2682
        %v2685 = vmul.f32 %v2673, %v2683
        %v2686 = vadd.f32 %v2626, %v2685
        %s2687 = scalar_lea.vmem [#allocation5], 1000
        %v2688 = vld [vmem:[%s2687] sm:$0xff]
        %v2689 = vperm.slane %v2362, 1
        %v2690 = vperm.slane %v2362, 5
        %v2693 = vperm.slane %v2689, 1
        %v2694 = vperm.slane %v2690, 1
        %v2697 = vrot.slane %v2694, 4
        %v2698 = vsel %vm287, %v2693, %v2697
        %v2700 = vmul.f32 %v2688, %v2698
        %v2701 = vadd.f32 %v2641, %v2700
        %s2702 = scalar_lea.vmem [#allocation5], 1008
        %v2703 = vld [vmem:[%s2702] sm:$0xff]
        %v2704 = vperm.slane %v2362, 2
        %v2705 = vperm.slane %v2362, 6
        %v2708 = vperm.slane %v2704, 2
        %v2709 = vperm.slane %v2705, 2
        %v2712 = vrot.slane %v2709, 4
        %v2713 = vsel %vm287, %v2708, %v2712
        %v2715 = vmul.f32 %v2703, %v2713
        %v2716 = vadd.f32 %v2656, %v2715
        %s2717 = scalar_lea.vmem [#allocation5], 1016
        %v2718 = vld [vmem:[%s2717] sm:$0xff]
        %v2719 = vperm.slane %v2362, 3
        %v2720 = vperm.slane %v2362, 7
        %v2723 = vperm.slane %v2719, 3
        %v2724 = vperm.slane %v2720, 3
        %v2727 = vrot.slane %v2724, 4
        %v2728 = vsel %vm287, %v2723, %v2727
        %v2730 = vmul.f32 %v2718, %v2728
        %v2731 = vadd.f32 %v2671, %v2730
        %2732 = vst [vmem:[#allocation1] ss:$2 sm:$0xff] %v2362
        %v2733 = vld.sshfl [vmem:[#allocation1] sm:$0xff pattern:$0x75316420]
        %v2734 = vld.sshfl [vmem:[#allocation1 + $0x8] sm:$0xff pattern:$0x75316420]
        %2737 = vrot.lane.b32.xlu0 %v2733, 127
        %v2738 = vpop.permute.xlu0 %2737
        %2739 = vrot.lane.b32.xlu0 %v2734, 127
        %v2740 = vpop.permute.xlu0 %2739
        %v2741 = vsel %vm662, %v2738, %v2740
        %v2742 = vsel %vm662, %v2740, %v2738
        %v2745 = vrot.slane %v2742, 4
        %v2746 = vsel %vm287, %v2741, %v2745
        %v2748 = vsel %vm667, %v2746, 0.0
        %s2749 = scalar_lea.vmem [#allocation5], 1024
        %v2750 = vld [vmem:[%s2749] sm:$0xff]
        %v2752 = vperm.slane %v2748, 0
        %v2753 = vperm.slane %v2748, 4
        %v2756 = vperm.slane %v2752, 0
        %v2757 = vperm.slane %v2753, 0
        %v2760 = vrot.slane %v2757, 4
        %v2761 = vsel %vm287, %v2756, %v2760
        %v2763 = vmul.f32 %v2750, %v2761
        %v2764 = vadd.f32 %v2686, %v2763
        %s2765 = scalar_lea.vmem [#allocation5], 1032
        %v2766 = vld [vmem:[%s2765] sm:$0xff]
        %v2767 = vperm.slane %v2748, 1
        %v2768 = vperm.slane %v2748, 5
        %v2771 = vperm.slane %v2767, 1
        %v2772 = vperm.slane %v2768, 1
        %v2775 = vrot.slane %v2772, 4
        %v2776 = vsel %vm287, %v2771, %v2775
        %v2778 = vmul.f32 %v2766, %v2776
        %v2779 = vadd.f32 %v2701, %v2778
        %s2780 = scalar_lea.vmem [#allocation5], 1040
        %v2781 = vld [vmem:[%s2780] sm:$0xff]
        %v2782 = vperm.slane %v2748, 2
        %v2783 = vperm.slane %v2748, 6
        %v2786 = vperm.slane %v2782, 2
        %v2787 = vperm.slane %v2783, 2
        %v2790 = vrot.slane %v2787, 4
        %v2791 = vsel %vm287, %v2786, %v2790
        %v2793 = vmul.f32 %v2781, %v2791
        %v2794 = vadd.f32 %v2716, %v2793
        %s2795 = scalar_lea.vmem [#allocation5], 1048
        %v2796 = vld [vmem:[%s2795] sm:$0xff]
        %v2797 = vperm.slane %v2748, 3
        %v2798 = vperm.slane %v2748, 7
        %v2801 = vperm.slane %v2797, 3
        %v2802 = vperm.slane %v2798, 3
        %v2805 = vrot.slane %v2802, 4
        %v2806 = vsel %vm287, %v2801, %v2805
        %v2808 = vmul.f32 %v2796, %v2806
        %v2809 = vadd.f32 %v2731, %v2808
        %2810 = vst [vmem:[#allocation1] ss:$2 sm:$0xff] %v2362
        %v2811 = vld.sshfl [vmem:[#allocation1] sm:$0xff pattern:$0x75316420]
        %v2812 = vld.sshfl [vmem:[#allocation1 + $0x8] sm:$0xff pattern:$0x75316420]
        %2815 = vrot.lane.b32.xlu0 %v2811, 113
        %v2816 = vpop.permute.xlu0 %2815
        %2817 = vrot.lane.b32.xlu0 %v2812, 113
        %v2818 = vpop.permute.xlu0 %2817
        %v2819 = vsel %vm744, %v2816, %v2818
        %v2820 = vsel %vm744, %v2818, %v2816
        %v2823 = vrot.slane %v2820, 4
        %v2824 = vsel %vm287, %v2819, %v2823
        %v2826 = vsel %vm749, %v2824, 0.0
        %s2827 = scalar_lea.vmem [#allocation5], 1056
        %v2828 = vld [vmem:[%s2827] sm:$0xff]
        %v2830 = vperm.slane %v2826, 0
        %v2831 = vperm.slane %v2826, 4
        %v2834 = vperm.slane %v2830, 0
        %v2835 = vperm.slane %v2831, 0
        %v2838 = vrot.slane %v2835, 4
        %v2839 = vsel %vm287, %v2834, %v2838
        %v2841 = vmul.f32 %v2828, %v2839
        %v2842 = vadd.f32 %v2764, %v2841
        %s2843 = scalar_lea.vmem [#allocation5], 1064
        %v2844 = vld [vmem:[%s2843] sm:$0xff]
        %v2845 = vperm.slane %v2826, 1
        %v2846 = vperm.slane %v2826, 5
        %v2849 = vperm.slane %v2845, 1
        %v2850 = vperm.slane %v2846, 1
        %v2853 = vrot.slane %v2850, 4
        %v2854 = vsel %vm287, %v2849, %v2853
        %v2856 = vmul.f32 %v2844, %v2854
        %v2857 = vadd.f32 %v2779, %v2856
        %s2858 = scalar_lea.vmem [#allocation5], 1072
        %v2859 = vld [vmem:[%s2858] sm:$0xff]
        %v2860 = vperm.slane %v2826, 2
        %v2861 = vperm.slane %v2826, 6
        %v2864 = vperm.slane %v2860, 2
        %v2865 = vperm.slane %v2861, 2
        %v2868 = vrot.slane %v2865, 4
        %v2869 = vsel %vm287, %v2864, %v2868
        %v2871 = vmul.f32 %v2859, %v2869
        %v2872 = vadd.f32 %v2794, %v2871
        %s2873 = scalar_lea.vmem [#allocation5], 1080
        %v2874 = vld [vmem:[%s2873] sm:$0xff]
        %v2875 = vperm.slane %v2826, 3
        %v2876 = vperm.slane %v2826, 7
        %v2879 = vperm.slane %v2875, 3
        %v2880 = vperm.slane %v2876, 3
        %v2883 = vrot.slane %v2880, 4
        %v2884 = vsel %vm287, %v2879, %v2883
        %v2886 = vmul.f32 %v2874, %v2884
        %v2887 = vadd.f32 %v2809, %v2886
        %2888 = vst [vmem:[#allocation1] ss:$2 sm:$0xff] %v2362
        %v2889 = vld.sshfl [vmem:[#allocation1] sm:$0xff pattern:$0x75316420]
        %v2890 = vld.sshfl [vmem:[#allocation1 + $0x8] sm:$0xff pattern:$0x75316420]
        %2893 = vrot.lane.b32.xlu0 %v2889, 112
        %v2894 = vpop.permute.xlu0 %2893
        %2895 = vrot.lane.b32.xlu0 %v2890, 112
        %v2896 = vpop.permute.xlu0 %2895
        %v2897 = vsel %vm826, %v2894, %v2896
        %v2898 = vsel %vm826, %v2896, %v2894
        %v2901 = vrot.slane %v2898, 4
        %v2902 = vsel %vm287, %v2897, %v2901
        %v2904 = vsel %vm831, %v2902, 0.0
        %s2905 = scalar_lea.vmem [#allocation5], 1088
        %v2906 = vld [vmem:[%s2905] sm:$0xff]
        %v2908 = vperm.slane %v2904, 0
        %v2909 = vperm.slane %v2904, 4
        %v2912 = vperm.slane %v2908, 0
        %v2913 = vperm.slane %v2909, 0
        %v2916 = vrot.slane %v2913, 4
        %v2917 = vsel %vm287, %v2912, %v2916
        %v2919 = vmul.f32 %v2906, %v2917
        %v2920 = vadd.f32 %v2842, %v2919
        %s2921 = scalar_lea.vmem [#allocation5], 1096
        %v2922 = vld [vmem:[%s2921] sm:$0xff]
        %v2923 = vperm.slane %v2904, 1
        %v2924 = vperm.slane %v2904, 5
        %v2927 = vperm.slane %v2923, 1
        %v2928 = vperm.slane %v2924, 1
        %v2931 = vrot.slane %v2928, 4
        %v2932 = vsel %vm287, %v2927, %v2931
        %v2934 = vmul.f32 %v2922, %v2932
        %v2935 = vadd.f32 %v2857, %v2934
        %s2936 = scalar_lea.vmem [#allocation5], 1104
        %v2937 = vld [vmem:[%s2936] sm:$0xff]
        %v2938 = vperm.slane %v2904, 2
        %v2939 = vperm.slane %v2904, 6
        %v2942 = vperm.slane %v2938, 2
        %v2943 = vperm.slane %v2939, 2
        %v2946 = vrot.slane %v2943, 4
        %v2947 = vsel %vm287, %v2942, %v2946
        %v2949 = vmul.f32 %v2937, %v2947
        %v2950 = vadd.f32 %v2872, %v2949
        %s2951 = scalar_lea.vmem [#allocation5], 1112
        %v2952 = vld [vmem:[%s2951] sm:$0xff]
        %v2953 = vperm.slane %v2904, 3
        %v2954 = vperm.slane %v2904, 7
        %v2957 = vperm.slane %v2953, 3
        %v2958 = vperm.slane %v2954, 3
        %v2961 = vrot.slane %v2958, 4
        %v2962 = vsel %vm287, %v2957, %v2961
        %v2964 = vmul.f32 %v2952, %v2962
        %v2965 = vadd.f32 %v2887, %v2964
        %2966 = vst [vmem:[#allocation1] ss:$2 sm:$0xff] %v2362
        %v2967 = vld.sshfl [vmem:[#allocation1] sm:$0xff pattern:$0x75316420]
        %v2968 = vld.sshfl [vmem:[#allocation1 + $0x8] sm:$0xff pattern:$0x75316420]
        %2971 = vrot.lane.b32.xlu0 %v2967, 111
        %v2972 = vpop.permute.xlu0 %2971
        %2973 = vrot.lane.b32.xlu0 %v2968, 111
        %v2974 = vpop.permute.xlu0 %2973
        %v2975 = vsel %vm908, %v2972, %v2974
        %v2976 = vsel %vm908, %v2974, %v2972
        %v2979 = vrot.slane %v2976, 4
        %v2980 = vsel %vm287, %v2975, %v2979
        %v2982 = vsel %vm913, %v2980, 0.0
        %s2983 = scalar_lea.vmem [#allocation5], 1120
        %v2984 = vld [vmem:[%s2983] sm:$0xff]
        %v2986 = vperm.slane %v2982, 0
        %v2987 = vperm.slane %v2982, 4
        %v2990 = vperm.slane %v2986, 0
        %v2991 = vperm.slane %v2987, 0
        %v2994 = vrot.slane %v2991, 4
        %v2995 = vsel %vm287, %v2990, %v2994
        %v2997 = vmul.f32 %v2984, %v2995
        %v2998 = vadd.f32 %v2920, %v2997
        %s2999 = scalar_lea.vmem [#allocation5], 1128
        %v3000 = vld [vmem:[%s2999] sm:$0xff]
        %v3001 = vperm.slane %v2982, 1
        %v3002 = vperm.slane %v2982, 5
        %v3005 = vperm.slane %v3001, 1
        %v3006 = vperm.slane %v3002, 1
        %v3009 = vrot.slane %v3006, 4
        %v3010 = vsel %vm287, %v3005, %v3009
        %v3012 = vmul.f32 %v3000, %v3010
        %v3013 = vadd.f32 %v2935, %v3012
        %s3014 = scalar_lea.vmem [#allocation5], 1136
        %v3015 = vld [vmem:[%s3014] sm:$0xff]
        %v3016 = vperm.slane %v2982, 2
        %v3017 = vperm.slane %v2982, 6
        %v3020 = vperm.slane %v3016, 2
        %v3021 = vperm.slane %v3017, 2
        %v3024 = vrot.slane %v3021, 4
        %v3025 = vsel %vm287, %v3020, %v3024
        %v3027 = vmul.f32 %v3015, %v3025
        %v3028 = vadd.f32 %v2950, %v3027
        %s3029 = scalar_lea.vmem [#allocation5], 1144
        %v3030 = vld [vmem:[%s3029] sm:$0xff]
        %v3031 = vperm.slane %v2982, 3
        %v3032 = vperm.slane %v2982, 7
        %v3035 = vperm.slane %v3031, 3
        %v3036 = vperm.slane %v3032, 3
        %v3039 = vrot.slane %v3036, 4
        %v3040 = vsel %vm287, %v3035, %v3039
        %v3042 = vmul.f32 %v3030, %v3040
        %v3043 = vadd.f32 %v2965, %v3042
        %s3044 = scalar_lea.vmem [#allocation7], 24
        %v3045 = vld [vmem:[%s3044] sm:$0xff]
        %v3046 = vadd.f32 %v3045, %v2998
        %v3047 = vadd.f32 %v3046, %v3013
        %v3048 = vadd.f32 %v3047, %v3028
        %v3049 = vadd.f32 %v3048, %v3043
        %v3050 = vadd.f32 %v3049, %v1674
        %3051 = vst [vmem:[%s265] sm:$0xff] %v3050
        %s3052 = sand.u32 %s120, 1
        %s3053 = scalar_lea.sflag [#allocation4], %s3052
        %s3054 = sand.u32 %s120, 1
        %s3055 = smul.addr %s3054, 8
        %s3056 = scalar_lea.vmem [#allocation10], %s3055
        // Predicated region
        $region53: #{tpu_custom_call.1} parent=35 // pred_check
          %p3057 = pneg %p130
        $region54: #{tpu_custom_call.1} parent=35 // pred_check_branch
          %3059 = sbr.rel (%p3057) target = $region56
        $region55: #{tpu_custom_call.1} parent=35 // pred_region
          %3061 = vsyncadd %s3053, 0
          %s3062 = smul.addr %s23, 2
          %s3063 = smul.addr %s3062, 4
          %s3064 = scalar_lea.hbm %s4, %s3063
          %s3066 = sshll.u32 %s3056, 4
          %s3067 = int_to_ptr.vmem [resolvable:$true] %s3066
          %s3068 = sshll.u32 %s3064, 4
          %s3069 = int_to_ptr.hbm [resolvable:$true] %s3068
          %3071 = dma.vmem_to_hbm [thread:$0]  %s3067, 128, %s3069, %s3053
        $region56: #{tpu_custom_call.1} parent=35 // pred_fallthru
          _
      $region36: #{tpu_custom_call.1} parent=5 // pred_fallthru
        _
      %p3072 = scmp.le.s32.totalorder 2, %s18
      // Predicated region
      $region57: #{tpu_custom_call.1} parent=5 // pred_check
        %p3073 = pneg %p3072
      $region58: #{tpu_custom_call.1} parent=5 // pred_check_branch
        %3075 = sbr.rel (%p3073) target = $region60
      $region59: #{tpu_custom_call.1} parent=5 // pred_region
        %s3076 = ssub.s32 %s18, 2
        // Predicated region
        $region61: #{tpu_custom_call.1} parent=59 // pred_check
          %p3077 = pneg %p136
        $region62: #{tpu_custom_call.1} parent=59 // pred_check_branch
          %3079 = sbr.rel (%p3077) target = $region64
        $region63: #{tpu_custom_call.1} parent=59 // pred_region
          %s3080 = sand.u32 %s121, 1
          %s3081 = scalar_lea.sflag [#allocation4], %s3080
          %s3082 = sand.u32 %s121, 1
          %s3083 = smul.addr %s3082, 8
          %s3084 = scalar_lea.vmem [#allocation10], %s3083
          %3086 = dma.done %s3081, 128
        $region64: #{tpu_custom_call.1} parent=59 // pred_fallthru
          _
      $region60: #{tpu_custom_call.1} parent=5 // pred_fallthru
        _
    $region6: #{tpu_custom_call.1} parent=1 // loop_footer
      %s22 = sadd.s32 1, %s18
    $region7: #{tpu_custom_call.1} parent=1 // loop_footer_branch
      %17 = sbr.rel target = $region3
    $region8: #{tpu_custom_call.1} parent=1 // loop_exit
      _
    %3087 = vsyncpa [#allocation3], 1
    %s3088 = scalar_lea.sflag [#allocation3], 1
    %3089 = vsyncpa %s3088, 1
    %3090 = vsyncpa [#allocation6], 1
    %3091 = vsyncpa [#allocation9], 1
    %3092 = vsyncpa [#allocation4], 1
    %s3093 = scalar_lea.sflag [#allocation4], 1
    %3094 = vsyncpa %s3093, 1

</llo_original>
